<compile_context>
chip_gen: v7x
topology: tpu7x:2x2x1
jax: 0.10.0
libtpu: 0.0.40
codegen_flags: <defaults>
</compile_context>

<pallas_src>
import math

import jax
import jax.numpy as jnp
from jax.experimental import pallas as pl
from jax.experimental.pallas import tpu as pltpu

# -------------------- small synthetic config --------------------
B = 2          # batch
S = 16         # sequence length
H = 32         # bert hidden size (stand-in for 768)
NH = 4         # attention heads
HD = H // NH   # head dim
L = 3          # transformer layers (model concatenates the last three)
FF = 4 * H     # FFN intermediate size
VOCAB = 64
BS = B * S
H3 = 3 * H                 # concat of last three layers
FC_IN = 3 * H3             # 2 spans + 1 gathered vector
FC_HID = 512
LN_EPS = 1e-12
NEG_INF = -1e30


def _softmax_rows(x):
    m = jnp.max(x, axis=-1, keepdims=True)
    e = jnp.exp(x - m)
    return e * pl.reciprocal(jnp.sum(e, axis=-1, keepdims=True), approx=True)


def _layernorm(x, g, b):
    mu = jnp.mean(x, axis=-1, keepdims=True)
    var = jnp.mean((x - mu) ** 2, axis=-1, keepdims=True)
    return (x - mu) * jax.lax.rsqrt(var + LN_EPS) * g + b


# -------------------- fused Pallas kernel: encoder (3 layers) + head --------------------
def gap_fused_kernel(emb_ref, amask_ref, vmask_ref,
                     wqkv_ref, bqkv_ref, wo_ref, bo_ref, g1_ref, be1_ref,
                     wi_ref, bi_ref, w2_ref, b2_ref, g2_ref, be2_ref,
                     attn_w_ref, attn_b_ref, span0_ref, span1_ref, pron_ref,
                     fc_w1_ref, fc_b1_ref, fc_w2_ref, fc_b2_ref,
                     out_ref):
    x = emb_ref[...]                 # (BS, H) f32, batch folded into rows
    amask = amask_ref[...]           # (BS, NH*BS) f32: (padding + cross-batch) mask, tiled per head
    vmask = vmask_ref[...]           # (NH*BS, H) f32: 0/1 block-diagonal head mask

    # ---------------- BERT encoder: L sequential layers, batch + heads fully folded ----------------
    layer_outs = []
    for l in range(L):               # L=3, unrolled
        xb = x.astype(jnp.bfloat16)
        # fused QKV projection (scale already folded into the Q slice host-side)
        qkv = jnp.dot(xb, wqkv_ref[l],
                      preferred_element_type=jnp.float32) + bqkv_ref[pl.ds(l, 1), :]  # (BS, 3H) f32
        q = qkv[:, 0:H]
        k = qkv[:, H:2 * H]
        v = qkv[:, 2 * H:3 * H]

        # block-diagonal all-head K / V: sublane-tile then mask (f32 elementwise, bf16 operands)
        kblk = (jnp.concatenate([k] * NH, axis=0) * vmask).astype(jnp.bfloat16)   # (NH*BS, H)
        vblk = (jnp.concatenate([v] * NH, axis=0) * vmask).astype(jnp.bfloat16)   # (NH*BS, H)

        # all-head scores in one MXU op: contract feature dim of q against kblk
        scores = jax.lax.dot_general(
            q.astype(jnp.bfloat16), kblk, (((1,), (1,)), ((), ())),
            preferred_element_type=jnp.float32) + amask                            # (BS, NH*BS) f32

        # segmented softmax over each 32-lane head block.
        # Shared per-row max is a valid upper bound for every block; result is exact
        # after per-block normalization (head-score spreads here are << f32 exp range).
        m = jnp.max(scores, axis=-1, keepdims=True)                                # (BS, 1)
        e = jnp.exp(scores - m)                                                    # (BS, NH*BS) f32
        # per-head-block sums, spread to the head's output lanes, via one matmul
        denom = jnp.dot(e, vmask, preferred_element_type=jnp.float32)              # (BS, H) f32
        ctx = jnp.dot(e.astype(jnp.bfloat16), vblk,
                      preferred_element_type=jnp.float32) * pl.reciprocal(denom, approx=True)

        attn_out = jnp.dot(ctx.astype(jnp.bfloat16), wo_ref[l],
                           preferred_element_type=jnp.float32) + bo_ref[pl.ds(l, 1), :]
        x = _layernorm(x + attn_out, g1_ref[pl.ds(l, 1), :], be1_ref[pl.ds(l, 1), :])

        ff = jnp.dot(x.astype(jnp.bfloat16), wi_ref[l],
                     preferred_element_type=jnp.float32) + bi_ref[pl.ds(l, 1), :]
        ff = jax.nn.gelu(ff, approximate=True)
        ff = jnp.dot(ff.astype(jnp.bfloat16), w2_ref[l],
                     preferred_element_type=jnp.float32) + b2_ref[pl.ds(l, 1), :]
        x = _layernorm(x + ff, g2_ref[pl.ds(l, 1), :], be2_ref[pl.ds(l, 1), :])
        layer_outs.append(x)

    # concat of the last three encoded layers: (BS, 3H)
    concat = jnp.concatenate(
        [layer_outs[L - 1], layer_outs[L - 2], layer_outs[L - 3]], axis=-1)
    concat_b = concat.astype(jnp.bfloat16)

    # ---------------- Head: SelfAttentiveSpanExtractor + MLP, batched over B ----------------
    # global span-attention logits: Linear(3H, 1) over every token of every batch row
    glog = jax.lax.dot_general(
        attn_w_ref[...], concat_b, (((1,), (1,)), ((), ())),
        preferred_element_type=jnp.float32) + attn_b_ref[...]                      # (1, BS) f32

    # span masks / pronoun one-hot are precomputed host-side -> just mask + softmax + matmul
    logits0 = jnp.where(span0_ref[...] > 0.5, glog, NEG_INF)                       # (B, BS)
    logits1 = jnp.where(span1_ref[...] > 0.5, glog, NEG_INF)
    W0 = _softmax_rows(logits0).astype(jnp.bfloat16)                               # (B, BS)
    W1 = _softmax_rows(logits1).astype(jnp.bfloat16)

    span0 = jnp.dot(W0, concat_b, preferred_element_type=jnp.float32)              # (B, 3H)
    span1 = jnp.dot(W1, concat_b, preferred_element_type=jnp.float32)
    gvec = jnp.dot(pron_ref[...], concat_b, preferred_element_type=jnp.float32)    # (B, 3H)

    feats = jnp.concatenate([span0, span1, gvec], axis=-1).astype(jnp.bfloat16)    # (B, FC_IN)
    hid = jnp.dot(feats, fc_w1_ref[...],
                  preferred_element_type=jnp.float32) + fc_b1_ref[...]             # (B, 512)
    hid = jnp.maximum(hid, 0.0).astype(jnp.bfloat16)                               # ReLU (dropout=id)
    out = jnp.dot(hid, fc_w2_ref[...],
                  preferred_element_type=jnp.float32) + fc_b2_ref[...]             # (B, 3)
    out_ref[...] = out                                                             # single store


# -------------------- parameter init (deterministic) --------------------
def init_params(key):
    ks = iter(jax.random.split(key, 64))
    n = lambda shape, s=0.02: (s * jax.random.normal(next(ks), shape)).astype(jnp.float32)
    p = {
        # embeddings
        "word_emb": n((VOCAB, H)),
        "pos_emb": n((S, H)),
        "tok_type_emb": n((2, H)),
        "emb_ln_g": jnp.ones((H,), jnp.float32),
        "emb_ln_b": jnp.zeros((H,), jnp.float32),
        # encoder (stacked over layers)
        "wq": n((L, H, H)), "bq": jnp.zeros((L, H), jnp.float32),
        "wk": n((L, H, H)), "bk": jnp.zeros((L, H), jnp.float32),
        "wv": n((L, H, H)), "bv": jnp.zeros((L, H), jnp.float32),
        "wo": n((L, H, H)), "bo": jnp.zeros((L, H), jnp.float32),
        "g1": jnp.ones((L, H), jnp.float32), "be1": jnp.zeros((L, H), jnp.float32),
        "wi": n((L, H, FF)), "bi": jnp.zeros((L, FF), jnp.float32),
        "w2": n((L, FF, H)), "b2": jnp.zeros((L, H), jnp.float32),
        "g2": jnp.ones((L, H), jnp.float32), "be2": jnp.zeros((L, H), jnp.float32),
        # head
        "attn_w": n((1, H3)), "attn_b": jnp.zeros((1, 1), jnp.float32),
        "fc_w1": n((FC_IN, FC_HID)), "fc_b1": jnp.zeros((1, FC_HID), jnp.float32),
        "fc_w2": n((FC_HID, 3)), "fc_b2": jnp.zeros((1, 3), jnp.float32),
    }
    return p


# -------------------- wrappers --------------------
def embed(token_ids, p):
    x = p["word_emb"][token_ids] + p["pos_emb"][None, :, :] + p["tok_type_emb"][0][None, None, :]
    mu = x.mean(-1, keepdims=True)
    var = ((x - mu) ** 2).mean(-1, keepdims=True)
    return (x - mu) * jax.lax.rsqrt(var + LN_EPS) * p["emb_ln_g"] + p["emb_ln_b"]


def gap_model_forward(token_tensor, offsets, p):
    emb = embed(token_tensor, p).reshape(BS, H)                          # (B*S, H) f32

    # ----- fused / pre-scaled / bf16 weights (host-side, outside the kernel) -----
    scale = 1.0 / math.sqrt(HD)
    wqkv = jnp.concatenate([p["wq"] * scale, p["wk"], p["wv"]], axis=-1).astype(jnp.bfloat16)  # (L,H,3H)
    bqkv = jnp.concatenate([p["bq"] * scale, p["bk"], p["bv"]], axis=-1)                        # (L,3H) f32
    wo_b = p["wo"].astype(jnp.bfloat16)
    wi_b = p["wi"].astype(jnp.bfloat16)
    w2_b = p["w2"].astype(jnp.bfloat16)
    attn_w_b = p["attn_w"].astype(jnp.bfloat16)
    fc_w1_b = p["fc_w1"].astype(jnp.bfloat16)
    fc_w2_b = p["fc_w2"].astype(jnp.bfloat16)

    # ----- attention masks (padding + cross-batch), tiled once per head block -----
    pad = (token_tensor > 0).astype(jnp.float32).reshape(BS)             # (BS,)
    batch_idx = jnp.arange(BS, dtype=jnp.int32) // S
    same_batch = batch_idx[:, None] == batch_idx[None, :]
    pad_add = (1.0 - pad)[None, :] * -10000.0
    full_mask = jnp.where(same_batch, pad_add, -1e9).astype(jnp.float32)  # (BS, BS)
    amask_tiled = jnp.tile(full_mask, (1, NH))                            # (BS, NH*BS)

    # 0/1 block-diagonal head mask: vmask[c, j] = 1 iff c//BS == j//HD
    lane = jnp.arange(NH * BS, dtype=jnp.int32)
    feat = jnp.arange(H, dtype=jnp.int32)
    vmask = (lane[:, None] // BS == feat[None, :] // HD).astype(jnp.float32)   # (NH*BS, H)

    # ----- head span-selection masks + pronoun one-hot (vectorized, host-side) -----
    col = jnp.arange(BS, dtype=jnp.int32)[None, :]                       # (1, BS)
    base = (jnp.arange(B, dtype=jnp.int32) * S)[:, None]                 # (B, 1)
    off = offsets.astype(jnp.int32)
    st0, en0 = off[:, 0:1] + base, off[:, 1:2] + base
    st1, en1 = off[:, 2:3] + base, off[:, 3:4] + base
    prn = off[:, 4:5] + base
    span0_sel = ((col >= st0) & (col <= en0)).astype(jnp.float32)        # (B, BS), inclusive ends
    span1_sel = ((col >= st1) & (col <= en1)).astype(jnp.float32)
    pron_onehot = (col == prn).astype(jnp.bfloat16)                      # (B, BS)

    vmem = pl.BlockSpec(memory_space=pltpu.MemorySpace.VMEM)

    out = pl.pallas_call(
        gap_fused_kernel,
        out_shape=jax.ShapeDtypeStruct((B, 3), jnp.float32),
        in_specs=[vmem] * 24,
        out_specs=vmem,
    )(emb, amask_tiled, vmask,
      wqkv, bqkv, wo_b, p["bo"], p["g1"], p["be1"],
      wi_b, p["bi"], w2_b, p["b2"], p["g2"], p["be2"],
      attn_w_b, p["attn_b"], span0_sel, span1_sel, pron_onehot,
      fc_w1_b, p["fc_b1"], fc_w2_b, p["fc_b2"])
    return out


if __name__ == "__main__":
    key = jax.random.PRNGKey(0)
    k_tok, k_par = jax.random.split(key)
    params = init_params(k_par)

    # token ids (0 == padding), a couple of pad tokens to exercise the attention mask
    token_tensor = jax.random.randint(k_tok, (B, S), 1, VOCAB).astype(jnp.int32)
    token_tensor = token_tensor.at[:, -2:].set(0)

    # offsets: [span0_start, span0_end, span1_start, span1_end, pronoun_idx]
    offsets = jnp.array([[2, 5, 8, 11, 3],
                         [1, 4, 7, 10, 6]], dtype=jnp.int32)

    out = gap_model_forward(token_tensor, offsets, params)
    out = jax.block_until_ready(out)
    assert out.shape == (B, 3) and out.dtype == jnp.float32
    assert bool(jnp.all(jnp.isfinite(out)))
    print("KERNEL_OK")
</pallas_src>

<mosaic_0001>
module attributes {stable_mosaic.version = 11 : i64} {
  func.func @gap_fused_kernel(%arg0: memref<32x32xf32, #tpu.memory_space<vmem>>, %arg1: memref<32x128xf32, #tpu.memory_space<vmem>>, %arg2: memref<128x32xf32, #tpu.memory_space<vmem>>, %arg3: memref<3x32x96xbf16, #tpu.memory_space<vmem>>, %arg4: memref<3x96xf32, #tpu.memory_space<vmem>>, %arg5: memref<3x32x32xbf16, #tpu.memory_space<vmem>>, %arg6: memref<3x32xf32, #tpu.memory_space<vmem>>, %arg7: memref<3x32xf32, #tpu.memory_space<vmem>>, %arg8: memref<3x32xf32, #tpu.memory_space<vmem>>, %arg9: memref<3x32x128xbf16, #tpu.memory_space<vmem>>, %arg10: memref<3x128xf32, #tpu.memory_space<vmem>>, %arg11: memref<3x128x32xbf16, #tpu.memory_space<vmem>>, %arg12: memref<3x32xf32, #tpu.memory_space<vmem>>, %arg13: memref<3x32xf32, #tpu.memory_space<vmem>>, %arg14: memref<3x32xf32, #tpu.memory_space<vmem>>, %arg15: memref<1x96xbf16, #tpu.memory_space<vmem>>, %arg16: memref<1x1xf32, #tpu.memory_space<vmem>>, %arg17: memref<2x32xf32, #tpu.memory_space<vmem>>, %arg18: memref<2x32xf32, #tpu.memory_space<vmem>>, %arg19: memref<2x32xbf16, #tpu.memory_space<vmem>>, %arg20: memref<288x512xbf16, #tpu.memory_space<vmem>>, %arg21: memref<1x512xf32, #tpu.memory_space<vmem>>, %arg22: memref<512x3xbf16, #tpu.memory_space<vmem>>, %arg23: memref<1x3xf32, #tpu.memory_space<vmem>>, %arg24: memref<2x3xf32, #tpu.memory_space<vmem>>) attributes {dimension_semantics = [], scalar_prefetch = 0 : i64, scratch_operands = 0 : i64, tpu.core_type = #tpu.core_type<tc>} {
    %c0 = arith.constant 0 : index
    %c0_0 = arith.constant 0 : index
    %0 = vector.load %arg0[%c0, %c0_0] : memref<32x32xf32, #tpu.memory_space<vmem>>, vector<32x32xf32>
    %c0_1 = arith.constant 0 : index
    %c0_2 = arith.constant 0 : index
    %1 = vector.load %arg1[%c0_1, %c0_2] : memref<32x128xf32, #tpu.memory_space<vmem>>, vector<32x128xf32>
    %c0_3 = arith.constant 0 : index
    %c0_4 = arith.constant 0 : index
    %2 = vector.load %arg2[%c0_3, %c0_4] : memref<128x32xf32, #tpu.memory_space<vmem>>, vector<128x32xf32>
    %3 = arith.truncf %0 : vector<32x32xf32> to vector<32x32xbf16>
    %c0_5 = arith.constant 0 : index
    %c0_6 = arith.constant 0 : index
    %c0_7 = arith.constant 0 : index
    %4 = vector.load %arg3[%c0_5, %c0_6, %c0_7] : memref<3x32x96xbf16, #tpu.memory_space<vmem>>, vector<1x32x96xbf16>
    %5 = vector.shape_cast %4 : vector<1x32x96xbf16> to vector<32x96xbf16>
    %cst = arith.constant dense<0.000000e+00> : vector<32x96xf32>
    %6 = tpu.matmul %3, %5, %cst {dimension_numbers = #tpu.dot_dimension_numbers<[1], [0], [0], [1], [0, 0, 1, 1], [], []>} : vector<32x32xbf16>, vector<32x96xbf16>, vector<32x96xf32> -> vector<32x96xf32>
    %c0_8 = arith.constant 0 : index
    %c0_9 = arith.constant 0 : index
    %7 = vector.load %arg4[%c0_8, %c0_9] : memref<3x96xf32, #tpu.memory_space<vmem>>, vector<1x96xf32>
    %8 = vector.broadcast %7 : vector<1x96xf32> to vector<32x96xf32>
    %9 = arith.addf %6, %8 : vector<32x96xf32>
    %10 = vector.extract_strided_slice %9 {offsets = [0, 0], sizes = [32, 32], strides = [1, 1]} : vector<32x96xf32> to vector<32x32xf32>
    %11 = vector.extract_strided_slice %9 {offsets = [0, 32], sizes = [32, 32], strides = [1, 1]} : vector<32x96xf32> to vector<32x32xf32>
    %12 = vector.extract_strided_slice %9 {offsets = [0, 64], sizes = [32, 32], strides = [1, 1]} : vector<32x96xf32> to vector<32x32xf32>
    %13 = tpu.concatenate %11, %11, %11, %11 in 0 : vector<32x32xf32>, vector<32x32xf32>, vector<32x32xf32>, vector<32x32xf32> -> vector<128x32xf32>
    %14 = arith.mulf %13, %2 : vector<128x32xf32>
    %15 = arith.truncf %14 : vector<128x32xf32> to vector<128x32xbf16>
    %16 = tpu.concatenate %12, %12, %12, %12 in 0 : vector<32x32xf32>, vector<32x32xf32>, vector<32x32xf32>, vector<32x32xf32> -> vector<128x32xf32>
    %17 = arith.mulf %16, %2 : vector<128x32xf32>
    %18 = arith.truncf %17 : vector<128x32xf32> to vector<128x32xbf16>
    %19 = arith.truncf %10 : vector<32x32xf32> to vector<32x32xbf16>
    %cst_10 = arith.constant dense<0.000000e+00> : vector<32x128xf32>
    %20 = tpu.matmul %19, %15, %cst_10 {dimension_numbers = #tpu.dot_dimension_numbers<[1], [1], [0], [0], [0, 0, 1, 0], [], []>} : vector<32x32xbf16>, vector<128x32xbf16>, vector<32x128xf32> -> vector<32x128xf32>
    %21 = arith.addf %20, %1 : vector<32x128xf32>
    %cst_11 = arith.constant dense<0xFF800000> : vector<32xf32>
    %22 = vector.multi_reduction <maximumf>, %21, %cst_11 [1] : vector<32x128xf32> to vector<32xf32>
    %23 = vector.shape_cast %22 : vector<32xf32> to vector<32x1xf32>
    %24 = vector.broadcast %23 : vector<32x1xf32> to vector<32x128xf32>
    %25 = arith.subf %21, %24 : vector<32x128xf32>
    %26 = math.exp %25 : vector<32x128xf32>
    %cst_12 = arith.constant dense<0.000000e+00> : vector<32x32xf32>
    %27 = tpu.matmul %26, %2, %cst_12 {dimension_numbers = #tpu.dot_dimension_numbers<[1], [0], [0], [1], [0, 0, 1, 1], [], []>} : vector<32x128xf32>, vector<128x32xf32>, vector<32x32xf32> -> vector<32x32xf32>
    %28 = arith.truncf %26 : vector<32x128xf32> to vector<32x128xbf16>
    %cst_13 = arith.constant dense<0.000000e+00> : vector<32x32xf32>
    %29 = tpu.matmul %28, %18, %cst_13 {dimension_numbers = #tpu.dot_dimension_numbers<[1], [0], [0], [1], [0, 0, 1, 1], [], []>} : vector<32x128xbf16>, vector<128x32xbf16>, vector<32x32xf32> -> vector<32x32xf32>
    %30 = tpu.reciprocal %27 {approx = true} : vector<32x32xf32> -> vector<32x32xf32>
    %31 = arith.mulf %29, %30 : vector<32x32xf32>
    %32 = arith.truncf %31 : vector<32x32xf32> to vector<32x32xbf16>
    %c0_14 = arith.constant 0 : index
    %c0_15 = arith.constant 0 : index
    %c0_16 = arith.constant 0 : index
    %33 = vector.load %arg5[%c0_14, %c0_15, %c0_16] : memref<3x32x32xbf16, #tpu.memory_space<vmem>>, vector<1x32x32xbf16>
    %34 = vector.shape_cast %33 : vector<1x32x32xbf16> to vector<32x32xbf16>
    %cst_17 = arith.constant dense<0.000000e+00> : vector<32x32xf32>
    %35 = tpu.matmul %32, %34, %cst_17 {dimension_numbers = #tpu.dot_dimension_numbers<[1], [0], [0], [1], [0, 0, 1, 1], [], []>} : vector<32x32xbf16>, vector<32x32xbf16>, vector<32x32xf32> -> vector<32x32xf32>
    %c0_18 = arith.constant 0 : index
    %c0_19 = arith.constant 0 : index
    %36 = vector.load %arg6[%c0_18, %c0_19] : memref<3x32xf32, #tpu.memory_space<vmem>>, vector<1x32xf32>
    %37 = vector.broadcast %36 : vector<1x32xf32> to vector<32x32xf32>
    %38 = arith.addf %35, %37 : vector<32x32xf32>
    %39 = arith.addf %0, %38 : vector<32x32xf32>
    %c0_20 = arith.constant 0 : index
    %c0_21 = arith.constant 0 : index
    %40 = vector.load %arg7[%c0_20, %c0_21] : memref<3x32xf32, #tpu.memory_space<vmem>>, vector<1x32xf32>
    %c0_22 = arith.constant 0 : index
    %c0_23 = arith.constant 0 : index
    %41 = vector.load %arg8[%c0_22, %c0_23] : memref<3x32xf32, #tpu.memory_space<vmem>>, vector<1x32xf32>
    %cst_24 = arith.constant dense<0.000000e+00> : vector<32xf32>
    %42 = vector.multi_reduction <add>, %39, %cst_24 [1] : vector<32x32xf32> to vector<32xf32>
    %43 = vector.shape_cast %42 : vector<32xf32> to vector<32x1xf32>
    %cst_25 = arith.constant 3.200000e+01 : f32
    %44 = vector.broadcast %cst_25 : f32 to vector<32x1xf32>
    %45 = arith.divf %43, %44 : vector<32x1xf32>
    %46 = vector.broadcast %45 : vector<32x1xf32> to vector<32x32xf32>
    %47 = arith.subf %39, %46 : vector<32x32xf32>
    %48 = arith.mulf %47, %47 : vector<32x32xf32>
    %cst_26 = arith.constant dense<0.000000e+00> : vector<32xf32>
    %49 = vector.multi_reduction <add>, %48, %cst_26 [1] : vector<32x32xf32> to vector<32xf32>
    %50 = vector.shape_cast %49 : vector<32xf32> to vector<32x1xf32>
    %cst_27 = arith.constant 3.200000e+01 : f32
    %51 = vector.broadcast %cst_27 : f32 to vector<32x1xf32>
    %52 = arith.divf %50, %51 : vector<32x1xf32>
    %53 = vector.broadcast %45 : vector<32x1xf32> to vector<32x32xf32>
    %54 = arith.subf %39, %53 : vector<32x32xf32>
    %cst_28 = arith.constant 9.99999996E-13 : f32
    %55 = vector.broadcast %cst_28 : f32 to vector<32x1xf32>
    %56 = arith.addf %52, %55 : vector<32x1xf32>
    %57 = math.rsqrt %56 : vector<32x1xf32>
    %58 = vector.broadcast %57 : vector<32x1xf32> to vector<32x32xf32>
    %59 = arith.mulf %54, %58 : vector<32x32xf32>
    %60 = vector.broadcast %40 : vector<1x32xf32> to vector<32x32xf32>
    %61 = arith.mulf %59, %60 : vector<32x32xf32>
    %62 = vector.broadcast %41 : vector<1x32xf32> to vector<32x32xf32>
    %63 = arith.addf %61, %62 : vector<32x32xf32>
    %64 = arith.truncf %63 : vector<32x32xf32> to vector<32x32xbf16>
    %c0_29 = arith.constant 0 : index
    %c0_30 = arith.constant 0 : index
    %c0_31 = arith.constant 0 : index
    %65 = vector.load %arg9[%c0_29, %c0_30, %c0_31] : memref<3x32x128xbf16, #tpu.memory_space<vmem>>, vector<1x32x128xbf16>
    %66 = vector.shape_cast %65 : vector<1x32x128xbf16> to vector<32x128xbf16>
    %cst_32 = arith.constant dense<0.000000e+00> : vector<32x128xf32>
    %67 = tpu.matmul %64, %66, %cst_32 {dimension_numbers = #tpu.dot_dimension_numbers<[1], [0], [0], [1], [0, 0, 1, 1], [], []>} : vector<32x32xbf16>, vector<32x128xbf16>, vector<32x128xf32> -> vector<32x128xf32>
    %c0_33 = arith.constant 0 : index
    %c0_34 = arith.constant 0 : index
    %68 = vector.load %arg10[%c0_33, %c0_34] : memref<3x128xf32, #tpu.memory_space<vmem>>, vector<1x128xf32>
    %69 = vector.broadcast %68 : vector<1x128xf32> to vector<32x128xf32>
    %70 = arith.addf %67, %69 : vector<32x128xf32>
    %71 = arith.mulf %70, %70 : vector<32x128xf32>
    %72 = arith.mulf %70, %71 : vector<32x128xf32>
    %cst_35 = arith.constant 4.471500e-02 : f32
    %73 = vector.broadcast %cst_35 : f32 to vector<32x128xf32>
    %74 = arith.mulf %73, %72 : vector<32x128xf32>
    %75 = arith.addf %70, %74 : vector<32x128xf32>
    %cst_36 = arith.constant 0.797884583 : f32
    %76 = vector.broadcast %cst_36 : f32 to vector<32x128xf32>
    %77 = arith.mulf %76, %75 : vector<32x128xf32>
    %78 = math.tanh %77 : vector<32x128xf32>
    %cst_37 = arith.constant 1.000000e+00 : f32
    %79 = vector.broadcast %cst_37 : f32 to vector<32x128xf32>
    %80 = arith.addf %79, %78 : vector<32x128xf32>
    %cst_38 = arith.constant 5.000000e-01 : f32
    %81 = vector.broadcast %cst_38 : f32 to vector<32x128xf32>
    %82 = arith.mulf %81, %80 : vector<32x128xf32>
    %83 = arith.mulf %70, %82 : vector<32x128xf32>
    %84 = arith.truncf %83 : vector<32x128xf32> to vector<32x128xbf16>
    %c0_39 = arith.constant 0 : index
    %c0_40 = arith.constant 0 : index
    %c0_41 = arith.constant 0 : index
    %85 = vector.load %arg11[%c0_39, %c0_40, %c0_41] : memref<3x128x32xbf16, #tpu.memory_space<vmem>>, vector<1x128x32xbf16>
    %86 = vector.shape_cast %85 : vector<1x128x32xbf16> to vector<128x32xbf16>
    %cst_42 = arith.constant dense<0.000000e+00> : vector<32x32xf32>
    %87 = tpu.matmul %84, %86, %cst_42 {dimension_numbers = #tpu.dot_dimension_numbers<[1], [0], [0], [1], [0, 0, 1, 1], [], []>} : vector<32x128xbf16>, vector<128x32xbf16>, vector<32x32xf32> -> vector<32x32xf32>
    %c0_43 = arith.constant 0 : index
    %c0_44 = arith.constant 0 : index
    %88 = vector.load %arg12[%c0_43, %c0_44] : memref<3x32xf32, #tpu.memory_space<vmem>>, vector<1x32xf32>
    %89 = vector.broadcast %88 : vector<1x32xf32> to vector<32x32xf32>
    %90 = arith.addf %87, %89 : vector<32x32xf32>
    %91 = arith.addf %63, %90 : vector<32x32xf32>
    %c0_45 = arith.constant 0 : index
    %c0_46 = arith.constant 0 : index
    %92 = vector.load %arg13[%c0_45, %c0_46] : memref<3x32xf32, #tpu.memory_space<vmem>>, vector<1x32xf32>
    %c0_47 = arith.constant 0 : index
    %c0_48 = arith.constant 0 : index
    %93 = vector.load %arg14[%c0_47, %c0_48] : memref<3x32xf32, #tpu.memory_space<vmem>>, vector<1x32xf32>
    %cst_49 = arith.constant dense<0.000000e+00> : vector<32xf32>
    %94 = vector.multi_reduction <add>, %91, %cst_49 [1] : vector<32x32xf32> to vector<32xf32>
    %95 = vector.shape_cast %94 : vector<32xf32> to vector<32x1xf32>
    %cst_50 = arith.constant 3.200000e+01 : f32
    %96 = vector.broadcast %cst_50 : f32 to vector<32x1xf32>
    %97 = arith.divf %95, %96 : vector<32x1xf32>
    %98 = vector.broadcast %97 : vector<32x1xf32> to vector<32x32xf32>
    %99 = arith.subf %91, %98 : vector<32x32xf32>
    %100 = arith.mulf %99, %99 : vector<32x32xf32>
    %cst_51 = arith.constant dense<0.000000e+00> : vector<32xf32>
    %101 = vector.multi_reduction <add>, %100, %cst_51 [1] : vector<32x32xf32> to vector<32xf32>
    %102 = vector.shape_cast %101 : vector<32xf32> to vector<32x1xf32>
    %cst_52 = arith.constant 3.200000e+01 : f32
    %103 = vector.broadcast %cst_52 : f32 to vector<32x1xf32>
    %104 = arith.divf %102, %103 : vector<32x1xf32>
    %105 = vector.broadcast %97 : vector<32x1xf32> to vector<32x32xf32>
    %106 = arith.subf %91, %105 : vector<32x32xf32>
    %cst_53 = arith.constant 9.99999996E-13 : f32
    %107 = vector.broadcast %cst_53 : f32 to vector<32x1xf32>
    %108 = arith.addf %104, %107 : vector<32x1xf32>
    %109 = math.rsqrt %108 : vector<32x1xf32>
    %110 = vector.broadcast %109 : vector<32x1xf32> to vector<32x32xf32>
    %111 = arith.mulf %106, %110 : vector<32x32xf32>
    %112 = vector.broadcast %92 : vector<1x32xf32> to vector<32x32xf32>
    %113 = arith.mulf %111, %112 : vector<32x32xf32>
    %114 = vector.broadcast %93 : vector<1x32xf32> to vector<32x32xf32>
    %115 = arith.addf %113, %114 : vector<32x32xf32>
    %116 = arith.truncf %115 : vector<32x32xf32> to vector<32x32xbf16>
    %c1 = arith.constant 1 : index
    %c0_54 = arith.constant 0 : index
    %c0_55 = arith.constant 0 : index
    %117 = vector.load %arg3[%c1, %c0_54, %c0_55] : memref<3x32x96xbf16, #tpu.memory_space<vmem>>, vector<1x32x96xbf16>
    %118 = vector.shape_cast %117 : vector<1x32x96xbf16> to vector<32x96xbf16>
    %cst_56 = arith.constant dense<0.000000e+00> : vector<32x96xf32>
    %119 = tpu.matmul %116, %118, %cst_56 {dimension_numbers = #tpu.dot_dimension_numbers<[1], [0], [0], [1], [0, 0, 1, 1], [], []>} : vector<32x32xbf16>, vector<32x96xbf16>, vector<32x96xf32> -> vector<32x96xf32>
    %c1_57 = arith.constant 1 : index
    %c0_58 = arith.constant 0 : index
    %120 = vector.load %arg4[%c1_57, %c0_58] : memref<3x96xf32, #tpu.memory_space<vmem>>, vector<1x96xf32>
    %121 = vector.broadcast %120 : vector<1x96xf32> to vector<32x96xf32>
    %122 = arith.addf %119, %121 : vector<32x96xf32>
    %123 = vector.extract_strided_slice %122 {offsets = [0, 0], sizes = [32, 32], strides = [1, 1]} : vector<32x96xf32> to vector<32x32xf32>
    %124 = vector.extract_strided_slice %122 {offsets = [0, 32], sizes = [32, 32], strides = [1, 1]} : vector<32x96xf32> to vector<32x32xf32>
    %125 = vector.extract_strided_slice %122 {offsets = [0, 64], sizes = [32, 32], strides = [1, 1]} : vector<32x96xf32> to vector<32x32xf32>
    %126 = tpu.concatenate %124, %124, %124, %124 in 0 : vector<32x32xf32>, vector<32x32xf32>, vector<32x32xf32>, vector<32x32xf32> -> vector<128x32xf32>
    %127 = arith.mulf %126, %2 : vector<128x32xf32>
    %128 = arith.truncf %127 : vector<128x32xf32> to vector<128x32xbf16>
    %129 = tpu.concatenate %125, %125, %125, %125 in 0 : vector<32x32xf32>, vector<32x32xf32>, vector<32x32xf32>, vector<32x32xf32> -> vector<128x32xf32>
    %130 = arith.mulf %129, %2 : vector<128x32xf32>
    %131 = arith.truncf %130 : vector<128x32xf32> to vector<128x32xbf16>
    %132 = arith.truncf %123 : vector<32x32xf32> to vector<32x32xbf16>
    %cst_59 = arith.constant dense<0.000000e+00> : vector<32x128xf32>
    %133 = tpu.matmul %132, %128, %cst_59 {dimension_numbers = #tpu.dot_dimension_numbers<[1], [1], [0], [0], [0, 0, 1, 0], [], []>} : vector<32x32xbf16>, vector<128x32xbf16>, vector<32x128xf32> -> vector<32x128xf32>
    %134 = arith.addf %133, %1 : vector<32x128xf32>
    %cst_60 = arith.constant dense<0xFF800000> : vector<32xf32>
    %135 = vector.multi_reduction <maximumf>, %134, %cst_60 [1] : vector<32x128xf32> to vector<32xf32>
    %136 = vector.shape_cast %135 : vector<32xf32> to vector<32x1xf32>
    %137 = vector.broadcast %136 : vector<32x1xf32> to vector<32x128xf32>
    %138 = arith.subf %134, %137 : vector<32x128xf32>
    %139 = math.exp %138 : vector<32x128xf32>
    %cst_61 = arith.constant dense<0.000000e+00> : vector<32x32xf32>
    %140 = tpu.matmul %139, %2, %cst_61 {dimension_numbers = #tpu.dot_dimension_numbers<[1], [0], [0], [1], [0, 0, 1, 1], [], []>} : vector<32x128xf32>, vector<128x32xf32>, vector<32x32xf32> -> vector<32x32xf32>
    %141 = arith.truncf %139 : vector<32x128xf32> to vector<32x128xbf16>
    %cst_62 = arith.constant dense<0.000000e+00> : vector<32x32xf32>
    %142 = tpu.matmul %141, %131, %cst_62 {dimension_numbers = #tpu.dot_dimension_numbers<[1], [0], [0], [1], [0, 0, 1, 1], [], []>} : vector<32x128xbf16>, vector<128x32xbf16>, vector<32x32xf32> -> vector<32x32xf32>
    %143 = tpu.reciprocal %140 {approx = true} : vector<32x32xf32> -> vector<32x32xf32>
    %144 = arith.mulf %142, %143 : vector<32x32xf32>
    %145 = arith.truncf %144 : vector<32x32xf32> to vector<32x32xbf16>
    %c1_63 = arith.constant 1 : index
    %c0_64 = arith.constant 0 : index
    %c0_65 = arith.constant 0 : index
    %146 = vector.load %arg5[%c1_63, %c0_64, %c0_65] : memref<3x32x32xbf16, #tpu.memory_space<vmem>>, vector<1x32x32xbf16>
    %147 = vector.shape_cast %146 : vector<1x32x32xbf16> to vector<32x32xbf16>
    %cst_66 = arith.constant dense<0.000000e+00> : vector<32x32xf32>
    %148 = tpu.matmul %145, %147, %cst_66 {dimension_numbers = #tpu.dot_dimension_numbers<[1], [0], [0], [1], [0, 0, 1, 1], [], []>} : vector<32x32xbf16>, vector<32x32xbf16>, vector<32x32xf32> -> vector<32x32xf32>
    %c1_67 = arith.constant 1 : index
    %c0_68 = arith.constant 0 : index
    %149 = vector.load %arg6[%c1_67, %c0_68] : memref<3x32xf32, #tpu.memory_space<vmem>>, vector<1x32xf32>
    %150 = vector.broadcast %149 : vector<1x32xf32> to vector<32x32xf32>
    %151 = arith.addf %148, %150 : vector<32x32xf32>
    %152 = arith.addf %115, %151 : vector<32x32xf32>
    %c1_69 = arith.constant 1 : index
    %c0_70 = arith.constant 0 : index
    %153 = vector.load %arg7[%c1_69, %c0_70] : memref<3x32xf32, #tpu.memory_space<vmem>>, vector<1x32xf32>
    %c1_71 = arith.constant 1 : index
    %c0_72 = arith.constant 0 : index
    %154 = vector.load %arg8[%c1_71, %c0_72] : memref<3x32xf32, #tpu.memory_space<vmem>>, vector<1x32xf32>
    %cst_73 = arith.constant dense<0.000000e+00> : vector<32xf32>
    %155 = vector.multi_reduction <add>, %152, %cst_73 [1] : vector<32x32xf32> to vector<32xf32>
    %156 = vector.shape_cast %155 : vector<32xf32> to vector<32x1xf32>
    %cst_74 = arith.constant 3.200000e+01 : f32
    %157 = vector.broadcast %cst_74 : f32 to vector<32x1xf32>
    %158 = arith.divf %156, %157 : vector<32x1xf32>
    %159 = vector.broadcast %158 : vector<32x1xf32> to vector<32x32xf32>
    %160 = arith.subf %152, %159 : vector<32x32xf32>
    %161 = arith.mulf %160, %160 : vector<32x32xf32>
    %cst_75 = arith.constant dense<0.000000e+00> : vector<32xf32>
    %162 = vector.multi_reduction <add>, %161, %cst_75 [1] : vector<32x32xf32> to vector<32xf32>
    %163 = vector.shape_cast %162 : vector<32xf32> to vector<32x1xf32>
    %cst_76 = arith.constant 3.200000e+01 : f32
    %164 = vector.broadcast %cst_76 : f32 to vector<32x1xf32>
    %165 = arith.divf %163, %164 : vector<32x1xf32>
    %166 = vector.broadcast %158 : vector<32x1xf32> to vector<32x32xf32>
    %167 = arith.subf %152, %166 : vector<32x32xf32>
    %cst_77 = arith.constant 9.99999996E-13 : f32
    %168 = vector.broadcast %cst_77 : f32 to vector<32x1xf32>
    %169 = arith.addf %165, %168 : vector<32x1xf32>
    %170 = math.rsqrt %169 : vector<32x1xf32>
    %171 = vector.broadcast %170 : vector<32x1xf32> to vector<32x32xf32>
    %172 = arith.mulf %167, %171 : vector<32x32xf32>
    %173 = vector.broadcast %153 : vector<1x32xf32> to vector<32x32xf32>
    %174 = arith.mulf %172, %173 : vector<32x32xf32>
    %175 = vector.broadcast %154 : vector<1x32xf32> to vector<32x32xf32>
    %176 = arith.addf %174, %175 : vector<32x32xf32>
    %177 = arith.truncf %176 : vector<32x32xf32> to vector<32x32xbf16>
    %c1_78 = arith.constant 1 : index
    %c0_79 = arith.constant 0 : index
    %c0_80 = arith.constant 0 : index
    %178 = vector.load %arg9[%c1_78, %c0_79, %c0_80] : memref<3x32x128xbf16, #tpu.memory_space<vmem>>, vector<1x32x128xbf16>
    %179 = vector.shape_cast %178 : vector<1x32x128xbf16> to vector<32x128xbf16>
    %cst_81 = arith.constant dense<0.000000e+00> : vector<32x128xf32>
    %180 = tpu.matmul %177, %179, %cst_81 {dimension_numbers = #tpu.dot_dimension_numbers<[1], [0], [0], [1], [0, 0, 1, 1], [], []>} : vector<32x32xbf16>, vector<32x128xbf16>, vector<32x128xf32> -> vector<32x128xf32>
    %c1_82 = arith.constant 1 : index
    %c0_83 = arith.constant 0 : index
    %181 = vector.load %arg10[%c1_82, %c0_83] : memref<3x128xf32, #tpu.memory_space<vmem>>, vector<1x128xf32>
    %182 = vector.broadcast %181 : vector<1x128xf32> to vector<32x128xf32>
    %183 = arith.addf %180, %182 : vector<32x128xf32>
    %184 = arith.mulf %183, %183 : vector<32x128xf32>
    %185 = arith.mulf %183, %184 : vector<32x128xf32>
    %cst_84 = arith.constant 4.471500e-02 : f32
    %186 = vector.broadcast %cst_84 : f32 to vector<32x128xf32>
    %187 = arith.mulf %186, %185 : vector<32x128xf32>
    %188 = arith.addf %183, %187 : vector<32x128xf32>
    %cst_85 = arith.constant 0.797884583 : f32
    %189 = vector.broadcast %cst_85 : f32 to vector<32x128xf32>
    %190 = arith.mulf %189, %188 : vector<32x128xf32>
    %191 = math.tanh %190 : vector<32x128xf32>
    %cst_86 = arith.constant 1.000000e+00 : f32
    %192 = vector.broadcast %cst_86 : f32 to vector<32x128xf32>
    %193 = arith.addf %192, %191 : vector<32x128xf32>
    %cst_87 = arith.constant 5.000000e-01 : f32
    %194 = vector.broadcast %cst_87 : f32 to vector<32x128xf32>
    %195 = arith.mulf %194, %193 : vector<32x128xf32>
    %196 = arith.mulf %183, %195 : vector<32x128xf32>
    %197 = arith.truncf %196 : vector<32x128xf32> to vector<32x128xbf16>
    %c1_88 = arith.constant 1 : index
    %c0_89 = arith.constant 0 : index
    %c0_90 = arith.constant 0 : index
    %198 = vector.load %arg11[%c1_88, %c0_89, %c0_90] : memref<3x128x32xbf16, #tpu.memory_space<vmem>>, vector<1x128x32xbf16>
    %199 = vector.shape_cast %198 : vector<1x128x32xbf16> to vector<128x32xbf16>
    %cst_91 = arith.constant dense<0.000000e+00> : vector<32x32xf32>
    %200 = tpu.matmul %197, %199, %cst_91 {dimension_numbers = #tpu.dot_dimension_numbers<[1], [0], [0], [1], [0, 0, 1, 1], [], []>} : vector<32x128xbf16>, vector<128x32xbf16>, vector<32x32xf32> -> vector<32x32xf32>
    %c1_92 = arith.constant 1 : index
    %c0_93 = arith.constant 0 : index
    %201 = vector.load %arg12[%c1_92, %c0_93] : memref<3x32xf32, #tpu.memory_space<vmem>>, vector<1x32xf32>
    %202 = vector.broadcast %201 : vector<1x32xf32> to vector<32x32xf32>
    %203 = arith.addf %200, %202 : vector<32x32xf32>
    %204 = arith.addf %176, %203 : vector<32x32xf32>
    %c1_94 = arith.constant 1 : index
    %c0_95 = arith.constant 0 : index
    %205 = vector.load %arg13[%c1_94, %c0_95] : memref<3x32xf32, #tpu.memory_space<vmem>>, vector<1x32xf32>
    %c1_96 = arith.constant 1 : index
    %c0_97 = arith.constant 0 : index
    %206 = vector.load %arg14[%c1_96, %c0_97] : memref<3x32xf32, #tpu.memory_space<vmem>>, vector<1x32xf32>
    %cst_98 = arith.constant dense<0.000000e+00> : vector<32xf32>
    %207 = vector.multi_reduction <add>, %204, %cst_98 [1] : vector<32x32xf32> to vector<32xf32>
    %208 = vector.shape_cast %207 : vector<32xf32> to vector<32x1xf32>
    %cst_99 = arith.constant 3.200000e+01 : f32
    %209 = vector.broadcast %cst_99 : f32 to vector<32x1xf32>
    %210 = arith.divf %208, %209 : vector<32x1xf32>
    %211 = vector.broadcast %210 : vector<32x1xf32> to vector<32x32xf32>
    %212 = arith.subf %204, %211 : vector<32x32xf32>
    %213 = arith.mulf %212, %212 : vector<32x32xf32>
    %cst_100 = arith.constant dense<0.000000e+00> : vector<32xf32>
    %214 = vector.multi_reduction <add>, %213, %cst_100 [1] : vector<32x32xf32> to vector<32xf32>
    %215 = vector.shape_cast %214 : vector<32xf32> to vector<32x1xf32>
    %cst_101 = arith.constant 3.200000e+01 : f32
    %216 = vector.broadcast %cst_101 : f32 to vector<32x1xf32>
    %217 = arith.divf %215, %216 : vector<32x1xf32>
    %218 = vector.broadcast %210 : vector<32x1xf32> to vector<32x32xf32>
    %219 = arith.subf %204, %218 : vector<32x32xf32>
    %cst_102 = arith.constant 9.99999996E-13 : f32
    %220 = vector.broadcast %cst_102 : f32 to vector<32x1xf32>
    %221 = arith.addf %217, %220 : vector<32x1xf32>
    %222 = math.rsqrt %221 : vector<32x1xf32>
    %223 = vector.broadcast %222 : vector<32x1xf32> to vector<32x32xf32>
    %224 = arith.mulf %219, %223 : vector<32x32xf32>
    %225 = vector.broadcast %205 : vector<1x32xf32> to vector<32x32xf32>
    %226 = arith.mulf %224, %225 : vector<32x32xf32>
    %227 = vector.broadcast %206 : vector<1x32xf32> to vector<32x32xf32>
    %228 = arith.addf %226, %227 : vector<32x32xf32>
    %229 = arith.truncf %228 : vector<32x32xf32> to vector<32x32xbf16>
    %c2 = arith.constant 2 : index
    %c0_103 = arith.constant 0 : index
    %c0_104 = arith.constant 0 : index
    %230 = vector.load %arg3[%c2, %c0_103, %c0_104] : memref<3x32x96xbf16, #tpu.memory_space<vmem>>, vector<1x32x96xbf16>
    %231 = vector.shape_cast %230 : vector<1x32x96xbf16> to vector<32x96xbf16>
    %cst_105 = arith.constant dense<0.000000e+00> : vector<32x96xf32>
    %232 = tpu.matmul %229, %231, %cst_105 {dimension_numbers = #tpu.dot_dimension_numbers<[1], [0], [0], [1], [0, 0, 1, 1], [], []>} : vector<32x32xbf16>, vector<32x96xbf16>, vector<32x96xf32> -> vector<32x96xf32>
    %c2_106 = arith.constant 2 : index
    %c0_107 = arith.constant 0 : index
    %233 = vector.load %arg4[%c2_106, %c0_107] : memref<3x96xf32, #tpu.memory_space<vmem>>, vector<1x96xf32>
    %234 = vector.broadcast %233 : vector<1x96xf32> to vector<32x96xf32>
    %235 = arith.addf %232, %234 : vector<32x96xf32>
    %236 = vector.extract_strided_slice %235 {offsets = [0, 0], sizes = [32, 32], strides = [1, 1]} : vector<32x96xf32> to vector<32x32xf32>
    %237 = vector.extract_strided_slice %235 {offsets = [0, 32], sizes = [32, 32], strides = [1, 1]} : vector<32x96xf32> to vector<32x32xf32>
    %238 = vector.extract_strided_slice %235 {offsets = [0, 64], sizes = [32, 32], strides = [1, 1]} : vector<32x96xf32> to vector<32x32xf32>
    %239 = tpu.concatenate %237, %237, %237, %237 in 0 : vector<32x32xf32>, vector<32x32xf32>, vector<32x32xf32>, vector<32x32xf32> -> vector<128x32xf32>
    %240 = arith.mulf %239, %2 : vector<128x32xf32>
    %241 = arith.truncf %240 : vector<128x32xf32> to vector<128x32xbf16>
    %242 = tpu.concatenate %238, %238, %238, %238 in 0 : vector<32x32xf32>, vector<32x32xf32>, vector<32x32xf32>, vector<32x32xf32> -> vector<128x32xf32>
    %243 = arith.mulf %242, %2 : vector<128x32xf32>
    %244 = arith.truncf %243 : vector<128x32xf32> to vector<128x32xbf16>
    %245 = arith.truncf %236 : vector<32x32xf32> to vector<32x32xbf16>
    %cst_108 = arith.constant dense<0.000000e+00> : vector<32x128xf32>
    %246 = tpu.matmul %245, %241, %cst_108 {dimension_numbers = #tpu.dot_dimension_numbers<[1], [1], [0], [0], [0, 0, 1, 0], [], []>} : vector<32x32xbf16>, vector<128x32xbf16>, vector<32x128xf32> -> vector<32x128xf32>
    %247 = arith.addf %246, %1 : vector<32x128xf32>
    %cst_109 = arith.constant dense<0xFF800000> : vector<32xf32>
    %248 = vector.multi_reduction <maximumf>, %247, %cst_109 [1] : vector<32x128xf32> to vector<32xf32>
    %249 = vector.shape_cast %248 : vector<32xf32> to vector<32x1xf32>
    %250 = vector.broadcast %249 : vector<32x1xf32> to vector<32x128xf32>
    %251 = arith.subf %247, %250 : vector<32x128xf32>
    %252 = math.exp %251 : vector<32x128xf32>
    %cst_110 = arith.constant dense<0.000000e+00> : vector<32x32xf32>
    %253 = tpu.matmul %252, %2, %cst_110 {dimension_numbers = #tpu.dot_dimension_numbers<[1], [0], [0], [1], [0, 0, 1, 1], [], []>} : vector<32x128xf32>, vector<128x32xf32>, vector<32x32xf32> -> vector<32x32xf32>
    %254 = arith.truncf %252 : vector<32x128xf32> to vector<32x128xbf16>
    %cst_111 = arith.constant dense<0.000000e+00> : vector<32x32xf32>
    %255 = tpu.matmul %254, %244, %cst_111 {dimension_numbers = #tpu.dot_dimension_numbers<[1], [0], [0], [1], [0, 0, 1, 1], [], []>} : vector<32x128xbf16>, vector<128x32xbf16>, vector<32x32xf32> -> vector<32x32xf32>
    %256 = tpu.reciprocal %253 {approx = true} : vector<32x32xf32> -> vector<32x32xf32>
    %257 = arith.mulf %255, %256 : vector<32x32xf32>
    %258 = arith.truncf %257 : vector<32x32xf32> to vector<32x32xbf16>
    %c2_112 = arith.constant 2 : index
    %c0_113 = arith.constant 0 : index
    %c0_114 = arith.constant 0 : index
    %259 = vector.load %arg5[%c2_112, %c0_113, %c0_114] : memref<3x32x32xbf16, #tpu.memory_space<vmem>>, vector<1x32x32xbf16>
    %260 = vector.shape_cast %259 : vector<1x32x32xbf16> to vector<32x32xbf16>
    %cst_115 = arith.constant dense<0.000000e+00> : vector<32x32xf32>
    %261 = tpu.matmul %258, %260, %cst_115 {dimension_numbers = #tpu.dot_dimension_numbers<[1], [0], [0], [1], [0, 0, 1, 1], [], []>} : vector<32x32xbf16>, vector<32x32xbf16>, vector<32x32xf32> -> vector<32x32xf32>
    %c2_116 = arith.constant 2 : index
    %c0_117 = arith.constant 0 : index
    %262 = vector.load %arg6[%c2_116, %c0_117] : memref<3x32xf32, #tpu.memory_space<vmem>>, vector<1x32xf32>
    %263 = vector.broadcast %262 : vector<1x32xf32> to vector<32x32xf32>
    %264 = arith.addf %261, %263 : vector<32x32xf32>
    %265 = arith.addf %228, %264 : vector<32x32xf32>
    %c2_118 = arith.constant 2 : index
    %c0_119 = arith.constant 0 : index
    %266 = vector.load %arg7[%c2_118, %c0_119] : memref<3x32xf32, #tpu.memory_space<vmem>>, vector<1x32xf32>
    %c2_120 = arith.constant 2 : index
    %c0_121 = arith.constant 0 : index
    %267 = vector.load %arg8[%c2_120, %c0_121] : memref<3x32xf32, #tpu.memory_space<vmem>>, vector<1x32xf32>
    %cst_122 = arith.constant dense<0.000000e+00> : vector<32xf32>
    %268 = vector.multi_reduction <add>, %265, %cst_122 [1] : vector<32x32xf32> to vector<32xf32>
    %269 = vector.shape_cast %268 : vector<32xf32> to vector<32x1xf32>
    %cst_123 = arith.constant 3.200000e+01 : f32
    %270 = vector.broadcast %cst_123 : f32 to vector<32x1xf32>
    %271 = arith.divf %269, %270 : vector<32x1xf32>
    %272 = vector.broadcast %271 : vector<32x1xf32> to vector<32x32xf32>
    %273 = arith.subf %265, %272 : vector<32x32xf32>
    %274 = arith.mulf %273, %273 : vector<32x32xf32>
    %cst_124 = arith.constant dense<0.000000e+00> : vector<32xf32>
    %275 = vector.multi_reduction <add>, %274, %cst_124 [1] : vector<32x32xf32> to vector<32xf32>
    %276 = vector.shape_cast %275 : vector<32xf32> to vector<32x1xf32>
    %cst_125 = arith.constant 3.200000e+01 : f32
    %277 = vector.broadcast %cst_125 : f32 to vector<32x1xf32>
    %278 = arith.divf %276, %277 : vector<32x1xf32>
    %279 = vector.broadcast %271 : vector<32x1xf32> to vector<32x32xf32>
    %280 = arith.subf %265, %279 : vector<32x32xf32>
    %cst_126 = arith.constant 9.99999996E-13 : f32
    %281 = vector.broadcast %cst_126 : f32 to vector<32x1xf32>
    %282 = arith.addf %278, %281 : vector<32x1xf32>
    %283 = math.rsqrt %282 : vector<32x1xf32>
    %284 = vector.broadcast %283 : vector<32x1xf32> to vector<32x32xf32>
    %285 = arith.mulf %280, %284 : vector<32x32xf32>
    %286 = vector.broadcast %266 : vector<1x32xf32> to vector<32x32xf32>
    %287 = arith.mulf %285, %286 : vector<32x32xf32>
    %288 = vector.broadcast %267 : vector<1x32xf32> to vector<32x32xf32>
    %289 = arith.addf %287, %288 : vector<32x32xf32>
    %290 = arith.truncf %289 : vector<32x32xf32> to vector<32x32xbf16>
    %c2_127 = arith.constant 2 : index
    %c0_128 = arith.constant 0 : index
    %c0_129 = arith.constant 0 : index
    %291 = vector.load %arg9[%c2_127, %c0_128, %c0_129] : memref<3x32x128xbf16, #tpu.memory_space<vmem>>, vector<1x32x128xbf16>
    %292 = vector.shape_cast %291 : vector<1x32x128xbf16> to vector<32x128xbf16>
    %cst_130 = arith.constant dense<0.000000e+00> : vector<32x128xf32>
    %293 = tpu.matmul %290, %292, %cst_130 {dimension_numbers = #tpu.dot_dimension_numbers<[1], [0], [0], [1], [0, 0, 1, 1], [], []>} : vector<32x32xbf16>, vector<32x128xbf16>, vector<32x128xf32> -> vector<32x128xf32>
    %c2_131 = arith.constant 2 : index
    %c0_132 = arith.constant 0 : index
    %294 = vector.load %arg10[%c2_131, %c0_132] : memref<3x128xf32, #tpu.memory_space<vmem>>, vector<1x128xf32>
    %295 = vector.broadcast %294 : vector<1x128xf32> to vector<32x128xf32>
    %296 = arith.addf %293, %295 : vector<32x128xf32>
    %297 = arith.mulf %296, %296 : vector<32x128xf32>
    %298 = arith.mulf %296, %297 : vector<32x128xf32>
    %cst_133 = arith.constant 4.471500e-02 : f32
    %299 = vector.broadcast %cst_133 : f32 to vector<32x128xf32>
    %300 = arith.mulf %299, %298 : vector<32x128xf32>
    %301 = arith.addf %296, %300 : vector<32x128xf32>
    %cst_134 = arith.constant 0.797884583 : f32
    %302 = vector.broadcast %cst_134 : f32 to vector<32x128xf32>
    %303 = arith.mulf %302, %301 : vector<32x128xf32>
    %304 = math.tanh %303 : vector<32x128xf32>
    %cst_135 = arith.constant 1.000000e+00 : f32
    %305 = vector.broadcast %cst_135 : f32 to vector<32x128xf32>
    %306 = arith.addf %305, %304 : vector<32x128xf32>
    %cst_136 = arith.constant 5.000000e-01 : f32
    %307 = vector.broadcast %cst_136 : f32 to vector<32x128xf32>
    %308 = arith.mulf %307, %306 : vector<32x128xf32>
    %309 = arith.mulf %296, %308 : vector<32x128xf32>
    %310 = arith.truncf %309 : vector<32x128xf32> to vector<32x128xbf16>
    %c2_137 = arith.constant 2 : index
    %c0_138 = arith.constant 0 : index
    %c0_139 = arith.constant 0 : index
    %311 = vector.load %arg11[%c2_137, %c0_138, %c0_139] : memref<3x128x32xbf16, #tpu.memory_space<vmem>>, vector<1x128x32xbf16>
    %312 = vector.shape_cast %311 : vector<1x128x32xbf16> to vector<128x32xbf16>
    %cst_140 = arith.constant dense<0.000000e+00> : vector<32x32xf32>
    %313 = tpu.matmul %310, %312, %cst_140 {dimension_numbers = #tpu.dot_dimension_numbers<[1], [0], [0], [1], [0, 0, 1, 1], [], []>} : vector<32x128xbf16>, vector<128x32xbf16>, vector<32x32xf32> -> vector<32x32xf32>
    %c2_141 = arith.constant 2 : index
    %c0_142 = arith.constant 0 : index
    %314 = vector.load %arg12[%c2_141, %c0_142] : memref<3x32xf32, #tpu.memory_space<vmem>>, vector<1x32xf32>
    %315 = vector.broadcast %314 : vector<1x32xf32> to vector<32x32xf32>
    %316 = arith.addf %313, %315 : vector<32x32xf32>
    %317 = arith.addf %289, %316 : vector<32x32xf32>
    %c2_143 = arith.constant 2 : index
    %c0_144 = arith.constant 0 : index
    %318 = vector.load %arg13[%c2_143, %c0_144] : memref<3x32xf32, #tpu.memory_space<vmem>>, vector<1x32xf32>
    %c2_145 = arith.constant 2 : index
    %c0_146 = arith.constant 0 : index
    %319 = vector.load %arg14[%c2_145, %c0_146] : memref<3x32xf32, #tpu.memory_space<vmem>>, vector<1x32xf32>
    %cst_147 = arith.constant dense<0.000000e+00> : vector<32xf32>
    %320 = vector.multi_reduction <add>, %317, %cst_147 [1] : vector<32x32xf32> to vector<32xf32>
    %321 = vector.shape_cast %320 : vector<32xf32> to vector<32x1xf32>
    %cst_148 = arith.constant 3.200000e+01 : f32
    %322 = vector.broadcast %cst_148 : f32 to vector<32x1xf32>
    %323 = arith.divf %321, %322 : vector<32x1xf32>
    %324 = vector.broadcast %323 : vector<32x1xf32> to vector<32x32xf32>
    %325 = arith.subf %317, %324 : vector<32x32xf32>
    %326 = arith.mulf %325, %325 : vector<32x32xf32>
    %cst_149 = arith.constant dense<0.000000e+00> : vector<32xf32>
    %327 = vector.multi_reduction <add>, %326, %cst_149 [1] : vector<32x32xf32> to vector<32xf32>
    %328 = vector.shape_cast %327 : vector<32xf32> to vector<32x1xf32>
    %cst_150 = arith.constant 3.200000e+01 : f32
    %329 = vector.broadcast %cst_150 : f32 to vector<32x1xf32>
    %330 = arith.divf %328, %329 : vector<32x1xf32>
    %331 = vector.broadcast %323 : vector<32x1xf32> to vector<32x32xf32>
    %332 = arith.subf %317, %331 : vector<32x32xf32>
    %cst_151 = arith.constant 9.99999996E-13 : f32
    %333 = vector.broadcast %cst_151 : f32 to vector<32x1xf32>
    %334 = arith.addf %330, %333 : vector<32x1xf32>
    %335 = math.rsqrt %334 : vector<32x1xf32>
    %336 = vector.broadcast %335 : vector<32x1xf32> to vector<32x32xf32>
    %337 = arith.mulf %332, %336 : vector<32x32xf32>
    %338 = vector.broadcast %318 : vector<1x32xf32> to vector<32x32xf32>
    %339 = arith.mulf %337, %338 : vector<32x32xf32>
    %340 = vector.broadcast %319 : vector<1x32xf32> to vector<32x32xf32>
    %341 = arith.addf %339, %340 : vector<32x32xf32>
    %342 = tpu.concatenate %341, %228, %115 in 1 : vector<32x32xf32>, vector<32x32xf32>, vector<32x32xf32> -> vector<32x96xf32>
    %343 = arith.truncf %342 : vector<32x96xf32> to vector<32x96xbf16>
    %c0_152 = arith.constant 0 : index
    %c0_153 = arith.constant 0 : index
    %344 = vector.load %arg15[%c0_152, %c0_153] : memref<1x96xbf16, #tpu.memory_space<vmem>>, vector<1x96xbf16>
    %cst_154 = arith.constant dense<0.000000e+00> : vector<1x32xf32>
    %345 = tpu.matmul %344, %343, %cst_154 {dimension_numbers = #tpu.dot_dimension_numbers<[1], [1], [0], [0], [0, 0, 1, 0], [], []>} : vector<1x96xbf16>, vector<32x96xbf16>, vector<1x32xf32> -> vector<1x32xf32>
    %c0_155 = arith.constant 0 : index
    %c0_156 = arith.constant 0 : index
    %346 = vector.load %arg16[%c0_155, %c0_156] : memref<1x1xf32, #tpu.memory_space<vmem>>, vector<1x1xf32>
    %347 = vector.broadcast %346 : vector<1x1xf32> to vector<1x32xf32>
    %348 = arith.addf %345, %347 : vector<1x32xf32>
    %c0_157 = arith.constant 0 : index
    %c0_158 = arith.constant 0 : index
    %349 = vector.load %arg17[%c0_157, %c0_158] : memref<2x32xf32, #tpu.memory_space<vmem>>, vector<2x32xf32>
    %cst_159 = arith.constant 5.000000e-01 : f32
    %350 = vector.broadcast %cst_159 : f32 to vector<2x32xf32>
    %351 = arith.cmpf ogt, %349, %350 : vector<2x32xf32>
    %cst_160 = arith.constant -1.000000e+30 : f32
    %352 = vector.shape_cast %348 : vector<1x32xf32> to vector<1x32xf32>
    %353 = vector.broadcast %352 : vector<1x32xf32> to vector<2x32xf32>
    %354 = vector.broadcast %cst_160 : f32 to vector<2x32xf32>
    %355 = arith.select %351, %353, %354 : vector<2x32xi1>, vector<2x32xf32>
    %c0_161 = arith.constant 0 : index
    %c0_162 = arith.constant 0 : index
    %356 = vector.load %arg18[%c0_161, %c0_162] : memref<2x32xf32, #tpu.memory_space<vmem>>, vector<2x32xf32>
    %cst_163 = arith.constant 5.000000e-01 : f32
    %357 = vector.broadcast %cst_163 : f32 to vector<2x32xf32>
    %358 = arith.cmpf ogt, %356, %357 : vector<2x32xf32>
    %cst_164 = arith.constant -1.000000e+30 : f32
    %359 = vector.shape_cast %348 : vector<1x32xf32> to vector<1x32xf32>
    %360 = vector.broadcast %359 : vector<1x32xf32> to vector<2x32xf32>
    %361 = vector.broadcast %cst_164 : f32 to vector<2x32xf32>
    %362 = arith.select %358, %360, %361 : vector<2x32xi1>, vector<2x32xf32>
    %cst_165 = arith.constant dense<0xFF800000> : vector<2xf32>
    %363 = vector.multi_reduction <maximumf>, %355, %cst_165 [1] : vector<2x32xf32> to vector<2xf32>
    %364 = vector.shape_cast %363 : vector<2xf32> to vector<2x1xf32>
    %365 = vector.broadcast %364 : vector<2x1xf32> to vector<2x32xf32>
    %366 = arith.subf %355, %365 : vector<2x32xf32>
    %367 = math.exp %366 : vector<2x32xf32>
    %cst_166 = arith.constant dense<0.000000e+00> : vector<2xf32>
    %368 = vector.multi_reduction <add>, %367, %cst_166 [1] : vector<2x32xf32> to vector<2xf32>
    %369 = vector.shape_cast %368 : vector<2xf32> to vector<2x1xf32>
    %370 = tpu.reciprocal %369 {approx = true} : vector<2x1xf32> -> vector<2x1xf32>
    %371 = vector.broadcast %370 : vector<2x1xf32> to vector<2x32xf32>
    %372 = arith.mulf %367, %371 : vector<2x32xf32>
    %373 = arith.truncf %372 : vector<2x32xf32> to vector<2x32xbf16>
    %cst_167 = arith.constant dense<0xFF800000> : vector<2xf32>
    %374 = vector.multi_reduction <maximumf>, %362, %cst_167 [1] : vector<2x32xf32> to vector<2xf32>
    %375 = vector.shape_cast %374 : vector<2xf32> to vector<2x1xf32>
    %376 = vector.broadcast %375 : vector<2x1xf32> to vector<2x32xf32>
    %377 = arith.subf %362, %376 : vector<2x32xf32>
    %378 = math.exp %377 : vector<2x32xf32>
    %cst_168 = arith.constant dense<0.000000e+00> : vector<2xf32>
    %379 = vector.multi_reduction <add>, %378, %cst_168 [1] : vector<2x32xf32> to vector<2xf32>
    %380 = vector.shape_cast %379 : vector<2xf32> to vector<2x1xf32>
    %381 = tpu.reciprocal %380 {approx = true} : vector<2x1xf32> -> vector<2x1xf32>
    %382 = vector.broadcast %381 : vector<2x1xf32> to vector<2x32xf32>
    %383 = arith.mulf %378, %382 : vector<2x32xf32>
    %384 = arith.truncf %383 : vector<2x32xf32> to vector<2x32xbf16>
    %cst_169 = arith.constant dense<0.000000e+00> : vector<2x96xf32>
    %385 = tpu.matmul %373, %343, %cst_169 {dimension_numbers = #tpu.dot_dimension_numbers<[1], [0], [0], [1], [0, 0, 1, 1], [], []>} : vector<2x32xbf16>, vector<32x96xbf16>, vector<2x96xf32> -> vector<2x96xf32>
    %cst_170 = arith.constant dense<0.000000e+00> : vector<2x96xf32>
    %386 = tpu.matmul %384, %343, %cst_170 {dimension_numbers = #tpu.dot_dimension_numbers<[1], [0], [0], [1], [0, 0, 1, 1], [], []>} : vector<2x32xbf16>, vector<32x96xbf16>, vector<2x96xf32> -> vector<2x96xf32>
    %c0_171 = arith.constant 0 : index
    %c0_172 = arith.constant 0 : index
    %387 = vector.load %arg19[%c0_171, %c0_172] : memref<2x32xbf16, #tpu.memory_space<vmem>>, vector<2x32xbf16>
    %cst_173 = arith.constant dense<0.000000e+00> : vector<2x96xf32>
    %388 = tpu.matmul %387, %343, %cst_173 {dimension_numbers = #tpu.dot_dimension_numbers<[1], [0], [0], [1], [0, 0, 1, 1], [], []>} : vector<2x32xbf16>, vector<32x96xbf16>, vector<2x96xf32> -> vector<2x96xf32>
    %389 = tpu.concatenate %385, %386, %388 in 1 : vector<2x96xf32>, vector<2x96xf32>, vector<2x96xf32> -> vector<2x288xf32>
    %390 = arith.truncf %389 : vector<2x288xf32> to vector<2x288xbf16>
    %c0_174 = arith.constant 0 : index
    %c0_175 = arith.constant 0 : index
    %391 = vector.load %arg20[%c0_174, %c0_175] : memref<288x512xbf16, #tpu.memory_space<vmem>>, vector<288x512xbf16>
    %cst_176 = arith.constant dense<0.000000e+00> : vector<2x512xf32>
    %392 = tpu.matmul %390, %391, %cst_176 {dimension_numbers = #tpu.dot_dimension_numbers<[1], [0], [0], [1], [0, 0, 1, 1], [], []>} : vector<2x288xbf16>, vector<288x512xbf16>, vector<2x512xf32> -> vector<2x512xf32>
    %c0_177 = arith.constant 0 : index
    %c0_178 = arith.constant 0 : index
    %393 = vector.load %arg21[%c0_177, %c0_178] : memref<1x512xf32, #tpu.memory_space<vmem>>, vector<1x512xf32>
    %394 = vector.broadcast %393 : vector<1x512xf32> to vector<2x512xf32>
    %395 = arith.addf %392, %394 : vector<2x512xf32>
    %cst_179 = arith.constant 0.000000e+00 : f32
    %396 = vector.broadcast %cst_179 : f32 to vector<2x512xf32>
    %397 = arith.maximumf %395, %396 : vector<2x512xf32>
    %398 = arith.truncf %397 : vector<2x512xf32> to vector<2x512xbf16>
    %c0_180 = arith.constant 0 : index
    %c0_181 = arith.constant 0 : index
    %399 = vector.load %arg22[%c0_180, %c0_181] : memref<512x3xbf16, #tpu.memory_space<vmem>>, vector<512x3xbf16>
    %cst_182 = arith.constant dense<0.000000e+00> : vector<2x3xf32>
    %400 = tpu.matmul %398, %399, %cst_182 {dimension_numbers = #tpu.dot_dimension_numbers<[1], [0], [0], [1], [0, 0, 1, 1], [], []>} : vector<2x512xbf16>, vector<512x3xbf16>, vector<2x3xf32> -> vector<2x3xf32>
    %c0_183 = arith.constant 0 : index
    %c0_184 = arith.constant 0 : index
    %401 = vector.load %arg23[%c0_183, %c0_184] : memref<1x3xf32, #tpu.memory_space<vmem>>, vector<1x3xf32>
    %402 = vector.broadcast %401 : vector<1x3xf32> to vector<2x3xf32>
    %403 = arith.addf %400, %402 : vector<2x3xf32>
    %c0_185 = arith.constant 0 : index
    %c0_186 = arith.constant 0 : index
    %404 = vector.load %arg24[%c0_185, %c0_186] : memref<2x3xf32, #tpu.memory_space<vmem>>, vector<2x3xf32>
    tpu.vector_store %arg24[%c0_185, %c0_186], %403 {strides = array<i32>} : memref<2x3xf32, #tpu.memory_space<vmem>>, vector<2x3xf32>,
    return
  }
}

</mosaic_0001>

<llo_original>
// kernel: tpu_custom_call.1
$region0: #{tpu_custom_call.1}
  #allocation0 [shape = 'u32[]', space=smem, size = 0x4, offset = 0x4, fixed_abs, tag = 'smem constant byte address 0x4 - core index']
  #allocation1 [shape = 'u32[144,128]{1,0:T(1,128)}', space=vmem, size = 0x12000, scoped, tag = 'internal scratch']
  #allocation2 [shape = 'f32[1,1]{1,0:T(1,128)S(1)}', space=vmem, size = 0x200, scoped, tag = 'scoped memory for tpu_custom_call.1']
  %s0 = inlined_call_operand.hbm [shape: f32[32,32], index: 0, kind: input, shape index: {}]
  %s1 = inlined_call_operand.hbm [shape: f32[32,128], index: 1, kind: input, shape index: {}]
  %s2 = inlined_call_operand.vmem [shape: f32[128,32], index: 2, kind: input, shape index: {}]
  %s3 = inlined_call_operand.vmem [shape: bf16[3,32,96], index: 3, kind: input, shape index: {}]
  %s4 = inlined_call_operand.vmem [shape: f32[3,96], index: 4, kind: input, shape index: {}]
  %s5 = inlined_call_operand.vmem [shape: bf16[3,32,32], index: 5, kind: input, shape index: {}]
  %s6 = inlined_call_operand.vmem [shape: f32[3,32], index: 6, kind: input, shape index: {}]
  %s7 = inlined_call_operand.vmem [shape: f32[3,32], index: 7, kind: input, shape index: {}]
  %s8 = inlined_call_operand.vmem [shape: f32[3,32], index: 8, kind: input, shape index: {}]
  %s9 = inlined_call_operand.vmem [shape: bf16[3,32,128], index: 9, kind: input, shape index: {}]
  %s10 = inlined_call_operand.hbm [shape: f32[3,128], index: 10, kind: input, shape index: {}]
  %s11 = inlined_call_operand.vmem [shape: bf16[3,128,32], index: 11, kind: input, shape index: {}]
  %s12 = inlined_call_operand.hbm [shape: f32[3,32], index: 12, kind: input, shape index: {}]
  %s13 = inlined_call_operand.hbm [shape: f32[3,32], index: 13, kind: input, shape index: {}]
  %s14 = inlined_call_operand.hbm [shape: f32[3,32], index: 14, kind: input, shape index: {}]
  %s15 = inlined_call_operand.vmem [shape: bf16[1,96], index: 15, kind: input, shape index: {}]
  %s16 = inlined_call_operand.<no memory space> [shape: f32[1,1], index: 16, kind: input, shape index: {}]
  %s17 = inlined_call_operand.vmem [shape: f32[2,32], index: 17, kind: input, shape index: {}]
  %s18 = inlined_call_operand.hbm [shape: f32[2,32], index: 18, kind: input, shape index: {}]
  %s19 = inlined_call_operand.hbm [shape: bf16[2,32], index: 19, kind: input, shape index: {}]
  %s20 = inlined_call_operand.vmem [shape: bf16[288,512], index: 20, kind: input, shape index: {}]
  %s21 = inlined_call_operand.hbm [shape: f32[1,512], index: 21, kind: input, shape index: {}]
  %s22 = inlined_call_operand.vmem [shape: bf16[512,3], index: 22, kind: input, shape index: {}]
  %s23 = inlined_call_operand.hbm [shape: f32[1,3], index: 23, kind: input, shape index: {}]
  %s24 = inlined_call_operand.hbm [shape: f32[2,3], index: 24, kind: output, shape index: {}]
  %s25 = sld [smem:[#allocation0]]
  $region146: #{tpu_custom_call.1} parent=0
    _
  %s27 = ssub.s32 1, %s25
  %s28 = scalar_select 0, %s27, %s25
  %v29 = vstv %s16
  %30 = vst [vmem:[#allocation2] sm:$0x1] %v29
  $region1: #{tpu_custom_call.1} parent=0
    #allocation3 [shape = 'u8[16384]{0}', space=vmem, size = 0x4000, scoped, tag = 'input window, operand 0, single buffered']
    #allocation4 [shape = 's32[1]{0}', space=sflag, size = 0x4, scoped, tag = 'scoped memory for tpu_custom_call.1']
    #allocation5 [shape = 's32[1]{0}', space=sflag, size = 0x4, scoped, tag = 'scoped memory for tpu_custom_call.1']
    #allocation6 [shape = 'u8[16384]{0}', space=vmem, size = 0x4000, scoped, tag = 'input window, operand 1, single buffered']
    #allocation7 [shape = 's32[1]{0}', space=sflag, size = 0x4, scoped, tag = 'scoped memory for tpu_custom_call.1']
    #allocation8 [shape = 'u8[2048]{0}', space=vmem, size = 0x800, scoped, tag = 'input window, operand 10, single buffered']
    #allocation9 [shape = 'u8[2048]{0}', space=vmem, size = 0x800, scoped, tag = 'input window, operand 12, single buffered']
    #allocation10 [shape = 's32[1]{0}', space=sflag, size = 0x4, scoped, tag = 'scoped memory for tpu_custom_call.1']
    #allocation11 [shape = 'u8[2048]{0}', space=vmem, size = 0x800, scoped, tag = 'input window, operand 13, single buffered']
    #allocation12 [shape = 'u8[2048]{0}', space=vmem, size = 0x800, scoped, tag = 'input window, operand 14, single buffered']
    #allocation13 [shape = 's32[1]{0}', space=sflag, size = 0x4, scoped, tag = 'scoped memory for tpu_custom_call.1']
    #allocation14 [shape = 'u8[1024]{0}', space=vmem, size = 0x400, scoped, tag = 'input window, operand 18, single buffered']
    #allocation15 [shape = 'u8[512]{0}', space=vmem, size = 0x400, scoped, tag = 'input window, operand 19, single buffered']
    #allocation16 [shape = 's32[1]{0}', space=sflag, size = 0x4, scoped, tag = 'scoped memory for tpu_custom_call.1']
    #allocation17 [shape = 'u8[2048]{0}', space=vmem, size = 0x800, scoped, tag = 'input window, operand 21, single buffered']
    #allocation18 [shape = 'u8[512]{0}', space=vmem, size = 0x400, scoped, tag = 'input window, operand 23, single buffered']
    #allocation19 [shape = 's32[1]{0}', space=sflag, size = 0x4, scoped, tag = 'scoped memory for tpu_custom_call.1']
    #allocation20 [shape = 'u8[1024]{0}', space=vmem, size = 0x400, scoped, tag = 'output window, operand 0, single buffered']
    %31 = vsyncpa [#allocation4], 0
    %32 = vsyncpa [#allocation7], 0
    %33 = vsyncpa [#allocation10], 0
    %34 = vsyncpa [#allocation13], 0
    %35 = vsyncpa [#allocation16], 0
    %36 = vsyncpa [#allocation19], 0
    %37 = vsyncpa [#allocation5], 0
    // Predicated region
    $region2: #{tpu_custom_call.1} parent=1 // pred_check
      _
    $region3: #{tpu_custom_call.1} parent=1 // pred_check_branch
      %39 = sbr.rel (0) target = $region5
    $region4: #{tpu_custom_call.1} parent=1 // pred_region
      %s41 = ssub.s32 512, 512
      %42 = vsyncadd [#allocation4], %s41
      %s43 = sshll.u32 [#allocation3], 4
      %s44 = int_to_ptr.vmem [resolvable:$true] %s43
      %49 = dma.hbm_to_vmem [thread:$0]  %s0, 512, %s44, [#allocation4], 128, 128, 8
    $region5: #{tpu_custom_call.1} parent=1 // pred_fallthru
      _
    // Predicated region
    $region6: #{tpu_custom_call.1} parent=1 // pred_check
      _
    $region7: #{tpu_custom_call.1} parent=1 // pred_check_branch
      %51 = sbr.rel (0) target = $region9
    $region8: #{tpu_custom_call.1} parent=1 // pred_region
      %s53 = ssub.s32 512, 512
      %54 = vsyncadd [#allocation7], %s53
      %s55 = sshll.u32 [#allocation6], 4
      %s56 = int_to_ptr.vmem [resolvable:$true] %s55
      %61 = dma.hbm_to_vmem [thread:$0]  %s1, 512, %s56, [#allocation7], 128, 128, 8
    $region9: #{tpu_custom_call.1} parent=1 // pred_fallthru
      _
    // Predicated region
    $region10: #{tpu_custom_call.1} parent=1 // pred_check
      _
    $region11: #{tpu_custom_call.1} parent=1 // pred_check_branch
      %63 = sbr.rel (0) target = $region13
    $region12: #{tpu_custom_call.1} parent=1 // pred_region
      _
    $region13: #{tpu_custom_call.1} parent=1 // pred_fallthru
      _
    // Predicated region
    $region14: #{tpu_custom_call.1} parent=1 // pred_check
      _
    $region15: #{tpu_custom_call.1} parent=1 // pred_check_branch
      %65 = sbr.rel (0) target = $region17
    $region16: #{tpu_custom_call.1} parent=1 // pred_region
      _
    $region17: #{tpu_custom_call.1} parent=1 // pred_fallthru
      _
    // Predicated region
    $region18: #{tpu_custom_call.1} parent=1 // pred_check
      _
    $region19: #{tpu_custom_call.1} parent=1 // pred_check_branch
      %67 = sbr.rel (0) target = $region21
    $region20: #{tpu_custom_call.1} parent=1 // pred_region
      _
    $region21: #{tpu_custom_call.1} parent=1 // pred_fallthru
      _
    // Predicated region
    $region22: #{tpu_custom_call.1} parent=1 // pred_check
      _
    $region23: #{tpu_custom_call.1} parent=1 // pred_check_branch
      %69 = sbr.rel (0) target = $region25
    $region24: #{tpu_custom_call.1} parent=1 // pred_region
      _
    $region25: #{tpu_custom_call.1} parent=1 // pred_fallthru
      _
    // Predicated region
    $region26: #{tpu_custom_call.1} parent=1 // pred_check
      _
    $region27: #{tpu_custom_call.1} parent=1 // pred_check_branch
      %71 = sbr.rel (0) target = $region29
    $region28: #{tpu_custom_call.1} parent=1 // pred_region
      _
    $region29: #{tpu_custom_call.1} parent=1 // pred_fallthru
      _
    // Predicated region
    $region30: #{tpu_custom_call.1} parent=1 // pred_check
      _
    $region31: #{tpu_custom_call.1} parent=1 // pred_check_branch
      %73 = sbr.rel (0) target = $region33
    $region32: #{tpu_custom_call.1} parent=1 // pred_region
      _
    $region33: #{tpu_custom_call.1} parent=1 // pred_fallthru
      _
    // Predicated region
    $region34: #{tpu_custom_call.1} parent=1 // pred_check
      _
    $region35: #{tpu_custom_call.1} parent=1 // pred_check_branch
      %75 = sbr.rel (0) target = $region37
    $region36: #{tpu_custom_call.1} parent=1 // pred_region
      _
    $region37: #{tpu_custom_call.1} parent=1 // pred_fallthru
      _
    // Predicated region
    $region38: #{tpu_custom_call.1} parent=1 // pred_check
      _
    $region39: #{tpu_custom_call.1} parent=1 // pred_check_branch
      %77 = sbr.rel (0) target = $region41
    $region40: #{tpu_custom_call.1} parent=1 // pred_region
      _
    $region41: #{tpu_custom_call.1} parent=1 // pred_fallthru
      _
    // Predicated region
    $region42: #{tpu_custom_call.1} parent=1 // pred_check
      _
    $region43: #{tpu_custom_call.1} parent=1 // pred_check_branch
      %79 = sbr.rel (0) target = $region45
    $region44: #{tpu_custom_call.1} parent=1 // pred_region
      %s81 = ssub.s32 64, 64
      %82 = vsyncadd [#allocation7], %s81
      %s84 = sshll.u32 [#allocation8], 4
      %s85 = int_to_ptr.vmem [resolvable:$true] %s84
      %87 = dma.hbm_to_vmem [thread:$0]  %s10, 64, %s85, [#allocation7]
    $region45: #{tpu_custom_call.1} parent=1 // pred_fallthru
      _
    // Predicated region
    $region46: #{tpu_custom_call.1} parent=1 // pred_check
      _
    $region47: #{tpu_custom_call.1} parent=1 // pred_check_branch
      %89 = sbr.rel (0) target = $region49
    $region48: #{tpu_custom_call.1} parent=1 // pred_region
      _
    $region49: #{tpu_custom_call.1} parent=1 // pred_fallthru
      _
    // Predicated region
    $region50: #{tpu_custom_call.1} parent=1 // pred_check
      _
    $region51: #{tpu_custom_call.1} parent=1 // pred_check_branch
      %91 = sbr.rel (0) target = $region53
    $region52: #{tpu_custom_call.1} parent=1 // pred_region
      %s93 = ssub.s32 64, 64
      %94 = vsyncadd [#allocation10], %s93
      %s96 = sshll.u32 [#allocation9], 4
      %s97 = int_to_ptr.vmem [resolvable:$true] %s96
      %99 = dma.hbm_to_vmem [thread:$0]  %s12, 64, %s97, [#allocation10]
    $region53: #{tpu_custom_call.1} parent=1 // pred_fallthru
      _
    // Predicated region
    $region54: #{tpu_custom_call.1} parent=1 // pred_check
      _
    $region55: #{tpu_custom_call.1} parent=1 // pred_check_branch
      %101 = sbr.rel (0) target = $region57
    $region56: #{tpu_custom_call.1} parent=1 // pred_region
      %s103 = ssub.s32 64, 64
      %104 = vsyncadd [#allocation10], %s103
      %s106 = sshll.u32 [#allocation11], 4
      %s107 = int_to_ptr.vmem [resolvable:$true] %s106
      %109 = dma.hbm_to_vmem [thread:$0]  %s13, 64, %s107, [#allocation10]
    $region57: #{tpu_custom_call.1} parent=1 // pred_fallthru
      _
    // Predicated region
    $region58: #{tpu_custom_call.1} parent=1 // pred_check
      _
    $region59: #{tpu_custom_call.1} parent=1 // pred_check_branch
      %111 = sbr.rel (0) target = $region61
    $region60: #{tpu_custom_call.1} parent=1 // pred_region
      %s113 = ssub.s32 64, 64
      %114 = vsyncadd [#allocation13], %s113
      %s116 = sshll.u32 [#allocation12], 4
      %s117 = int_to_ptr.vmem [resolvable:$true] %s116
      %119 = dma.hbm_to_vmem [thread:$0]  %s14, 64, %s117, [#allocation13]
    $region61: #{tpu_custom_call.1} parent=1 // pred_fallthru
      _
    // Predicated region
    $region62: #{tpu_custom_call.1} parent=1 // pred_check
      _
    $region63: #{tpu_custom_call.1} parent=1 // pred_check_branch
      %121 = sbr.rel (0) target = $region65
    $region64: #{tpu_custom_call.1} parent=1 // pred_region
      _
    $region65: #{tpu_custom_call.1} parent=1 // pred_fallthru
      _
    // Predicated region
    $region66: #{tpu_custom_call.1} parent=1 // pred_check
      _
    $region67: #{tpu_custom_call.1} parent=1 // pred_check_branch
      %123 = sbr.rel (0) target = $region69
    $region68: #{tpu_custom_call.1} parent=1 // pred_region
      _
    $region69: #{tpu_custom_call.1} parent=1 // pred_fallthru
      _
    // Predicated region
    $region70: #{tpu_custom_call.1} parent=1 // pred_check
      _
    $region71: #{tpu_custom_call.1} parent=1 // pred_check_branch
      %125 = sbr.rel (0) target = $region73
    $region72: #{tpu_custom_call.1} parent=1 // pred_region
      _
    $region73: #{tpu_custom_call.1} parent=1 // pred_fallthru
      _
    // Predicated region
    $region74: #{tpu_custom_call.1} parent=1 // pred_check
      _
    $region75: #{tpu_custom_call.1} parent=1 // pred_check_branch
      %127 = sbr.rel (0) target = $region77
    $region76: #{tpu_custom_call.1} parent=1 // pred_region
      %s129 = ssub.s32 32, 32
      %130 = vsyncadd [#allocation13], %s129
      %s132 = sshll.u32 [#allocation14], 4
      %s133 = int_to_ptr.vmem [resolvable:$true] %s132
      %135 = dma.hbm_to_vmem [thread:$0]  %s18, 32, %s133, [#allocation13]
    $region77: #{tpu_custom_call.1} parent=1 // pred_fallthru
      _
    // Predicated region
    $region78: #{tpu_custom_call.1} parent=1 // pred_check
      _
    $region79: #{tpu_custom_call.1} parent=1 // pred_check_branch
      %137 = sbr.rel (0) target = $region81
    $region80: #{tpu_custom_call.1} parent=1 // pred_region
      %s139 = ssub.s32 16, 16
      %140 = vsyncadd [#allocation16], %s139
      %s142 = sshll.u32 [#allocation15], 4
      %s143 = int_to_ptr.vmem [resolvable:$true] %s142
      %145 = dma.hbm_to_vmem [thread:$0]  %s19, 16, %s143, [#allocation16]
    $region81: #{tpu_custom_call.1} parent=1 // pred_fallthru
      _
    // Predicated region
    $region82: #{tpu_custom_call.1} parent=1 // pred_check
      _
    $region83: #{tpu_custom_call.1} parent=1 // pred_check_branch
      %147 = sbr.rel (0) target = $region85
    $region84: #{tpu_custom_call.1} parent=1 // pred_region
      _
    $region85: #{tpu_custom_call.1} parent=1 // pred_fallthru
      _
    // Predicated region
    $region86: #{tpu_custom_call.1} parent=1 // pred_check
      _
    $region87: #{tpu_custom_call.1} parent=1 // pred_check_branch
      %149 = sbr.rel (0) target = $region89
    $region88: #{tpu_custom_call.1} parent=1 // pred_region
      %s151 = ssub.s32 64, 64
      %152 = vsyncadd [#allocation16], %s151
      %s154 = sshll.u32 [#allocation17], 4
      %s155 = int_to_ptr.vmem [resolvable:$true] %s154
      %157 = dma.hbm_to_vmem [thread:$0]  %s21, 64, %s155, [#allocation16]
    $region89: #{tpu_custom_call.1} parent=1 // pred_fallthru
      _
    // Predicated region
    $region90: #{tpu_custom_call.1} parent=1 // pred_check
      _
    $region91: #{tpu_custom_call.1} parent=1 // pred_check_branch
      %159 = sbr.rel (0) target = $region93
    $region92: #{tpu_custom_call.1} parent=1 // pred_region
      _
    $region93: #{tpu_custom_call.1} parent=1 // pred_fallthru
      _
    // Predicated region
    $region94: #{tpu_custom_call.1} parent=1 // pred_check
      _
    $region95: #{tpu_custom_call.1} parent=1 // pred_check_branch
      %161 = sbr.rel (0) target = $region97
    $region96: #{tpu_custom_call.1} parent=1 // pred_region
      %s163 = ssub.s32 16, 16
      %164 = vsyncadd [#allocation19], %s163
      %s166 = sshll.u32 [#allocation18], 4
      %s167 = int_to_ptr.vmem [resolvable:$true] %s166
      %169 = dma.hbm_to_vmem [thread:$0]  %s23, 16, %s167, [#allocation19]
    $region97: #{tpu_custom_call.1} parent=1 // pred_fallthru
      _
    // Predicated region
    $region98: #{tpu_custom_call.1} parent=1 // pred_check
      _
    $region99: #{tpu_custom_call.1} parent=1 // pred_check_branch
      %171 = sbr.rel (0) target = $region101
    $region100: #{tpu_custom_call.1} parent=1 // pred_region
      %172 = dma.done [#allocation4], 512
    $region101: #{tpu_custom_call.1} parent=1 // pred_fallthru
      _
    // Predicated region
    $region102: #{tpu_custom_call.1} parent=1 // pred_check
      _
    $region103: #{tpu_custom_call.1} parent=1 // pred_check_branch
      %174 = sbr.rel (0) target = $region105
    $region104: #{tpu_custom_call.1} parent=1 // pred_region
      %175 = dma.done [#allocation7], 512
    $region105: #{tpu_custom_call.1} parent=1 // pred_fallthru
      _
    // Predicated region
    $region106: #{tpu_custom_call.1} parent=1 // pred_check
      _
    $region107: #{tpu_custom_call.1} parent=1 // pred_check_branch
      %177 = sbr.rel (0) target = $region109
    $region108: #{tpu_custom_call.1} parent=1 // pred_region
      %178 = dma.done [#allocation7], 64
    $region109: #{tpu_custom_call.1} parent=1 // pred_fallthru
      _
    // Predicated region
    $region110: #{tpu_custom_call.1} parent=1 // pred_check
      _
    $region111: #{tpu_custom_call.1} parent=1 // pred_check_branch
      %180 = sbr.rel (0) target = $region113
    $region112: #{tpu_custom_call.1} parent=1 // pred_region
      %181 = dma.done [#allocation10], 64
    $region113: #{tpu_custom_call.1} parent=1 // pred_fallthru
      _
    // Predicated region
    $region114: #{tpu_custom_call.1} parent=1 // pred_check
      _
    $region115: #{tpu_custom_call.1} parent=1 // pred_check_branch
      %183 = sbr.rel (0) target = $region117
    $region116: #{tpu_custom_call.1} parent=1 // pred_region
      %184 = dma.done [#allocation10], 64
    $region117: #{tpu_custom_call.1} parent=1 // pred_fallthru
      _
    // Predicated region
    $region118: #{tpu_custom_call.1} parent=1 // pred_check
      _
    $region119: #{tpu_custom_call.1} parent=1 // pred_check_branch
      %186 = sbr.rel (0) target = $region121
    $region120: #{tpu_custom_call.1} parent=1 // pred_region
      %187 = dma.done [#allocation13], 64
    $region121: #{tpu_custom_call.1} parent=1 // pred_fallthru
      _
    // Predicated region
    $region122: #{tpu_custom_call.1} parent=1 // pred_check
      _
    $region123: #{tpu_custom_call.1} parent=1 // pred_check_branch
      %189 = sbr.rel (0) target = $region125
    $region124: #{tpu_custom_call.1} parent=1 // pred_region
      %190 = dma.done [#allocation13], 32
    $region125: #{tpu_custom_call.1} parent=1 // pred_fallthru
      _
    // Predicated region
    $region126: #{tpu_custom_call.1} parent=1 // pred_check
      _
    $region127: #{tpu_custom_call.1} parent=1 // pred_check_branch
      %192 = sbr.rel (0) target = $region129
    $region128: #{tpu_custom_call.1} parent=1 // pred_region
      %193 = dma.done [#allocation16], 16
    $region129: #{tpu_custom_call.1} parent=1 // pred_fallthru
      _
    // Predicated region
    $region130: #{tpu_custom_call.1} parent=1 // pred_check
      _
    $region131: #{tpu_custom_call.1} parent=1 // pred_check_branch
      %195 = sbr.rel (0) target = $region133
    $region132: #{tpu_custom_call.1} parent=1 // pred_region
      %196 = dma.done [#allocation16], 64
    $region133: #{tpu_custom_call.1} parent=1 // pred_fallthru
      _
    // Predicated region
    $region134: #{tpu_custom_call.1} parent=1 // pred_check
      _
    $region135: #{tpu_custom_call.1} parent=1 // pred_check_branch
      %198 = sbr.rel (0) target = $region137
    $region136: #{tpu_custom_call.1} parent=1 // pred_region
      %199 = dma.done [#allocation19], 16
    $region137: #{tpu_custom_call.1} parent=1 // pred_fallthru
      _
    %v201 = vld [vmem:[#allocation3] sm:$0xff]
    %v202 = vld [vmem:[#allocation3 + $0x8] sm:$0xff]
    %v203 = vld [vmem:[#allocation3 + $0x10] sm:$0xff]
    %v204 = vld [vmem:[#allocation3 + $0x18] sm:$0xff]
    %v205 = vld [vmem:[#allocation6] sm:$0xff]
    %v206 = vld [vmem:[#allocation6 + $0x8] sm:$0xff]
    %v207 = vld [vmem:[#allocation6 + $0x10] sm:$0xff]
    %v208 = vld [vmem:[#allocation6 + $0x18] sm:$0xff]
    %v209 = vld [vmem:[%s2] sm:$0xff]
    %v210 = vld [vmem:[%s2 + $0x8] sm:$0xff]
    %v211 = vld [vmem:[%s2 + $0x10] sm:$0xff]
    %v212 = vld [vmem:[%s2 + $0x18] sm:$0xff]
    %v213 = vld [vmem:[%s2 + $0x20] sm:$0xff]
    %v214 = vld [vmem:[%s2 + $0x28] sm:$0xff]
    %v215 = vld [vmem:[%s2 + $0x30] sm:$0xff]
    %v216 = vld [vmem:[%s2 + $0x38] sm:$0xff]
    %v217 = vld [vmem:[%s2 + $0x40] sm:$0xff]
    %v218 = vld [vmem:[%s2 + $0x48] sm:$0xff]
    %v219 = vld [vmem:[%s2 + $0x50] sm:$0xff]
    %v220 = vld [vmem:[%s2 + $0x58] sm:$0xff]
    %v221 = vld [vmem:[%s2 + $0x60] sm:$0xff]
    %v222 = vld [vmem:[%s2 + $0x68] sm:$0xff]
    %v223 = vld [vmem:[%s2 + $0x70] sm:$0xff]
    %v224 = vld [vmem:[%s2 + $0x78] sm:$0xff]
    %v225 = vpack.c.bf16 %v202, %v201
    %v226 = vpack.c.bf16 %v204, %v203
    %v227 = vld [vmem:[%s3] sm:$0xf]
    %v228 = vld [vmem:[%s3 + $0x4] sm:$0xf]
    %v229 = vld [vmem:[%s3 + $0x8] sm:$0xf]
    %v230 = vld [vmem:[%s3 + $0xc] sm:$0xf]
    %v231 = vld [vmem:[%s4] sm:$0x1]
    %v232 = vlaneseq
    %v233 = vshrl.u32 %v232, 7
    %v234 = vsub.s32 0, %v233
    %v235 = vrot.slane %v231, %v234
    %v240 = vunpack.c.l.b16 %v227
    %v241 = vunpack.c.l.b16 %v228
    %v242 = vunpack.c.l.b16 %v229
    %v243 = vunpack.c.l.b16 %v230
    %v244 = vpack.c.b16 %v241, %v240
    %v245 = vpack.c.b16 %v243, %v242
    %vm248 = vcmask 261120
    %v250 = vsel %vm248, %v225, 0
    %v253 = vsel %vm248, %v226, 0
    %255 = vmatprep.subr.bf16.mxu0 0
    %256 = vmatpush1.bf16.msra.mxu0 %v244
    %257 = vmatprep.subr.bf16.mxu0 0
    %258 = vmatpush1.bf16.msra.mxu0 %v245
    %259 = vmatprep.subr.bf16.mxu0 0
    %260 = vmatpush1.bf16.msra.mxu0 0
    %261 = vmatprep.subr.bf16.mxu0 0
    %262 = vmatpush1.bf16.msra.mxu0 0
    %263 = vmatprep.subr.bf16.mxu0 0
    %264 = vmatpush1.bf16.msra.mxu0 0
    %265 = vmatprep.subr.bf16.mxu0 0
    %266 = vmatpush1.bf16.msra.mxu0 0
    %267 = vmatprep.subr.bf16.mxu0 0
    %268 = vmatpush1.bf16.msra.mxu0 0
    %269 = vmatprep.subr.bf16.mxu0 0
    %270 = vmatpush1.bf16.msra.mxu0 0
    %271 = vmatprep.subr.bf16.mxu0 0
    %272 = vmatpush1.bf16.msra.mxu0 0
    %273 = vmatprep.subr.bf16.mxu0 0
    %274 = vmatpush1.bf16.msra.mxu0 0
    %275 = vmatprep.subr.bf16.mxu0 0
    %276 = vmatpush1.bf16.msra.mxu0 0
    %277 = vmatprep.subr.bf16.mxu0 0
    %278 = vmatpush1.bf16.msra.mxu0 0
    %279 = vmatprep.subr.bf16.mxu0 0
    %280 = vmatpush1.bf16.msra.mxu0 0
    %281 = vmatprep.subr.bf16.mxu0 0
    %282 = vmatpush1.bf16.msra.mxu0 0
    %283 = vmatprep.subr.bf16.mxu0 0
    %284 = vmatpush1.bf16.msra.mxu0 0
    %285 = vmatprep.subr.bf16.mxu0 0
    %286 = vmatpush1.bf16.msra.mxu0 0
    %287 = vmatprep.mubr.bf16.mxu0 0
    %288 = vmatmul.mubr.bf16.gmra.mrb[0].mxu0 %v250
    %v289 = vpop.f32.mrb[0].mxu0
    %v290 = vadd.f32 %v235, %v289
    %v291 = vpop.f32.mrb[0].mxu0
    %v292 = vpop.f32.mrb[0].mxu0
    %v293 = vadd.f32 %v235, %v292
    %v294 = vpop.f32.mrb[0].mxu0
    %295 = vmatprep.mubr.bf16.mxu0 0
    %296 = vmatmul.mubr.bf16.gmra.mrb[0].mxu0 %v253
    %v297 = vpop.f32.mrb[0].mxu0
    %v298 = vadd.f32 %v235, %v297
    %v299 = vpop.f32.mrb[0].mxu0
    %v300 = vpop.f32.mrb[0].mxu0
    %v301 = vadd.f32 %v235, %v300
    %v302 = vpop.f32.mrb[0].mxu0
    %303 = vdwg.mxu0
    %320 = vrot.lane.b32.xlu0 %v209, 32
    %v321 = vpop.permute.xlu0 %320
    %322 = vrot.lane.b32.xlu0 %v210, 32
    %v323 = vpop.permute.xlu0 %322
    %324 = vrot.lane.b32.xlu0 %v211, 32
    %v325 = vpop.permute.xlu0 %324
    %326 = vrot.lane.b32.xlu0 %v212, 32
    %v327 = vpop.permute.xlu0 %326
    %328 = vrot.lane.b32.xlu0 %v213, 32
    %v329 = vpop.permute.xlu0 %328
    %330 = vrot.lane.b32.xlu0 %v214, 32
    %v331 = vpop.permute.xlu0 %330
    %332 = vrot.lane.b32.xlu0 %v215, 32
    %v333 = vpop.permute.xlu0 %332
    %334 = vrot.lane.b32.xlu0 %v216, 32
    %v335 = vpop.permute.xlu0 %334
    %336 = vrot.lane.b32.xlu0 %v217, 32
    %v337 = vpop.permute.xlu0 %336
    %338 = vrot.lane.b32.xlu0 %v218, 32
    %v339 = vpop.permute.xlu0 %338
    %340 = vrot.lane.b32.xlu0 %v219, 32
    %v341 = vpop.permute.xlu0 %340
    %342 = vrot.lane.b32.xlu0 %v220, 32
    %v343 = vpop.permute.xlu0 %342
    %344 = vrot.lane.b32.xlu0 %v221, 32
    %v345 = vpop.permute.xlu0 %344
    %346 = vrot.lane.b32.xlu0 %v222, 32
    %v347 = vpop.permute.xlu0 %346
    %348 = vrot.lane.b32.xlu0 %v223, 32
    %v349 = vpop.permute.xlu0 %348
    %350 = vrot.lane.b32.xlu0 %v224, 32
    %v351 = vpop.permute.xlu0 %350
    %v368 = vmul.f32 %v290, %v321
    %v369 = vmul.f32 %v293, %v323
    %v370 = vmul.f32 %v298, %v325
    %v371 = vmul.f32 %v301, %v327
    %v372 = vmul.f32 %v290, %v329
    %v373 = vmul.f32 %v293, %v331
    %v374 = vmul.f32 %v298, %v333
    %v375 = vmul.f32 %v301, %v335
    %v376 = vmul.f32 %v290, %v337
    %v377 = vmul.f32 %v293, %v339
    %v378 = vmul.f32 %v298, %v341
    %v379 = vmul.f32 %v301, %v343
    %v380 = vmul.f32 %v290, %v345
    %v381 = vmul.f32 %v293, %v347
    %v382 = vmul.f32 %v298, %v349
    %v383 = vmul.f32 %v301, %v351
    %v384 = vpack.c.bf16 %v369, %v368
    %v385 = vpack.c.bf16 %v371, %v370
    %v386 = vpack.c.bf16 %v373, %v372
    %v387 = vpack.c.bf16 %v375, %v374
    %v388 = vpack.c.bf16 %v377, %v376
    %v389 = vpack.c.bf16 %v379, %v378
    %v390 = vpack.c.bf16 %v381, %v380
    %v391 = vpack.c.bf16 %v383, %v382
    %392 = vrot.lane.b32.xlu0 %v209, 64
    %v393 = vpop.permute.xlu0 %392
    %394 = vrot.lane.b32.xlu0 %v210, 64
    %v395 = vpop.permute.xlu0 %394
    %396 = vrot.lane.b32.xlu0 %v211, 64
    %v397 = vpop.permute.xlu0 %396
    %398 = vrot.lane.b32.xlu0 %v212, 64
    %v399 = vpop.permute.xlu0 %398
    %400 = vrot.lane.b32.xlu0 %v213, 64
    %v401 = vpop.permute.xlu0 %400
    %402 = vrot.lane.b32.xlu0 %v214, 64
    %v403 = vpop.permute.xlu0 %402
    %404 = vrot.lane.b32.xlu0 %v215, 64
    %v405 = vpop.permute.xlu0 %404
    %406 = vrot.lane.b32.xlu0 %v216, 64
    %v407 = vpop.permute.xlu0 %406
    %408 = vrot.lane.b32.xlu0 %v217, 64
    %v409 = vpop.permute.xlu0 %408
    %410 = vrot.lane.b32.xlu0 %v218, 64
    %v411 = vpop.permute.xlu0 %410
    %412 = vrot.lane.b32.xlu0 %v219, 64
    %v413 = vpop.permute.xlu0 %412
    %414 = vrot.lane.b32.xlu0 %v220, 64
    %v415 = vpop.permute.xlu0 %414
    %416 = vrot.lane.b32.xlu0 %v221, 64
    %v417 = vpop.permute.xlu0 %416
    %418 = vrot.lane.b32.xlu0 %v222, 64
    %v419 = vpop.permute.xlu0 %418
    %420 = vrot.lane.b32.xlu0 %v223, 64
    %v421 = vpop.permute.xlu0 %420
    %422 = vrot.lane.b32.xlu0 %v224, 64
    %v423 = vpop.permute.xlu0 %422
    %v440 = vmul.f32 %v290, %v393
    %v441 = vmul.f32 %v293, %v395
    %v442 = vmul.f32 %v298, %v397
    %v443 = vmul.f32 %v301, %v399
    %v444 = vmul.f32 %v290, %v401
    %v445 = vmul.f32 %v293, %v403
    %v446 = vmul.f32 %v298, %v405
    %v447 = vmul.f32 %v301, %v407
    %v448 = vmul.f32 %v290, %v409
    %v449 = vmul.f32 %v293, %v411
    %v450 = vmul.f32 %v298, %v413
    %v451 = vmul.f32 %v301, %v415
    %v452 = vmul.f32 %v290, %v417
    %v453 = vmul.f32 %v293, %v419
    %v454 = vmul.f32 %v298, %v421
    %v455 = vmul.f32 %v301, %v423
    %v456 = vpack.c.bf16 %v441, %v440
    %v457 = vpack.c.bf16 %v443, %v442
    %v458 = vpack.c.bf16 %v445, %v444
    %v459 = vpack.c.bf16 %v447, %v446
    %v460 = vpack.c.bf16 %v449, %v448
    %v461 = vpack.c.bf16 %v451, %v450
    %v462 = vpack.c.bf16 %v453, %v452
    %v463 = vpack.c.bf16 %v455, %v454
    %v464 = vpack.c.bf16 %v293, %v290
    %v465 = vpack.c.bf16 %v301, %v298
    %474 = vrot.lane.b32.xlu0 %v384, 96
    %v475 = vpop.permute.xlu0 %474
    %476 = vrot.lane.b32.xlu0 %v385, 96
    %v477 = vpop.permute.xlu0 %476
    %478 = vrot.lane.b32.xlu0 %v386, 96
    %v479 = vpop.permute.xlu0 %478
    %480 = vrot.lane.b32.xlu0 %v387, 96
    %v481 = vpop.permute.xlu0 %480
    %482 = vrot.lane.b32.xlu0 %v388, 96
    %v483 = vpop.permute.xlu0 %482
    %484 = vrot.lane.b32.xlu0 %v389, 96
    %v485 = vpop.permute.xlu0 %484
    %486 = vrot.lane.b32.xlu0 %v390, 96
    %v487 = vpop.permute.xlu0 %486
    %488 = vrot.lane.b32.xlu0 %v391, 96
    %v489 = vpop.permute.xlu0 %488
    %v491 = vsel %vm248, %v464, 0
    %v494 = vsel %vm248, %v465, 0
    %v497 = vsel %vm248, %v475, 0
    %v500 = vsel %vm248, %v477, 0
    %v503 = vsel %vm248, %v479, 0
    %v506 = vsel %vm248, %v481, 0
    %v509 = vsel %vm248, %v483, 0
    %v512 = vsel %vm248, %v485, 0
    %v515 = vsel %vm248, %v487, 0
    %v518 = vsel %vm248, %v489, 0
    %520 = vmatprep.subr.bf16.mxu0 0
    %521 = vmatpush1.bf16.xpose.msra.mxu0 %v497
    %522 = vmatprep.subr.bf16.mxu0 0
    %523 = vmatpush1.bf16.xpose.msra.mxu0 %v500
    %524 = vmatprep.subr.bf16.mxu0 0
    %525 = vmatpush1.bf16.xpose.msra.mxu0 %v503
    %526 = vmatprep.subr.bf16.mxu0 0
    %527 = vmatpush1.bf16.xpose.msra.mxu0 %v506
    %528 = vmatprep.subr.bf16.mxu0 0
    %529 = vmatpush1.bf16.xpose.msra.mxu0 %v509
    %530 = vmatprep.subr.bf16.mxu0 0
    %531 = vmatpush1.bf16.xpose.msra.mxu0 %v512
    %532 = vmatprep.subr.bf16.mxu0 0
    %533 = vmatpush1.bf16.xpose.msra.mxu0 %v515
    %534 = vmatprep.subr.bf16.mxu0 0
    %535 = vmatpush1.bf16.xpose.msra.mxu0 %v518
    %536 = vmatprep.subr.bf16.mxu0 0
    %537 = vmatpush1.bf16.xpose.msra.mxu0 0
    %538 = vmatprep.subr.bf16.mxu0 0
    %539 = vmatpush1.bf16.xpose.msra.mxu0 0
    %540 = vmatprep.subr.bf16.mxu0 0
    %541 = vmatpush1.bf16.xpose.msra.mxu0 0
    %542 = vmatprep.subr.bf16.mxu0 0
    %543 = vmatpush1.bf16.xpose.msra.mxu0 0
    %544 = vmatprep.subr.bf16.mxu0 0
    %545 = vmatpush1.bf16.xpose.msra.mxu0 0
    %546 = vmatprep.subr.bf16.mxu0 0
    %547 = vmatpush1.bf16.xpose.msra.mxu0 0
    %548 = vmatprep.subr.bf16.mxu0 0
    %549 = vmatpush1.bf16.xpose.msra.mxu0 0
    %550 = vmatprep.subr.bf16.mxu0 0
    %551 = vmatpush1.bf16.xpose.msra.mxu0 0
    %552 = vmatprep.mubr.bf16.mxu0 0
    %553 = vmatmul.mubr.bf16.gmra.mrb[0].mxu0 %v491
    %v554 = vpop.f32.mrb[0].mxu0
    %v555 = vadd.f32 %v205, %v554
    %v556 = vpop.f32.mrb[0].mxu0
    %v557 = vpop.f32.mrb[0].mxu0
    %v558 = vadd.f32 %v206, %v557
    %v559 = vpop.f32.mrb[0].mxu0
    %560 = vmatprep.mubr.bf16.mxu0 0
    %561 = vmatmul.mubr.bf16.gmra.mrb[0].mxu0 %v494
    %v562 = vpop.f32.mrb[0].mxu0
    %v563 = vadd.f32 %v207, %v562
    %v564 = vpop.f32.mrb[0].mxu0
    %v565 = vpop.f32.mrb[0].mxu0
    %v566 = vadd.f32 %v208, %v565
    %v567 = vpop.f32.mrb[0].mxu0
    %568 = vdwg.mxu0
    %569 = vmax.xlane.f32.xlu0 %v555
    %v570 = vpop.xlane.xlu0 %569
    %571 = vmax.xlane.f32.xlu0 %v558
    %v572 = vpop.xlane.xlu0 %571
    %573 = vmax.xlane.f32.xlu0 %v563
    %v574 = vpop.xlane.xlu0 %573
    %575 = vmax.xlane.f32.xlu0 %v566
    %v576 = vpop.xlane.xlu0 %575
    %v577 = vsub.f32 %v555, %v570
    %v578 = vsub.f32 %v558, %v572
    %v579 = vsub.f32 %v563, %v574
    %v580 = vsub.f32 %v566, %v576
    %v581 = vmul.f32 %v577, 1.442695
    %v582 = vpow.pop %v581
    %v583 = vmul.f32 %v578, 1.442695
    %v584 = vpow.pop %v583
    %v585 = vmul.f32 %v579, 1.442695
    %v586 = vpow.pop %v585
    %v587 = vmul.f32 %v580, 1.442695
    %v588 = vpow.pop %v587
    %589 = vmatprep.subr.mxu0 0.0
    %590 = vmatpush1.msra.mxu0 %v209
    %591 = vmatprep.subr.mxu0 0.0
    %592 = vmatpush1.msra.mxu0 %v210
    %593 = vmatprep.subr.mxu0 0.0
    %594 = vmatpush1.msra.mxu0 %v211
    %595 = vmatprep.subr.mxu0 0.0
    %596 = vmatpush1.msra.mxu0 %v212
    %597 = vmatprep.subr.mxu0 0.0
    %598 = vmatpush1.msra.mxu0 %v213
    %599 = vmatprep.subr.mxu0 0.0
    %600 = vmatpush1.msra.mxu0 %v214
    %601 = vmatprep.subr.mxu0 0.0
    %602 = vmatpush1.msra.mxu0 %v215
    %603 = vmatprep.subr.mxu0 0.0
    %604 = vmatpush1.msra.mxu0 %v216
    %605 = vmatprep.subr.mxu0 0.0
    %606 = vmatpush1.msra.mxu0 %v217
    %607 = vmatprep.subr.mxu0 0.0
    %608 = vmatpush1.msra.mxu0 %v218
    %609 = vmatprep.subr.mxu0 0.0
    %610 = vmatpush1.msra.mxu0 %v219
    %611 = vmatprep.subr.mxu0 0.0
    %612 = vmatpush1.msra.mxu0 %v220
    %613 = vmatprep.subr.mxu0 0.0
    %614 = vmatpush1.msra.mxu0 %v221
    %615 = vmatprep.subr.mxu0 0.0
    %616 = vmatpush1.msra.mxu0 %v222
    %617 = vmatprep.subr.mxu0 0.0
    %618 = vmatpush1.msra.mxu0 %v223
    %619 = vmatprep.subr.mxu0 0.0
    %620 = vmatpush1.msra.mxu0 %v224
    %621 = vmatprep.subr.mxu0 0.0
    %622 = vmatpush1.msra.mxu0 0.0
    %623 = vmatprep.subr.mxu0 0.0
    %624 = vmatpush1.msra.mxu0 0.0
    %625 = vmatprep.subr.mxu0 0.0
    %626 = vmatpush1.msra.mxu0 0.0
    %627 = vmatprep.subr.mxu0 0.0
    %628 = vmatpush1.msra.mxu0 0.0
    %629 = vmatprep.subr.mxu0 0.0
    %630 = vmatpush1.msra.mxu0 0.0
    %631 = vmatprep.subr.mxu0 0.0
    %632 = vmatpush1.msra.mxu0 0.0
    %633 = vmatprep.subr.mxu0 0.0
    %634 = vmatpush1.msra.mxu0 0.0
    %635 = vmatprep.subr.mxu0 0.0
    %636 = vmatpush1.msra.mxu0 0.0
    %637 = vmatprep.subr.mxu0 0.0
    %638 = vmatpush1.msra.mxu0 0.0
    %639 = vmatprep.subr.mxu0 0.0
    %640 = vmatpush1.msra.mxu0 0.0
    %641 = vmatprep.subr.mxu0 0.0
    %642 = vmatpush1.msra.mxu0 0.0
    %643 = vmatprep.subr.mxu0 0.0
    %644 = vmatpush1.msra.mxu0 0.0
    %645 = vmatprep.subr.mxu0 0.0
    %646 = vmatpush1.msra.mxu0 0.0
    %647 = vmatprep.subr.mxu0 0.0
    %648 = vmatpush1.msra.mxu0 0.0
    %649 = vmatprep.subr.mxu0 0.0
    %650 = vmatpush1.msra.mxu0 0.0
    %651 = vmatprep.subr.mxu0 0.0
    %652 = vmatpush1.msra.mxu0 0.0
    %653 = vmatprep.mubr.f32.mxu0 0.0
    %654 = vmatmul.mubr.f32.gmra.mrb[0].mxu0 %v582
    %v655 = vpop.f32.mrb[0].mxu0
    %v656 = vadd.f32 0.0, %v655
    %v657 = vpop.f32.mrb[0].mxu0
    %658 = vmatprep.mubr.f32.mxu0 0.0
    %659 = vmatmul.mubr.f32.gmra.mrb[0].mxu0 %v584
    %v660 = vpop.f32.mrb[0].mxu0
    %v661 = vadd.f32 0.0, %v660
    %v662 = vpop.f32.mrb[0].mxu0
    %663 = vmatprep.mubr.f32.mxu0 0.0
    %664 = vmatmul.mubr.f32.gmra.mrb[0].mxu0 %v586
    %v665 = vpop.f32.mrb[0].mxu0
    %v666 = vadd.f32 0.0, %v665
    %v667 = vpop.f32.mrb[0].mxu0
    %668 = vmatprep.mubr.f32.mxu0 0.0
    %669 = vmatmul.mubr.f32.gmra.mrb[0].mxu0 %v588
    %v670 = vpop.f32.mrb[0].mxu0
    %v671 = vadd.f32 0.0, %v670
    %v672 = vpop.f32.mrb[0].mxu0
    %673 = vdwg.mxu0
    %v674 = vpack.c.bf16 %v584, %v582
    %v675 = vpack.c.bf16 %v588, %v586
    %684 = vrot.lane.b32.xlu0 %v456, 64
    %v685 = vpop.permute.xlu0 %684
    %686 = vrot.lane.b32.xlu0 %v457, 64
    %v687 = vpop.permute.xlu0 %686
    %688 = vrot.lane.b32.xlu0 %v458, 64
    %v689 = vpop.permute.xlu0 %688
    %690 = vrot.lane.b32.xlu0 %v459, 64
    %v691 = vpop.permute.xlu0 %690
    %692 = vrot.lane.b32.xlu0 %v460, 64
    %v693 = vpop.permute.xlu0 %692
    %694 = vrot.lane.b32.xlu0 %v461, 64
    %v695 = vpop.permute.xlu0 %694
    %696 = vrot.lane.b32.xlu0 %v462, 64
    %v697 = vpop.permute.xlu0 %696
    %698 = vrot.lane.b32.xlu0 %v463, 64
    %v699 = vpop.permute.xlu0 %698
    %708 = vmatprep.subr.bf16.mxu0 0
    %709 = vmatpush1.bf16.msra.mxu0 %v685
    %710 = vmatprep.subr.bf16.mxu0 0
    %711 = vmatpush1.bf16.msra.mxu0 %v687
    %712 = vmatprep.subr.bf16.mxu0 0
    %713 = vmatpush1.bf16.msra.mxu0 %v689
    %714 = vmatprep.subr.bf16.mxu0 0
    %715 = vmatpush1.bf16.msra.mxu0 %v691
    %716 = vmatprep.subr.bf16.mxu0 0
    %717 = vmatpush1.bf16.msra.mxu0 %v693
    %718 = vmatprep.subr.bf16.mxu0 0
    %719 = vmatpush1.bf16.msra.mxu0 %v695
    %720 = vmatprep.subr.bf16.mxu0 0
    %721 = vmatpush1.bf16.msra.mxu0 %v697
    %722 = vmatprep.subr.bf16.mxu0 0
    %723 = vmatpush1.bf16.msra.mxu0 %v699
    %724 = vmatprep.subr.bf16.mxu0 0
    %725 = vmatpush1.bf16.msra.mxu0 0
    %726 = vmatprep.subr.bf16.mxu0 0
    %727 = vmatpush1.bf16.msra.mxu0 0
    %728 = vmatprep.subr.bf16.mxu0 0
    %729 = vmatpush1.bf16.msra.mxu0 0
    %730 = vmatprep.subr.bf16.mxu0 0
    %731 = vmatpush1.bf16.msra.mxu0 0
    %732 = vmatprep.subr.bf16.mxu0 0
    %733 = vmatpush1.bf16.msra.mxu0 0
    %734 = vmatprep.subr.bf16.mxu0 0
    %735 = vmatpush1.bf16.msra.mxu0 0
    %736 = vmatprep.subr.bf16.mxu0 0
    %737 = vmatpush1.bf16.msra.mxu0 0
    %738 = vmatprep.subr.bf16.mxu0 0
    %739 = vmatpush1.bf16.msra.mxu0 0
    %740 = vmatprep.mubr.bf16.mxu0 0
    %741 = vmatmul.mubr.bf16.gmra.mrb[0].mxu0 %v674
    %v742 = vpop.f32.mrb[0].mxu0
    %v743 = vadd.f32 0.0, %v742
    %v744 = vpop.f32.mrb[0].mxu0
    %v745 = vpop.f32.mrb[0].mxu0
    %v746 = vadd.f32 0.0, %v745
    %v747 = vpop.f32.mrb[0].mxu0
    %748 = vmatprep.mubr.bf16.mxu0 0
    %749 = vmatmul.mubr.bf16.gmra.mrb[0].mxu0 %v675
    %v750 = vpop.f32.mrb[0].mxu0
    %v751 = vadd.f32 0.0, %v750
    %v752 = vpop.f32.mrb[0].mxu0
    %v753 = vpop.f32.mrb[0].mxu0
    %v754 = vadd.f32 0.0, %v753
    %v755 = vpop.f32.mrb[0].mxu0
    %756 = vdwg.mxu0
    %v757 = vrcp.pop %v656
    %v758 = vrcp.pop %v661
    %v759 = vrcp.pop %v666
    %v760 = vrcp.pop %v671
    %v761 = vmul.f32 %v743, %v757
    %v762 = vmul.f32 %v746, %v758
    %v763 = vmul.f32 %v751, %v759
    %v764 = vmul.f32 %v754, %v760
    %v765 = vpack.c.bf16 %v762, %v761
    %v766 = vpack.c.bf16 %v764, %v763
    %v767 = vld [vmem:[%s5] sm:$0xf]
    %v768 = vld [vmem:[%s5 + $0x4] sm:$0xf]
    %v769 = vld [vmem:[%s5 + $0x8] sm:$0xf]
    %v770 = vld [vmem:[%s5 + $0xc] sm:$0xf]
    %v771 = vld [vmem:[%s6] sm:$0x1]
    %v772 = vlaneseq
    %v773 = vshrl.u32 %v772, 7
    %v774 = vsub.s32 0, %v773
    %v775 = vrot.slane %v771, %v774
    %v780 = vunpack.c.l.b16 %v767
    %v781 = vunpack.c.l.b16 %v768
    %v782 = vunpack.c.l.b16 %v769
    %v783 = vunpack.c.l.b16 %v770
    %v784 = vpack.c.b16 %v781, %v780
    %v785 = vpack.c.b16 %v783, %v782
    %v789 = vsel %vm248, %v765, 0
    %v792 = vsel %vm248, %v766, 0
    %794 = vmatprep.subr.bf16.mxu0 0
    %795 = vmatpush1.bf16.msra.mxu0 %v784
    %796 = vmatprep.subr.bf16.mxu0 0
    %797 = vmatpush1.bf16.msra.mxu0 %v785
    %798 = vmatprep.subr.bf16.mxu0 0
    %799 = vmatpush1.bf16.msra.mxu0 0
    %800 = vmatprep.subr.bf16.mxu0 0
    %801 = vmatpush1.bf16.msra.mxu0 0
    %802 = vmatprep.subr.bf16.mxu0 0
    %803 = vmatpush1.bf16.msra.mxu0 0
    %804 = vmatprep.subr.bf16.mxu0 0
    %805 = vmatpush1.bf16.msra.mxu0 0
    %806 = vmatprep.subr.bf16.mxu0 0
    %807 = vmatpush1.bf16.msra.mxu0 0
    %808 = vmatprep.subr.bf16.mxu0 0
    %809 = vmatpush1.bf16.msra.mxu0 0
    %810 = vmatprep.subr.bf16.mxu0 0
    %811 = vmatpush1.bf16.msra.mxu0 0
    %812 = vmatprep.subr.bf16.mxu0 0
    %813 = vmatpush1.bf16.msra.mxu0 0
    %814 = vmatprep.subr.bf16.mxu0 0
    %815 = vmatpush1.bf16.msra.mxu0 0
    %816 = vmatprep.subr.bf16.mxu0 0
    %817 = vmatpush1.bf16.msra.mxu0 0
    %818 = vmatprep.subr.bf16.mxu0 0
    %819 = vmatpush1.bf16.msra.mxu0 0
    %820 = vmatprep.subr.bf16.mxu0 0
    %821 = vmatpush1.bf16.msra.mxu0 0
    %822 = vmatprep.subr.bf16.mxu0 0
    %823 = vmatpush1.bf16.msra.mxu0 0
    %824 = vmatprep.subr.bf16.mxu0 0
    %825 = vmatpush1.bf16.msra.mxu0 0
    %826 = vmatprep.mubr.bf16.mxu0 0
    %827 = vmatmul.mubr.bf16.gmra.mrb[0].mxu0 %v789
    %v828 = vpop.f32.mrb[0].mxu0
    %v829 = vadd.f32 %v775, %v828
    %v830 = vpop.f32.mrb[0].mxu0
    %v831 = vpop.f32.mrb[0].mxu0
    %v832 = vadd.f32 %v775, %v831
    %v833 = vpop.f32.mrb[0].mxu0
    %834 = vmatprep.mubr.bf16.mxu0 0
    %835 = vmatmul.mubr.bf16.gmra.mrb[0].mxu0 %v792
    %v836 = vpop.f32.mrb[0].mxu0
    %v837 = vadd.f32 %v775, %v836
    %v838 = vpop.f32.mrb[0].mxu0
    %v839 = vpop.f32.mrb[0].mxu0
    %v840 = vadd.f32 %v775, %v839
    %v841 = vpop.f32.mrb[0].mxu0
    %842 = vdwg.mxu0
    %v843 = vadd.f32 %v201, %v829
    %v844 = vadd.f32 %v202, %v832
    %v845 = vadd.f32 %v203, %v837
    %v846 = vadd.f32 %v204, %v840
    %v847 = vld [vmem:[%s7] sm:$0x1]
    %v848 = vld [vmem:[%s8] sm:$0x1]
    %v849 = vsel %vm248, %v843, 0.0
    %850 = vadd.xlane.f32.xlu0 %v849
    %v851 = vpop.xlane.xlu0 %850
    %v852 = vsel %vm248, %v844, 0.0
    %853 = vadd.xlane.f32.xlu0 %v852
    %v854 = vpop.xlane.xlu0 %853
    %v855 = vsel %vm248, %v845, 0.0
    %856 = vadd.xlane.f32.xlu0 %v855
    %v857 = vpop.xlane.xlu0 %856
    %v858 = vsel %vm248, %v846, 0.0
    %859 = vadd.xlane.f32.xlu0 %v858
    %v860 = vpop.xlane.xlu0 %859
    %v861 = vrcp.pop 32.0
    %v862 = vmul.f32 %v851, %v861
    %v863 = vmul.f32 %v854, %v861
    %v864 = vmul.f32 %v857, %v861
    %v865 = vmul.f32 %v860, %v861
    %v866 = vsub.f32 %v843, %v862
    %v867 = vsub.f32 %v844, %v863
    %v868 = vsub.f32 %v845, %v864
    %v869 = vsub.f32 %v846, %v865
    %v870 = vmul.f32 %v866, %v866
    %v871 = vmul.f32 %v867, %v867
    %v872 = vmul.f32 %v868, %v868
    %v873 = vmul.f32 %v869, %v869
    %v874 = vsel %vm248, %v870, 0.0
    %875 = vadd.xlane.f32.xlu0 %v874
    %v876 = vpop.xlane.xlu0 %875
    %v877 = vsel %vm248, %v871, 0.0
    %878 = vadd.xlane.f32.xlu0 %v877
    %v879 = vpop.xlane.xlu0 %878
    %v880 = vsel %vm248, %v872, 0.0
    %881 = vadd.xlane.f32.xlu0 %v880
    %v882 = vpop.xlane.xlu0 %881
    %v883 = vsel %vm248, %v873, 0.0
    %884 = vadd.xlane.f32.xlu0 %v883
    %v885 = vpop.xlane.xlu0 %884
    %v886 = vmul.f32 %v876, %v861
    %v887 = vmul.f32 %v879, %v861
    %v888 = vmul.f32 %v882, %v861
    %v889 = vmul.f32 %v885, %v861
    %v890 = vadd.f32 %v886, 1e-12
    %v891 = vadd.f32 %v887, 1e-12
    %v892 = vadd.f32 %v888, 1e-12
    %v893 = vadd.f32 %v889, 1e-12
    %v894 = vrsqrt.pop %v890
    %v895 = vrsqrt.pop %v891
    %v896 = vrsqrt.pop %v892
    %v897 = vrsqrt.pop %v893
    %v898 = vmul.f32 %v866, %v894
    %v899 = vmul.f32 %v867, %v895
    %v900 = vmul.f32 %v868, %v896
    %v901 = vmul.f32 %v869, %v897
    %v902 = vlaneseq
    %v903 = vshrl.u32 %v902, 7
    %v904 = vsub.s32 0, %v903
    %v905 = vrot.slane %v847, %v904
    %v906 = vmul.f32 %v898, %v905
    %v907 = vmul.f32 %v899, %v905
    %v908 = vmul.f32 %v900, %v905
    %v909 = vmul.f32 %v901, %v905
    %v910 = vlaneseq
    %v911 = vshrl.u32 %v910, 7
    %v912 = vsub.s32 0, %v911
    %v913 = vrot.slane %v848, %v912
    %v914 = vadd.f32 %v906, %v913
    %v915 = vadd.f32 %v907, %v913
    %v916 = vadd.f32 %v908, %v913
    %v917 = vadd.f32 %v909, %v913
    %v918 = vpack.c.bf16 %v915, %v914
    %v919 = vpack.c.bf16 %v917, %v916
    %v920 = vld [vmem:[%s9] sm:$0xf]
    %v921 = vld [vmem:[%s9 + $0x4] sm:$0xf]
    %v922 = vld [vmem:[%s9 + $0x8] sm:$0xf]
    %v923 = vld [vmem:[%s9 + $0xc] sm:$0xf]
    %v924 = vld [vmem:[#allocation8] sm:$0x1]
    %v925 = vlaneseq
    %v926 = vshrl.u32 %v925, 7
    %v927 = vsub.s32 0, %v926
    %v928 = vrot.slane %v924, %v927
    %v933 = vunpack.c.l.b16 %v920
    %v934 = vunpack.c.l.b16 %v921
    %v935 = vunpack.c.l.b16 %v922
    %v936 = vunpack.c.l.b16 %v923
    %v937 = vpack.c.b16 %v934, %v933
    %v938 = vpack.c.b16 %v936, %v935
    %v942 = vsel %vm248, %v918, 0
    %v945 = vsel %vm248, %v919, 0
    %947 = vmatprep.subr.bf16.mxu0 0
    %948 = vmatpush1.bf16.msra.mxu0 %v937
    %949 = vmatprep.subr.bf16.mxu0 0
    %950 = vmatpush1.bf16.msra.mxu0 %v938
    %951 = vmatprep.subr.bf16.mxu0 0
    %952 = vmatpush1.bf16.msra.mxu0 0
    %953 = vmatprep.subr.bf16.mxu0 0
    %954 = vmatpush1.bf16.msra.mxu0 0
    %955 = vmatprep.subr.bf16.mxu0 0
    %956 = vmatpush1.bf16.msra.mxu0 0
    %957 = vmatprep.subr.bf16.mxu0 0
    %958 = vmatpush1.bf16.msra.mxu0 0
    %959 = vmatprep.subr.bf16.mxu0 0
    %960 = vmatpush1.bf16.msra.mxu0 0
    %961 = vmatprep.subr.bf16.mxu0 0
    %962 = vmatpush1.bf16.msra.mxu0 0
    %963 = vmatprep.subr.bf16.mxu0 0
    %964 = vmatpush1.bf16.msra.mxu0 0
    %965 = vmatprep.subr.bf16.mxu0 0
    %966 = vmatpush1.bf16.msra.mxu0 0
    %967 = vmatprep.subr.bf16.mxu0 0
    %968 = vmatpush1.bf16.msra.mxu0 0
    %969 = vmatprep.subr.bf16.mxu0 0
    %970 = vmatpush1.bf16.msra.mxu0 0
    %971 = vmatprep.subr.bf16.mxu0 0
    %972 = vmatpush1.bf16.msra.mxu0 0
    %973 = vmatprep.subr.bf16.mxu0 0
    %974 = vmatpush1.bf16.msra.mxu0 0
    %975 = vmatprep.subr.bf16.mxu0 0
    %976 = vmatpush1.bf16.msra.mxu0 0
    %977 = vmatprep.subr.bf16.mxu0 0
    %978 = vmatpush1.bf16.msra.mxu0 0
    %979 = vmatprep.mubr.bf16.mxu0 0
    %980 = vmatmul.mubr.bf16.gmra.mrb[0].mxu0 %v942
    %v981 = vpop.f32.mrb[0].mxu0
    %v982 = vadd.f32 %v928, %v981
    %v983 = vpop.f32.mrb[0].mxu0
    %v984 = vpop.f32.mrb[0].mxu0
    %v985 = vadd.f32 %v928, %v984
    %v986 = vpop.f32.mrb[0].mxu0
    %987 = vmatprep.mubr.bf16.mxu0 0
    %988 = vmatmul.mubr.bf16.gmra.mrb[0].mxu0 %v945
    %v989 = vpop.f32.mrb[0].mxu0
    %v990 = vadd.f32 %v928, %v989
    %v991 = vpop.f32.mrb[0].mxu0
    %v992 = vpop.f32.mrb[0].mxu0
    %v993 = vadd.f32 %v928, %v992
    %v994 = vpop.f32.mrb[0].mxu0
    %995 = vdwg.mxu0
    %v996 = vmul.f32 %v982, %v982
    %v997 = vmul.f32 %v985, %v985
    %v998 = vmul.f32 %v990, %v990
    %v999 = vmul.f32 %v993, %v993
    %v1000 = vmul.f32 %v982, %v996
    %v1001 = vmul.f32 %v985, %v997
    %v1002 = vmul.f32 %v990, %v998
    %v1003 = vmul.f32 %v993, %v999
    %v1004 = vmul.f32 %v1000, 0.044715
    %v1005 = vmul.f32 %v1001, 0.044715
    %v1006 = vmul.f32 %v1002, 0.044715
    %v1007 = vmul.f32 %v1003, 0.044715
    %v1008 = vadd.f32 %v982, %v1004
    %v1009 = vadd.f32 %v985, %v1005
    %v1010 = vadd.f32 %v990, %v1006
    %v1011 = vadd.f32 %v993, %v1007
    %v1012 = vmul.f32 %v1008, 0.7978846
    %v1013 = vmul.f32 %v1009, 0.7978846
    %v1014 = vmul.f32 %v1010, 0.7978846
    %v1015 = vmul.f32 %v1011, 0.7978846
    %v1016 = vtanh.pop %v1012
    %v1017 = vtanh.pop %v1013
    %v1018 = vtanh.pop %v1014
    %v1019 = vtanh.pop %v1015
    %v1020 = vadd.f32 %v1016, 1.0
    %v1021 = vadd.f32 %v1017, 1.0
    %v1022 = vadd.f32 %v1018, 1.0
    %v1023 = vadd.f32 %v1019, 1.0
    %v1024 = vmul.f32 %v1020, 0.5
    %v1025 = vmul.f32 %v1021, 0.5
    %v1026 = vmul.f32 %v1022, 0.5
    %v1027 = vmul.f32 %v1023, 0.5
    %v1028 = vmul.f32 %v982, %v1024
    %v1029 = vmul.f32 %v985, %v1025
    %v1030 = vmul.f32 %v990, %v1026
    %v1031 = vmul.f32 %v993, %v1027
    %v1032 = vpack.c.bf16 %v1029, %v1028
    %v1033 = vpack.c.bf16 %v1031, %v1030
    %v1034 = vld [vmem:[%s11] sm:$0xf]
    %v1035 = vld [vmem:[%s11 + $0x4] sm:$0xf]
    %v1036 = vld [vmem:[%s11 + $0x8] sm:$0xf]
    %v1037 = vld [vmem:[%s11 + $0xc] sm:$0xf]
    %v1038 = vld [vmem:[%s11 + $0x10] sm:$0xf]
    %v1039 = vld [vmem:[%s11 + $0x14] sm:$0xf]
    %v1040 = vld [vmem:[%s11 + $0x18] sm:$0xf]
    %v1041 = vld [vmem:[%s11 + $0x1c] sm:$0xf]
    %v1042 = vld [vmem:[%s11 + $0x20] sm:$0xf]
    %v1043 = vld [vmem:[%s11 + $0x24] sm:$0xf]
    %v1044 = vld [vmem:[%s11 + $0x28] sm:$0xf]
    %v1045 = vld [vmem:[%s11 + $0x2c] sm:$0xf]
    %v1046 = vld [vmem:[%s11 + $0x30] sm:$0xf]
    %v1047 = vld [vmem:[%s11 + $0x34] sm:$0xf]
    %v1048 = vld [vmem:[%s11 + $0x38] sm:$0xf]
    %v1049 = vld [vmem:[%s11 + $0x3c] sm:$0xf]
    %v1050 = vld [vmem:[#allocation9] sm:$0x1]
    %v1051 = vlaneseq
    %v1052 = vshrl.u32 %v1051, 7
    %v1053 = vsub.s32 0, %v1052
    %v1054 = vrot.slane %v1050, %v1053
    %v1071 = vunpack.c.l.b16 %v1034
    %v1072 = vunpack.c.l.b16 %v1035
    %v1073 = vunpack.c.l.b16 %v1036
    %v1074 = vunpack.c.l.b16 %v1037
    %v1075 = vunpack.c.l.b16 %v1038
    %v1076 = vunpack.c.l.b16 %v1039
    %v1077 = vunpack.c.l.b16 %v1040
    %v1078 = vunpack.c.l.b16 %v1041
    %v1079 = vunpack.c.l.b16 %v1042
    %v1080 = vunpack.c.l.b16 %v1043
    %v1081 = vunpack.c.l.b16 %v1044
    %v1082 = vunpack.c.l.b16 %v1045
    %v1083 = vunpack.c.l.b16 %v1046
    %v1084 = vunpack.c.l.b16 %v1047
    %v1085 = vunpack.c.l.b16 %v1048
    %v1086 = vunpack.c.l.b16 %v1049
    %v1087 = vpack.c.b16 %v1072, %v1071
    %v1088 = vpack.c.b16 %v1074, %v1073
    %v1089 = vpack.c.b16 %v1076, %v1075
    %v1090 = vpack.c.b16 %v1078, %v1077
    %v1091 = vpack.c.b16 %v1080, %v1079
    %v1092 = vpack.c.b16 %v1082, %v1081
    %v1093 = vpack.c.b16 %v1084, %v1083
    %v1094 = vpack.c.b16 %v1086, %v1085
    %1103 = vmatprep.subr.bf16.mxu0 0
    %1104 = vmatpush1.bf16.msra.mxu0 %v1087
    %1105 = vmatprep.subr.bf16.mxu0 0
    %1106 = vmatpush1.bf16.msra.mxu0 %v1088
    %1107 = vmatprep.subr.bf16.mxu0 0
    %1108 = vmatpush1.bf16.msra.mxu0 %v1089
    %1109 = vmatprep.subr.bf16.mxu0 0
    %1110 = vmatpush1.bf16.msra.mxu0 %v1090
    %1111 = vmatprep.subr.bf16.mxu0 0
    %1112 = vmatpush1.bf16.msra.mxu0 %v1091
    %1113 = vmatprep.subr.bf16.mxu0 0
    %1114 = vmatpush1.bf16.msra.mxu0 %v1092
    %1115 = vmatprep.subr.bf16.mxu0 0
    %1116 = vmatpush1.bf16.msra.mxu0 %v1093
    %1117 = vmatprep.subr.bf16.mxu0 0
    %1118 = vmatpush1.bf16.msra.mxu0 %v1094
    %1119 = vmatprep.subr.bf16.mxu0 0
    %1120 = vmatpush1.bf16.msra.mxu0 0
    %1121 = vmatprep.subr.bf16.mxu0 0
    %1122 = vmatpush1.bf16.msra.mxu0 0
    %1123 = vmatprep.subr.bf16.mxu0 0
    %1124 = vmatpush1.bf16.msra.mxu0 0
    %1125 = vmatprep.subr.bf16.mxu0 0
    %1126 = vmatpush1.bf16.msra.mxu0 0
    %1127 = vmatprep.subr.bf16.mxu0 0
    %1128 = vmatpush1.bf16.msra.mxu0 0
    %1129 = vmatprep.subr.bf16.mxu0 0
    %1130 = vmatpush1.bf16.msra.mxu0 0
    %1131 = vmatprep.subr.bf16.mxu0 0
    %1132 = vmatpush1.bf16.msra.mxu0 0
    %1133 = vmatprep.subr.bf16.mxu0 0
    %1134 = vmatpush1.bf16.msra.mxu0 0
    %1135 = vmatprep.mubr.bf16.mxu0 0
    %1136 = vmatmul.mubr.bf16.gmra.mrb[0].mxu0 %v1032
    %v1137 = vpop.f32.mrb[0].mxu0
    %v1138 = vadd.f32 %v1054, %v1137
    %v1139 = vpop.f32.mrb[0].mxu0
    %v1140 = vpop.f32.mrb[0].mxu0
    %v1141 = vadd.f32 %v1054, %v1140
    %v1142 = vpop.f32.mrb[0].mxu0
    %1143 = vmatprep.mubr.bf16.mxu0 0
    %1144 = vmatmul.mubr.bf16.gmra.mrb[0].mxu0 %v1033
    %v1145 = vpop.f32.mrb[0].mxu0
    %v1146 = vadd.f32 %v1054, %v1145
    %v1147 = vpop.f32.mrb[0].mxu0
    %v1148 = vpop.f32.mrb[0].mxu0
    %v1149 = vadd.f32 %v1054, %v1148
    %v1150 = vpop.f32.mrb[0].mxu0
    %1151 = vdwg.mxu0
    %v1152 = vadd.f32 %v914, %v1138
    %v1153 = vadd.f32 %v915, %v1141
    %v1154 = vadd.f32 %v916, %v1146
    %v1155 = vadd.f32 %v917, %v1149
    %v1156 = vld [vmem:[#allocation11] sm:$0x1]
    %v1157 = vld [vmem:[#allocation12] sm:$0x1]
    %v1158 = vsel %vm248, %v1152, 0.0
    %1159 = vadd.xlane.f32.xlu0 %v1158
    %v1160 = vpop.xlane.xlu0 %1159
    %v1161 = vsel %vm248, %v1153, 0.0
    %1162 = vadd.xlane.f32.xlu0 %v1161
    %v1163 = vpop.xlane.xlu0 %1162
    %v1164 = vsel %vm248, %v1154, 0.0
    %1165 = vadd.xlane.f32.xlu0 %v1164
    %v1166 = vpop.xlane.xlu0 %1165
    %v1167 = vsel %vm248, %v1155, 0.0
    %1168 = vadd.xlane.f32.xlu0 %v1167
    %v1169 = vpop.xlane.xlu0 %1168
    %v1170 = vmul.f32 %v1160, %v861
    %v1171 = vmul.f32 %v1163, %v861
    %v1172 = vmul.f32 %v1166, %v861
    %v1173 = vmul.f32 %v1169, %v861
    %v1174 = vsub.f32 %v1152, %v1170
    %v1175 = vsub.f32 %v1153, %v1171
    %v1176 = vsub.f32 %v1154, %v1172
    %v1177 = vsub.f32 %v1155, %v1173
    %v1178 = vmul.f32 %v1174, %v1174
    %v1179 = vmul.f32 %v1175, %v1175
    %v1180 = vmul.f32 %v1176, %v1176
    %v1181 = vmul.f32 %v1177, %v1177
    %v1182 = vsel %vm248, %v1178, 0.0
    %1183 = vadd.xlane.f32.xlu0 %v1182
    %v1184 = vpop.xlane.xlu0 %1183
    %v1185 = vsel %vm248, %v1179, 0.0
    %1186 = vadd.xlane.f32.xlu0 %v1185
    %v1187 = vpop.xlane.xlu0 %1186
    %v1188 = vsel %vm248, %v1180, 0.0
    %1189 = vadd.xlane.f32.xlu0 %v1188
    %v1190 = vpop.xlane.xlu0 %1189
    %v1191 = vsel %vm248, %v1181, 0.0
    %1192 = vadd.xlane.f32.xlu0 %v1191
    %v1193 = vpop.xlane.xlu0 %1192
    %v1194 = vmul.f32 %v1184, %v861
    %v1195 = vmul.f32 %v1187, %v861
    %v1196 = vmul.f32 %v1190, %v861
    %v1197 = vmul.f32 %v1193, %v861
    %v1198 = vadd.f32 %v1194, 1e-12
    %v1199 = vadd.f32 %v1195, 1e-12
    %v1200 = vadd.f32 %v1196, 1e-12
    %v1201 = vadd.f32 %v1197, 1e-12
    %v1202 = vrsqrt.pop %v1198
    %v1203 = vrsqrt.pop %v1199
    %v1204 = vrsqrt.pop %v1200
    %v1205 = vrsqrt.pop %v1201
    %v1206 = vmul.f32 %v1174, %v1202
    %v1207 = vmul.f32 %v1175, %v1203
    %v1208 = vmul.f32 %v1176, %v1204
    %v1209 = vmul.f32 %v1177, %v1205
    %v1210 = vlaneseq
    %v1211 = vshrl.u32 %v1210, 7
    %v1212 = vsub.s32 0, %v1211
    %v1213 = vrot.slane %v1156, %v1212
    %v1214 = vmul.f32 %v1206, %v1213
    %v1215 = vmul.f32 %v1207, %v1213
    %v1216 = vmul.f32 %v1208, %v1213
    %v1217 = vmul.f32 %v1209, %v1213
    %v1218 = vlaneseq
    %v1219 = vshrl.u32 %v1218, 7
    %v1220 = vsub.s32 0, %v1219
    %v1221 = vrot.slane %v1157, %v1220
    %v1222 = vadd.f32 %v1214, %v1221
    %v1223 = vadd.f32 %v1215, %v1221
    %v1224 = vadd.f32 %v1216, %v1221
    %v1225 = vadd.f32 %v1217, %v1221
    %v1226 = vpack.c.bf16 %v1223, %v1222
    %v1227 = vpack.c.bf16 %v1225, %v1224
    %s1228 = scalar_lea.vmem %s3, 16
    %v1229 = vld [vmem:[%s1228] sm:$0xf]
    %v1230 = vld [vmem:[%s1228 + $0x4] sm:$0xf]
    %v1231 = vld [vmem:[%s1228 + $0x8] sm:$0xf]
    %v1232 = vld [vmem:[%s1228 + $0xc] sm:$0xf]
    %v1233 = vld [vmem:[%s4 + $0x1] sm:$0x1]
    %v1234 = vlaneseq
    %v1235 = vshrl.u32 %v1234, 7
    %v1236 = vsub.s32 0, %v1235
    %v1237 = vrot.slane %v1233, %v1236
    %v1242 = vunpack.c.l.b16 %v1229
    %v1243 = vunpack.c.l.b16 %v1230
    %v1244 = vunpack.c.l.b16 %v1231
    %v1245 = vunpack.c.l.b16 %v1232
    %v1246 = vpack.c.b16 %v1243, %v1242
    %v1247 = vpack.c.b16 %v1245, %v1244
    %v1251 = vsel %vm248, %v1226, 0
    %v1254 = vsel %vm248, %v1227, 0
    %1256 = vmatprep.subr.bf16.mxu0 0
    %1257 = vmatpush1.bf16.msra.mxu0 %v1246
    %1258 = vmatprep.subr.bf16.mxu0 0
    %1259 = vmatpush1.bf16.msra.mxu0 %v1247
    %1260 = vmatprep.subr.bf16.mxu0 0
    %1261 = vmatpush1.bf16.msra.mxu0 0
    %1262 = vmatprep.subr.bf16.mxu0 0
    %1263 = vmatpush1.bf16.msra.mxu0 0
    %1264 = vmatprep.subr.bf16.mxu0 0
    %1265 = vmatpush1.bf16.msra.mxu0 0
    %1266 = vmatprep.subr.bf16.mxu0 0
    %1267 = vmatpush1.bf16.msra.mxu0 0
    %1268 = vmatprep.subr.bf16.mxu0 0
    %1269 = vmatpush1.bf16.msra.mxu0 0
    %1270 = vmatprep.subr.bf16.mxu0 0
    %1271 = vmatpush1.bf16.msra.mxu0 0
    %1272 = vmatprep.subr.bf16.mxu0 0
    %1273 = vmatpush1.bf16.msra.mxu0 0
    %1274 = vmatprep.subr.bf16.mxu0 0
    %1275 = vmatpush1.bf16.msra.mxu0 0
    %1276 = vmatprep.subr.bf16.mxu0 0
    %1277 = vmatpush1.bf16.msra.mxu0 0
    %1278 = vmatprep.subr.bf16.mxu0 0
    %1279 = vmatpush1.bf16.msra.mxu0 0
    %1280 = vmatprep.subr.bf16.mxu0 0
    %1281 = vmatpush1.bf16.msra.mxu0 0
    %1282 = vmatprep.subr.bf16.mxu0 0
    %1283 = vmatpush1.bf16.msra.mxu0 0
    %1284 = vmatprep.subr.bf16.mxu0 0
    %1285 = vmatpush1.bf16.msra.mxu0 0
    %1286 = vmatprep.subr.bf16.mxu0 0
    %1287 = vmatpush1.bf16.msra.mxu0 0
    %1288 = vmatprep.mubr.bf16.mxu0 0
    %1289 = vmatmul.mubr.bf16.gmra.mrb[0].mxu0 %v1251
    %v1290 = vpop.f32.mrb[0].mxu0
    %v1291 = vadd.f32 %v1237, %v1290
    %v1292 = vpop.f32.mrb[0].mxu0
    %v1293 = vpop.f32.mrb[0].mxu0
    %v1294 = vadd.f32 %v1237, %v1293
    %v1295 = vpop.f32.mrb[0].mxu0
    %1296 = vmatprep.mubr.bf16.mxu0 0
    %1297 = vmatmul.mubr.bf16.gmra.mrb[0].mxu0 %v1254
    %v1298 = vpop.f32.mrb[0].mxu0
    %v1299 = vadd.f32 %v1237, %v1298
    %v1300 = vpop.f32.mrb[0].mxu0
    %v1301 = vpop.f32.mrb[0].mxu0
    %v1302 = vadd.f32 %v1237, %v1301
    %v1303 = vpop.f32.mrb[0].mxu0
    %1304 = vdwg.mxu0
    %v1305 = vmul.f32 %v1291, %v321
    %v1306 = vmul.f32 %v1294, %v323
    %v1307 = vmul.f32 %v1299, %v325
    %v1308 = vmul.f32 %v1302, %v327
    %v1309 = vmul.f32 %v1291, %v329
    %v1310 = vmul.f32 %v1294, %v331
    %v1311 = vmul.f32 %v1299, %v333
    %v1312 = vmul.f32 %v1302, %v335
    %v1313 = vmul.f32 %v1291, %v337
    %v1314 = vmul.f32 %v1294, %v339
    %v1315 = vmul.f32 %v1299, %v341
    %v1316 = vmul.f32 %v1302, %v343
    %v1317 = vmul.f32 %v1291, %v345
    %v1318 = vmul.f32 %v1294, %v347
    %v1319 = vmul.f32 %v1299, %v349
    %v1320 = vmul.f32 %v1302, %v351
    %v1321 = vpack.c.bf16 %v1306, %v1305
    %v1322 = vpack.c.bf16 %v1308, %v1307
    %v1323 = vpack.c.bf16 %v1310, %v1309
    %v1324 = vpack.c.bf16 %v1312, %v1311
    %v1325 = vpack.c.bf16 %v1314, %v1313
    %v1326 = vpack.c.bf16 %v1316, %v1315
    %v1327 = vpack.c.bf16 %v1318, %v1317
    %v1328 = vpack.c.bf16 %v1320, %v1319
    %v1329 = vmul.f32 %v1291, %v393
    %v1330 = vmul.f32 %v1294, %v395
    %v1331 = vmul.f32 %v1299, %v397
    %v1332 = vmul.f32 %v1302, %v399
    %v1333 = vmul.f32 %v1291, %v401
    %v1334 = vmul.f32 %v1294, %v403
    %v1335 = vmul.f32 %v1299, %v405
    %v1336 = vmul.f32 %v1302, %v407
    %v1337 = vmul.f32 %v1291, %v409
    %v1338 = vmul.f32 %v1294, %v411
    %v1339 = vmul.f32 %v1299, %v413
    %v1340 = vmul.f32 %v1302, %v415
    %v1341 = vmul.f32 %v1291, %v417
    %v1342 = vmul.f32 %v1294, %v419
    %v1343 = vmul.f32 %v1299, %v421
    %v1344 = vmul.f32 %v1302, %v423
    %v1345 = vpack.c.bf16 %v1330, %v1329
    %v1346 = vpack.c.bf16 %v1332, %v1331
    %v1347 = vpack.c.bf16 %v1334, %v1333
    %v1348 = vpack.c.bf16 %v1336, %v1335
    %v1349 = vpack.c.bf16 %v1338, %v1337
    %v1350 = vpack.c.bf16 %v1340, %v1339
    %v1351 = vpack.c.bf16 %v1342, %v1341
    %v1352 = vpack.c.bf16 %v1344, %v1343
    %v1353 = vpack.c.bf16 %v1294, %v1291
    %v1354 = vpack.c.bf16 %v1302, %v1299
    %1363 = vrot.lane.b32.xlu0 %v1321, 96
    %v1364 = vpop.permute.xlu0 %1363
    %1365 = vrot.lane.b32.xlu0 %v1322, 96
    %v1366 = vpop.permute.xlu0 %1365
    %1367 = vrot.lane.b32.xlu0 %v1323, 96
    %v1368 = vpop.permute.xlu0 %1367
    %1369 = vrot.lane.b32.xlu0 %v1324, 96
    %v1370 = vpop.permute.xlu0 %1369
    %1371 = vrot.lane.b32.xlu0 %v1325, 96
    %v1372 = vpop.permute.xlu0 %1371
    %1373 = vrot.lane.b32.xlu0 %v1326, 96
    %v1374 = vpop.permute.xlu0 %1373
    %1375 = vrot.lane.b32.xlu0 %v1327, 96
    %v1376 = vpop.permute.xlu0 %1375
    %1377 = vrot.lane.b32.xlu0 %v1328, 96
    %v1378 = vpop.permute.xlu0 %1377
    %v1380 = vsel %vm248, %v1353, 0
    %v1383 = vsel %vm248, %v1354, 0
    %v1386 = vsel %vm248, %v1364, 0
    %v1389 = vsel %vm248, %v1366, 0
    %v1392 = vsel %vm248, %v1368, 0
    %v1395 = vsel %vm248, %v1370, 0
    %v1398 = vsel %vm248, %v1372, 0
    %v1401 = vsel %vm248, %v1374, 0
    %v1404 = vsel %vm248, %v1376, 0
    %v1407 = vsel %vm248, %v1378, 0
    %1409 = vmatprep.subr.bf16.mxu0 0
    %1410 = vmatpush1.bf16.xpose.msra.mxu0 %v1386
    %1411 = vmatprep.subr.bf16.mxu0 0
    %1412 = vmatpush1.bf16.xpose.msra.mxu0 %v1389
    %1413 = vmatprep.subr.bf16.mxu0 0
    %1414 = vmatpush1.bf16.xpose.msra.mxu0 %v1392
    %1415 = vmatprep.subr.bf16.mxu0 0
    %1416 = vmatpush1.bf16.xpose.msra.mxu0 %v1395
    %1417 = vmatprep.subr.bf16.mxu0 0
    %1418 = vmatpush1.bf16.xpose.msra.mxu0 %v1398
    %1419 = vmatprep.subr.bf16.mxu0 0
    %1420 = vmatpush1.bf16.xpose.msra.mxu0 %v1401
    %1421 = vmatprep.subr.bf16.mxu0 0
    %1422 = vmatpush1.bf16.xpose.msra.mxu0 %v1404
    %1423 = vmatprep.subr.bf16.mxu0 0
    %1424 = vmatpush1.bf16.xpose.msra.mxu0 %v1407
    %1425 = vmatprep.subr.bf16.mxu0 0
    %1426 = vmatpush1.bf16.xpose.msra.mxu0 0
    %1427 = vmatprep.subr.bf16.mxu0 0
    %1428 = vmatpush1.bf16.xpose.msra.mxu0 0
    %1429 = vmatprep.subr.bf16.mxu0 0
    %1430 = vmatpush1.bf16.xpose.msra.mxu0 0
    %1431 = vmatprep.subr.bf16.mxu0 0
    %1432 = vmatpush1.bf16.xpose.msra.mxu0 0
    %1433 = vmatprep.subr.bf16.mxu0 0
    %1434 = vmatpush1.bf16.xpose.msra.mxu0 0
    %1435 = vmatprep.subr.bf16.mxu0 0
    %1436 = vmatpush1.bf16.xpose.msra.mxu0 0
    %1437 = vmatprep.subr.bf16.mxu0 0
    %1438 = vmatpush1.bf16.xpose.msra.mxu0 0
    %1439 = vmatprep.subr.bf16.mxu0 0
    %1440 = vmatpush1.bf16.xpose.msra.mxu0 0
    %1441 = vmatprep.mubr.bf16.mxu0 0
    %1442 = vmatmul.mubr.bf16.gmra.mrb[0].mxu0 %v1380
    %v1443 = vpop.f32.mrb[0].mxu0
    %v1444 = vadd.f32 %v205, %v1443
    %v1445 = vpop.f32.mrb[0].mxu0
    %v1446 = vpop.f32.mrb[0].mxu0
    %v1447 = vadd.f32 %v206, %v1446
    %v1448 = vpop.f32.mrb[0].mxu0
    %1449 = vmatprep.mubr.bf16.mxu0 0
    %1450 = vmatmul.mubr.bf16.gmra.mrb[0].mxu0 %v1383
    %v1451 = vpop.f32.mrb[0].mxu0
    %v1452 = vadd.f32 %v207, %v1451
    %v1453 = vpop.f32.mrb[0].mxu0
    %v1454 = vpop.f32.mrb[0].mxu0
    %v1455 = vadd.f32 %v208, %v1454
    %v1456 = vpop.f32.mrb[0].mxu0
    %1457 = vdwg.mxu0
    %1458 = vmax.xlane.f32.xlu0 %v1444
    %v1459 = vpop.xlane.xlu0 %1458
    %1460 = vmax.xlane.f32.xlu0 %v1447
    %v1461 = vpop.xlane.xlu0 %1460
    %1462 = vmax.xlane.f32.xlu0 %v1452
    %v1463 = vpop.xlane.xlu0 %1462
    %1464 = vmax.xlane.f32.xlu0 %v1455
    %v1465 = vpop.xlane.xlu0 %1464
    %v1466 = vsub.f32 %v1444, %v1459
    %v1467 = vsub.f32 %v1447, %v1461
    %v1468 = vsub.f32 %v1452, %v1463
    %v1469 = vsub.f32 %v1455, %v1465
    %v1470 = vmul.f32 %v1466, 1.442695
    %v1471 = vpow.pop %v1470
    %v1472 = vmul.f32 %v1467, 1.442695
    %v1473 = vpow.pop %v1472
    %v1474 = vmul.f32 %v1468, 1.442695
    %v1475 = vpow.pop %v1474
    %v1476 = vmul.f32 %v1469, 1.442695
    %v1477 = vpow.pop %v1476
    %1478 = vmatprep.subr.mxu0 0.0
    %1479 = vmatpush1.msra.mxu0 %v209
    %1480 = vmatprep.subr.mxu0 0.0
    %1481 = vmatpush1.msra.mxu0 %v210
    %1482 = vmatprep.subr.mxu0 0.0
    %1483 = vmatpush1.msra.mxu0 %v211
    %1484 = vmatprep.subr.mxu0 0.0
    %1485 = vmatpush1.msra.mxu0 %v212
    %1486 = vmatprep.subr.mxu0 0.0
    %1487 = vmatpush1.msra.mxu0 %v213
    %1488 = vmatprep.subr.mxu0 0.0
    %1489 = vmatpush1.msra.mxu0 %v214
    %1490 = vmatprep.subr.mxu0 0.0
    %1491 = vmatpush1.msra.mxu0 %v215
    %1492 = vmatprep.subr.mxu0 0.0
    %1493 = vmatpush1.msra.mxu0 %v216
    %1494 = vmatprep.subr.mxu0 0.0
    %1495 = vmatpush1.msra.mxu0 %v217
    %1496 = vmatprep.subr.mxu0 0.0
    %1497 = vmatpush1.msra.mxu0 %v218
    %1498 = vmatprep.subr.mxu0 0.0
    %1499 = vmatpush1.msra.mxu0 %v219
    %1500 = vmatprep.subr.mxu0 0.0
    %1501 = vmatpush1.msra.mxu0 %v220
    %1502 = vmatprep.subr.mxu0 0.0
    %1503 = vmatpush1.msra.mxu0 %v221
    %1504 = vmatprep.subr.mxu0 0.0
    %1505 = vmatpush1.msra.mxu0 %v222
    %1506 = vmatprep.subr.mxu0 0.0
    %1507 = vmatpush1.msra.mxu0 %v223
    %1508 = vmatprep.subr.mxu0 0.0
    %1509 = vmatpush1.msra.mxu0 %v224
    %1510 = vmatprep.subr.mxu0 0.0
    %1511 = vmatpush1.msra.mxu0 0.0
    %1512 = vmatprep.subr.mxu0 0.0
    %1513 = vmatpush1.msra.mxu0 0.0
    %1514 = vmatprep.subr.mxu0 0.0
    %1515 = vmatpush1.msra.mxu0 0.0
    %1516 = vmatprep.subr.mxu0 0.0
    %1517 = vmatpush1.msra.mxu0 0.0
    %1518 = vmatprep.subr.mxu0 0.0
    %1519 = vmatpush1.msra.mxu0 0.0
    %1520 = vmatprep.subr.mxu0 0.0
    %1521 = vmatpush1.msra.mxu0 0.0
    %1522 = vmatprep.subr.mxu0 0.0
    %1523 = vmatpush1.msra.mxu0 0.0
    %1524 = vmatprep.subr.mxu0 0.0
    %1525 = vmatpush1.msra.mxu0 0.0
    %1526 = vmatprep.subr.mxu0 0.0
    %1527 = vmatpush1.msra.mxu0 0.0
    %1528 = vmatprep.subr.mxu0 0.0
    %1529 = vmatpush1.msra.mxu0 0.0
    %1530 = vmatprep.subr.mxu0 0.0
    %1531 = vmatpush1.msra.mxu0 0.0
    %1532 = vmatprep.subr.mxu0 0.0
    %1533 = vmatpush1.msra.mxu0 0.0
    %1534 = vmatprep.subr.mxu0 0.0
    %1535 = vmatpush1.msra.mxu0 0.0
    %1536 = vmatprep.subr.mxu0 0.0
    %1537 = vmatpush1.msra.mxu0 0.0
    %1538 = vmatprep.subr.mxu0 0.0
    %1539 = vmatpush1.msra.mxu0 0.0
    %1540 = vmatprep.subr.mxu0 0.0
    %1541 = vmatpush1.msra.mxu0 0.0
    %1542 = vmatprep.mubr.f32.mxu0 0.0
    %1543 = vmatmul.mubr.f32.gmra.mrb[0].mxu0 %v1471
    %v1544 = vpop.f32.mrb[0].mxu0
    %v1545 = vadd.f32 0.0, %v1544
    %v1546 = vpop.f32.mrb[0].mxu0
    %1547 = vmatprep.mubr.f32.mxu0 0.0
    %1548 = vmatmul.mubr.f32.gmra.mrb[0].mxu0 %v1473
    %v1549 = vpop.f32.mrb[0].mxu0
    %v1550 = vadd.f32 0.0, %v1549
    %v1551 = vpop.f32.mrb[0].mxu0
    %1552 = vmatprep.mubr.f32.mxu0 0.0
    %1553 = vmatmul.mubr.f32.gmra.mrb[0].mxu0 %v1475
    %v1554 = vpop.f32.mrb[0].mxu0
    %v1555 = vadd.f32 0.0, %v1554
    %v1556 = vpop.f32.mrb[0].mxu0
    %1557 = vmatprep.mubr.f32.mxu0 0.0
    %1558 = vmatmul.mubr.f32.gmra.mrb[0].mxu0 %v1477
    %v1559 = vpop.f32.mrb[0].mxu0
    %v1560 = vadd.f32 0.0, %v1559
    %v1561 = vpop.f32.mrb[0].mxu0
    %1562 = vdwg.mxu0
    %v1563 = vpack.c.bf16 %v1473, %v1471
    %v1564 = vpack.c.bf16 %v1477, %v1475
    %1573 = vrot.lane.b32.xlu0 %v1345, 64
    %v1574 = vpop.permute.xlu0 %1573
    %1575 = vrot.lane.b32.xlu0 %v1346, 64
    %v1576 = vpop.permute.xlu0 %1575
    %1577 = vrot.lane.b32.xlu0 %v1347, 64
    %v1578 = vpop.permute.xlu0 %1577
    %1579 = vrot.lane.b32.xlu0 %v1348, 64
    %v1580 = vpop.permute.xlu0 %1579
    %1581 = vrot.lane.b32.xlu0 %v1349, 64
    %v1582 = vpop.permute.xlu0 %1581
    %1583 = vrot.lane.b32.xlu0 %v1350, 64
    %v1584 = vpop.permute.xlu0 %1583
    %1585 = vrot.lane.b32.xlu0 %v1351, 64
    %v1586 = vpop.permute.xlu0 %1585
    %1587 = vrot.lane.b32.xlu0 %v1352, 64
    %v1588 = vpop.permute.xlu0 %1587
    %1597 = vmatprep.subr.bf16.mxu0 0
    %1598 = vmatpush1.bf16.msra.mxu0 %v1574
    %1599 = vmatprep.subr.bf16.mxu0 0
    %1600 = vmatpush1.bf16.msra.mxu0 %v1576
    %1601 = vmatprep.subr.bf16.mxu0 0
    %1602 = vmatpush1.bf16.msra.mxu0 %v1578
    %1603 = vmatprep.subr.bf16.mxu0 0
    %1604 = vmatpush1.bf16.msra.mxu0 %v1580
    %1605 = vmatprep.subr.bf16.mxu0 0
    %1606 = vmatpush1.bf16.msra.mxu0 %v1582
    %1607 = vmatprep.subr.bf16.mxu0 0
    %1608 = vmatpush1.bf16.msra.mxu0 %v1584
    %1609 = vmatprep.subr.bf16.mxu0 0
    %1610 = vmatpush1.bf16.msra.mxu0 %v1586
    %1611 = vmatprep.subr.bf16.mxu0 0
    %1612 = vmatpush1.bf16.msra.mxu0 %v1588
    %1613 = vmatprep.subr.bf16.mxu0 0
    %1614 = vmatpush1.bf16.msra.mxu0 0
    %1615 = vmatprep.subr.bf16.mxu0 0
    %1616 = vmatpush1.bf16.msra.mxu0 0
    %1617 = vmatprep.subr.bf16.mxu0 0
    %1618 = vmatpush1.bf16.msra.mxu0 0
    %1619 = vmatprep.subr.bf16.mxu0 0
    %1620 = vmatpush1.bf16.msra.mxu0 0
    %1621 = vmatprep.subr.bf16.mxu0 0
    %1622 = vmatpush1.bf16.msra.mxu0 0
    %1623 = vmatprep.subr.bf16.mxu0 0
    %1624 = vmatpush1.bf16.msra.mxu0 0
    %1625 = vmatprep.subr.bf16.mxu0 0
    %1626 = vmatpush1.bf16.msra.mxu0 0
    %1627 = vmatprep.subr.bf16.mxu0 0
    %1628 = vmatpush1.bf16.msra.mxu0 0
    %1629 = vmatprep.mubr.bf16.mxu0 0
    %1630 = vmatmul.mubr.bf16.gmra.mrb[0].mxu0 %v1563
    %v1631 = vpop.f32.mrb[0].mxu0
    %v1632 = vadd.f32 0.0, %v1631
    %v1633 = vpop.f32.mrb[0].mxu0
    %v1634 = vpop.f32.mrb[0].mxu0
    %v1635 = vadd.f32 0.0, %v1634
    %v1636 = vpop.f32.mrb[0].mxu0
    %1637 = vmatprep.mubr.bf16.mxu0 0
    %1638 = vmatmul.mubr.bf16.gmra.mrb[0].mxu0 %v1564
    %v1639 = vpop.f32.mrb[0].mxu0
    %v1640 = vadd.f32 0.0, %v1639
    %v1641 = vpop.f32.mrb[0].mxu0
    %v1642 = vpop.f32.mrb[0].mxu0
    %v1643 = vadd.f32 0.0, %v1642
    %v1644 = vpop.f32.mrb[0].mxu0
    %1645 = vdwg.mxu0
    %v1646 = vrcp.pop %v1545
    %v1647 = vrcp.pop %v1550
    %v1648 = vrcp.pop %v1555
    %v1649 = vrcp.pop %v1560
    %v1650 = vmul.f32 %v1632, %v1646
    %v1651 = vmul.f32 %v1635, %v1647
    %v1652 = vmul.f32 %v1640, %v1648
    %v1653 = vmul.f32 %v1643, %v1649
    %v1654 = vpack.c.bf16 %v1651, %v1650
    %v1655 = vpack.c.bf16 %v1653, %v1652
    %s1656 = scalar_lea.vmem %s5, 16
    %v1657 = vld [vmem:[%s1656] sm:$0xf]
    %v1658 = vld [vmem:[%s1656 + $0x4] sm:$0xf]
    %v1659 = vld [vmem:[%s1656 + $0x8] sm:$0xf]
    %v1660 = vld [vmem:[%s1656 + $0xc] sm:$0xf]
    %v1661 = vld [vmem:[%s6 + $0x1] sm:$0x1]
    %v1662 = vlaneseq
    %v1663 = vshrl.u32 %v1662, 7
    %v1664 = vsub.s32 0, %v1663
    %v1665 = vrot.slane %v1661, %v1664
    %v1670 = vunpack.c.l.b16 %v1657
    %v1671 = vunpack.c.l.b16 %v1658
    %v1672 = vunpack.c.l.b16 %v1659
    %v1673 = vunpack.c.l.b16 %v1660
    %v1674 = vpack.c.b16 %v1671, %v1670
    %v1675 = vpack.c.b16 %v1673, %v1672
    %v1679 = vsel %vm248, %v1654, 0
    %v1682 = vsel %vm248, %v1655, 0
    %1684 = vmatprep.subr.bf16.mxu0 0
    %1685 = vmatpush1.bf16.msra.mxu0 %v1674
    %1686 = vmatprep.subr.bf16.mxu0 0
    %1687 = vmatpush1.bf16.msra.mxu0 %v1675
    %1688 = vmatprep.subr.bf16.mxu0 0
    %1689 = vmatpush1.bf16.msra.mxu0 0
    %1690 = vmatprep.subr.bf16.mxu0 0
    %1691 = vmatpush1.bf16.msra.mxu0 0
    %1692 = vmatprep.subr.bf16.mxu0 0
    %1693 = vmatpush1.bf16.msra.mxu0 0
    %1694 = vmatprep.subr.bf16.mxu0 0
    %1695 = vmatpush1.bf16.msra.mxu0 0
    %1696 = vmatprep.subr.bf16.mxu0 0
    %1697 = vmatpush1.bf16.msra.mxu0 0
    %1698 = vmatprep.subr.bf16.mxu0 0
    %1699 = vmatpush1.bf16.msra.mxu0 0
    %1700 = vmatprep.subr.bf16.mxu0 0
    %1701 = vmatpush1.bf16.msra.mxu0 0
    %1702 = vmatprep.subr.bf16.mxu0 0
    %1703 = vmatpush1.bf16.msra.mxu0 0
    %1704 = vmatprep.subr.bf16.mxu0 0
    %1705 = vmatpush1.bf16.msra.mxu0 0
    %1706 = vmatprep.subr.bf16.mxu0 0
    %1707 = vmatpush1.bf16.msra.mxu0 0
    %1708 = vmatprep.subr.bf16.mxu0 0
    %1709 = vmatpush1.bf16.msra.mxu0 0
    %1710 = vmatprep.subr.bf16.mxu0 0
    %1711 = vmatpush1.bf16.msra.mxu0 0
    %1712 = vmatprep.subr.bf16.mxu0 0
    %1713 = vmatpush1.bf16.msra.mxu0 0
    %1714 = vmatprep.subr.bf16.mxu0 0
    %1715 = vmatpush1.bf16.msra.mxu0 0
    %1716 = vmatprep.mubr.bf16.mxu0 0
    %1717 = vmatmul.mubr.bf16.gmra.mrb[0].mxu0 %v1679
    %v1718 = vpop.f32.mrb[0].mxu0
    %v1719 = vadd.f32 %v1665, %v1718
    %v1720 = vpop.f32.mrb[0].mxu0
    %v1721 = vpop.f32.mrb[0].mxu0
    %v1722 = vadd.f32 %v1665, %v1721
    %v1723 = vpop.f32.mrb[0].mxu0
    %1724 = vmatprep.mubr.bf16.mxu0 0
    %1725 = vmatmul.mubr.bf16.gmra.mrb[0].mxu0 %v1682
    %v1726 = vpop.f32.mrb[0].mxu0
    %v1727 = vadd.f32 %v1665, %v1726
    %v1728 = vpop.f32.mrb[0].mxu0
    %v1729 = vpop.f32.mrb[0].mxu0
    %v1730 = vadd.f32 %v1665, %v1729
    %v1731 = vpop.f32.mrb[0].mxu0
    %1732 = vdwg.mxu0
    %v1733 = vadd.f32 %v1222, %v1719
    %v1734 = vadd.f32 %v1223, %v1722
    %v1735 = vadd.f32 %v1224, %v1727
    %v1736 = vadd.f32 %v1225, %v1730
    %v1737 = vld [vmem:[%s7 + $0x1] sm:$0x1]
    %v1738 = vld [vmem:[%s8 + $0x1] sm:$0x1]
    %v1739 = vsel %vm248, %v1733, 0.0
    %1740 = vadd.xlane.f32.xlu0 %v1739
    %v1741 = vpop.xlane.xlu0 %1740
    %v1742 = vsel %vm248, %v1734, 0.0
    %1743 = vadd.xlane.f32.xlu0 %v1742
    %v1744 = vpop.xlane.xlu0 %1743
    %v1745 = vsel %vm248, %v1735, 0.0
    %1746 = vadd.xlane.f32.xlu0 %v1745
    %v1747 = vpop.xlane.xlu0 %1746
    %v1748 = vsel %vm248, %v1736, 0.0
    %1749 = vadd.xlane.f32.xlu0 %v1748
    %v1750 = vpop.xlane.xlu0 %1749
    %v1751 = vmul.f32 %v1741, %v861
    %v1752 = vmul.f32 %v1744, %v861
    %v1753 = vmul.f32 %v1747, %v861
    %v1754 = vmul.f32 %v1750, %v861
    %v1755 = vsub.f32 %v1733, %v1751
    %v1756 = vsub.f32 %v1734, %v1752
    %v1757 = vsub.f32 %v1735, %v1753
    %v1758 = vsub.f32 %v1736, %v1754
    %v1759 = vmul.f32 %v1755, %v1755
    %v1760 = vmul.f32 %v1756, %v1756
    %v1761 = vmul.f32 %v1757, %v1757
    %v1762 = vmul.f32 %v1758, %v1758
    %v1763 = vsel %vm248, %v1759, 0.0
    %1764 = vadd.xlane.f32.xlu0 %v1763
    %v1765 = vpop.xlane.xlu0 %1764
    %v1766 = vsel %vm248, %v1760, 0.0
    %1767 = vadd.xlane.f32.xlu0 %v1766
    %v1768 = vpop.xlane.xlu0 %1767
    %v1769 = vsel %vm248, %v1761, 0.0
    %1770 = vadd.xlane.f32.xlu0 %v1769
    %v1771 = vpop.xlane.xlu0 %1770
    %v1772 = vsel %vm248, %v1762, 0.0
    %1773 = vadd.xlane.f32.xlu0 %v1772
    %v1774 = vpop.xlane.xlu0 %1773
    %v1775 = vmul.f32 %v1765, %v861
    %v1776 = vmul.f32 %v1768, %v861
    %v1777 = vmul.f32 %v1771, %v861
    %v1778 = vmul.f32 %v1774, %v861
    %v1779 = vadd.f32 %v1775, 1e-12
    %v1780 = vadd.f32 %v1776, 1e-12
    %v1781 = vadd.f32 %v1777, 1e-12
    %v1782 = vadd.f32 %v1778, 1e-12
    %v1783 = vrsqrt.pop %v1779
    %v1784 = vrsqrt.pop %v1780
    %v1785 = vrsqrt.pop %v1781
    %v1786 = vrsqrt.pop %v1782
    %v1787 = vmul.f32 %v1755, %v1783
    %v1788 = vmul.f32 %v1756, %v1784
    %v1789 = vmul.f32 %v1757, %v1785
    %v1790 = vmul.f32 %v1758, %v1786
    %v1791 = vlaneseq
    %v1792 = vshrl.u32 %v1791, 7
    %v1793 = vsub.s32 0, %v1792
    %v1794 = vrot.slane %v1737, %v1793
    %v1795 = vmul.f32 %v1787, %v1794
    %v1796 = vmul.f32 %v1788, %v1794
    %v1797 = vmul.f32 %v1789, %v1794
    %v1798 = vmul.f32 %v1790, %v1794
    %v1799 = vlaneseq
    %v1800 = vshrl.u32 %v1799, 7
    %v1801 = vsub.s32 0, %v1800
    %v1802 = vrot.slane %v1738, %v1801
    %v1803 = vadd.f32 %v1795, %v1802
    %v1804 = vadd.f32 %v1796, %v1802
    %v1805 = vadd.f32 %v1797, %v1802
    %v1806 = vadd.f32 %v1798, %v1802
    %v1807 = vpack.c.bf16 %v1804, %v1803
    %v1808 = vpack.c.bf16 %v1806, %v1805
    %s1809 = scalar_lea.vmem %s9, 16
    %v1810 = vld [vmem:[%s1809] sm:$0xf]
    %v1811 = vld [vmem:[%s1809 + $0x4] sm:$0xf]
    %v1812 = vld [vmem:[%s1809 + $0x8] sm:$0xf]
    %v1813 = vld [vmem:[%s1809 + $0xc] sm:$0xf]
    %v1814 = vld [vmem:[#allocation8 + $0x1] sm:$0x1]
    %v1815 = vlaneseq
    %v1816 = vshrl.u32 %v1815, 7
    %v1817 = vsub.s32 0, %v1816
    %v1818 = vrot.slane %v1814, %v1817
    %v1823 = vunpack.c.l.b16 %v1810
    %v1824 = vunpack.c.l.b16 %v1811
    %v1825 = vunpack.c.l.b16 %v1812
    %v1826 = vunpack.c.l.b16 %v1813
    %v1827 = vpack.c.b16 %v1824, %v1823
    %v1828 = vpack.c.b16 %v1826, %v1825
    %v1832 = vsel %vm248, %v1807, 0
    %v1835 = vsel %vm248, %v1808, 0
    %1837 = vmatprep.subr.bf16.mxu0 0
    %1838 = vmatpush1.bf16.msra.mxu0 %v1827
    %1839 = vmatprep.subr.bf16.mxu0 0
    %1840 = vmatpush1.bf16.msra.mxu0 %v1828
    %1841 = vmatprep.subr.bf16.mxu0 0
    %1842 = vmatpush1.bf16.msra.mxu0 0
    %1843 = vmatprep.subr.bf16.mxu0 0
    %1844 = vmatpush1.bf16.msra.mxu0 0
    %1845 = vmatprep.subr.bf16.mxu0 0
    %1846 = vmatpush1.bf16.msra.mxu0 0
    %1847 = vmatprep.subr.bf16.mxu0 0
    %1848 = vmatpush1.bf16.msra.mxu0 0
    %1849 = vmatprep.subr.bf16.mxu0 0
    %1850 = vmatpush1.bf16.msra.mxu0 0
    %1851 = vmatprep.subr.bf16.mxu0 0
    %1852 = vmatpush1.bf16.msra.mxu0 0
    %1853 = vmatprep.subr.bf16.mxu0 0
    %1854 = vmatpush1.bf16.msra.mxu0 0
    %1855 = vmatprep.subr.bf16.mxu0 0
    %1856 = vmatpush1.bf16.msra.mxu0 0
    %1857 = vmatprep.subr.bf16.mxu0 0
    %1858 = vmatpush1.bf16.msra.mxu0 0
    %1859 = vmatprep.subr.bf16.mxu0 0
    %1860 = vmatpush1.bf16.msra.mxu0 0
    %1861 = vmatprep.subr.bf16.mxu0 0
    %1862 = vmatpush1.bf16.msra.mxu0 0
    %1863 = vmatprep.subr.bf16.mxu0 0
    %1864 = vmatpush1.bf16.msra.mxu0 0
    %1865 = vmatprep.subr.bf16.mxu0 0
    %1866 = vmatpush1.bf16.msra.mxu0 0
    %1867 = vmatprep.subr.bf16.mxu0 0
    %1868 = vmatpush1.bf16.msra.mxu0 0
    %1869 = vmatprep.mubr.bf16.mxu0 0
    %1870 = vmatmul.mubr.bf16.gmra.mrb[0].mxu0 %v1832
    %v1871 = vpop.f32.mrb[0].mxu0
    %v1872 = vadd.f32 %v1818, %v1871
    %v1873 = vpop.f32.mrb[0].mxu0
    %v1874 = vpop.f32.mrb[0].mxu0
    %v1875 = vadd.f32 %v1818, %v1874
    %v1876 = vpop.f32.mrb[0].mxu0
    %1877 = vmatprep.mubr.bf16.mxu0 0
    %1878 = vmatmul.mubr.bf16.gmra.mrb[0].mxu0 %v1835
    %v1879 = vpop.f32.mrb[0].mxu0
    %v1880 = vadd.f32 %v1818, %v1879
    %v1881 = vpop.f32.mrb[0].mxu0
    %v1882 = vpop.f32.mrb[0].mxu0
    %v1883 = vadd.f32 %v1818, %v1882
    %v1884 = vpop.f32.mrb[0].mxu0
    %1885 = vdwg.mxu0
    %v1886 = vmul.f32 %v1872, %v1872
    %v1887 = vmul.f32 %v1875, %v1875
    %v1888 = vmul.f32 %v1880, %v1880
    %v1889 = vmul.f32 %v1883, %v1883
    %v1890 = vmul.f32 %v1872, %v1886
    %v1891 = vmul.f32 %v1875, %v1887
    %v1892 = vmul.f32 %v1880, %v1888
    %v1893 = vmul.f32 %v1883, %v1889
    %v1894 = vmul.f32 %v1890, 0.044715
    %v1895 = vmul.f32 %v1891, 0.044715
    %v1896 = vmul.f32 %v1892, 0.044715
    %v1897 = vmul.f32 %v1893, 0.044715
    %v1898 = vadd.f32 %v1872, %v1894
    %v1899 = vadd.f32 %v1875, %v1895
    %v1900 = vadd.f32 %v1880, %v1896
    %v1901 = vadd.f32 %v1883, %v1897
    %v1902 = vmul.f32 %v1898, 0.7978846
    %v1903 = vmul.f32 %v1899, 0.7978846
    %v1904 = vmul.f32 %v1900, 0.7978846
    %v1905 = vmul.f32 %v1901, 0.7978846
    %v1906 = vtanh.pop %v1902
    %v1907 = vtanh.pop %v1903
    %v1908 = vtanh.pop %v1904
    %v1909 = vtanh.pop %v1905
    %v1910 = vadd.f32 %v1906, 1.0
    %v1911 = vadd.f32 %v1907, 1.0
    %v1912 = vadd.f32 %v1908, 1.0
    %v1913 = vadd.f32 %v1909, 1.0
    %v1914 = vmul.f32 %v1910, 0.5
    %v1915 = vmul.f32 %v1911, 0.5
    %v1916 = vmul.f32 %v1912, 0.5
    %v1917 = vmul.f32 %v1913, 0.5
    %v1918 = vmul.f32 %v1872, %v1914
    %v1919 = vmul.f32 %v1875, %v1915
    %v1920 = vmul.f32 %v1880, %v1916
    %v1921 = vmul.f32 %v1883, %v1917
    %v1922 = vpack.c.bf16 %v1919, %v1918
    %v1923 = vpack.c.bf16 %v1921, %v1920
    %s1924 = scalar_lea.vmem %s11, 64
    %v1925 = vld [vmem:[%s1924] sm:$0xf]
    %v1926 = vld [vmem:[%s1924 + $0x4] sm:$0xf]
    %v1927 = vld [vmem:[%s1924 + $0x8] sm:$0xf]
    %v1928 = vld [vmem:[%s1924 + $0xc] sm:$0xf]
    %v1929 = vld [vmem:[%s1924 + $0x10] sm:$0xf]
    %v1930 = vld [vmem:[%s1924 + $0x14] sm:$0xf]
    %v1931 = vld [vmem:[%s1924 + $0x18] sm:$0xf]
    %v1932 = vld [vmem:[%s1924 + $0x1c] sm:$0xf]
    %v1933 = vld [vmem:[%s1924 + $0x20] sm:$0xf]
    %v1934 = vld [vmem:[%s1924 + $0x24] sm:$0xf]
    %v1935 = vld [vmem:[%s1924 + $0x28] sm:$0xf]
    %v1936 = vld [vmem:[%s1924 + $0x2c] sm:$0xf]
    %v1937 = vld [vmem:[%s1924 + $0x30] sm:$0xf]
    %v1938 = vld [vmem:[%s1924 + $0x34] sm:$0xf]
    %v1939 = vld [vmem:[%s1924 + $0x38] sm:$0xf]
    %v1940 = vld [vmem:[%s1924 + $0x3c] sm:$0xf]
    %v1941 = vld [vmem:[#allocation9 + $0x1] sm:$0x1]
    %v1942 = vlaneseq
    %v1943 = vshrl.u32 %v1942, 7
    %v1944 = vsub.s32 0, %v1943
    %v1945 = vrot.slane %v1941, %v1944
    %v1962 = vunpack.c.l.b16 %v1925
    %v1963 = vunpack.c.l.b16 %v1926
    %v1964 = vunpack.c.l.b16 %v1927
    %v1965 = vunpack.c.l.b16 %v1928
    %v1966 = vunpack.c.l.b16 %v1929
    %v1967 = vunpack.c.l.b16 %v1930
    %v1968 = vunpack.c.l.b16 %v1931
    %v1969 = vunpack.c.l.b16 %v1932
    %v1970 = vunpack.c.l.b16 %v1933
    %v1971 = vunpack.c.l.b16 %v1934
    %v1972 = vunpack.c.l.b16 %v1935
    %v1973 = vunpack.c.l.b16 %v1936
    %v1974 = vunpack.c.l.b16 %v1937
    %v1975 = vunpack.c.l.b16 %v1938
    %v1976 = vunpack.c.l.b16 %v1939
    %v1977 = vunpack.c.l.b16 %v1940
    %v1978 = vpack.c.b16 %v1963, %v1962
    %v1979 = vpack.c.b16 %v1965, %v1964
    %v1980 = vpack.c.b16 %v1967, %v1966
    %v1981 = vpack.c.b16 %v1969, %v1968
    %v1982 = vpack.c.b16 %v1971, %v1970
    %v1983 = vpack.c.b16 %v1973, %v1972
    %v1984 = vpack.c.b16 %v1975, %v1974
    %v1985 = vpack.c.b16 %v1977, %v1976
    %1994 = vmatprep.subr.bf16.mxu0 0
    %1995 = vmatpush1.bf16.msra.mxu0 %v1978
    %1996 = vmatprep.subr.bf16.mxu0 0
    %1997 = vmatpush1.bf16.msra.mxu0 %v1979
    %1998 = vmatprep.subr.bf16.mxu0 0
    %1999 = vmatpush1.bf16.msra.mxu0 %v1980
    %2000 = vmatprep.subr.bf16.mxu0 0
    %2001 = vmatpush1.bf16.msra.mxu0 %v1981
    %2002 = vmatprep.subr.bf16.mxu0 0
    %2003 = vmatpush1.bf16.msra.mxu0 %v1982
    %2004 = vmatprep.subr.bf16.mxu0 0
    %2005 = vmatpush1.bf16.msra.mxu0 %v1983
    %2006 = vmatprep.subr.bf16.mxu0 0
    %2007 = vmatpush1.bf16.msra.mxu0 %v1984
    %2008 = vmatprep.subr.bf16.mxu0 0
    %2009 = vmatpush1.bf16.msra.mxu0 %v1985
    %2010 = vmatprep.subr.bf16.mxu0 0
    %2011 = vmatpush1.bf16.msra.mxu0 0
    %2012 = vmatprep.subr.bf16.mxu0 0
    %2013 = vmatpush1.bf16.msra.mxu0 0
    %2014 = vmatprep.subr.bf16.mxu0 0
    %2015 = vmatpush1.bf16.msra.mxu0 0
    %2016 = vmatprep.subr.bf16.mxu0 0
    %2017 = vmatpush1.bf16.msra.mxu0 0
    %2018 = vmatprep.subr.bf16.mxu0 0
    %2019 = vmatpush1.bf16.msra.mxu0 0
    %2020 = vmatprep.subr.bf16.mxu0 0
    %2021 = vmatpush1.bf16.msra.mxu0 0
    %2022 = vmatprep.subr.bf16.mxu0 0
    %2023 = vmatpush1.bf16.msra.mxu0 0
    %2024 = vmatprep.subr.bf16.mxu0 0
    %2025 = vmatpush1.bf16.msra.mxu0 0
    %2026 = vmatprep.mubr.bf16.mxu0 0
    %2027 = vmatmul.mubr.bf16.gmra.mrb[0].mxu0 %v1922
    %v2028 = vpop.f32.mrb[0].mxu0
    %v2029 = vadd.f32 %v1945, %v2028
    %v2030 = vpop.f32.mrb[0].mxu0
    %v2031 = vpop.f32.mrb[0].mxu0
    %v2032 = vadd.f32 %v1945, %v2031
    %v2033 = vpop.f32.mrb[0].mxu0
    %2034 = vmatprep.mubr.bf16.mxu0 0
    %2035 = vmatmul.mubr.bf16.gmra.mrb[0].mxu0 %v1923
    %v2036 = vpop.f32.mrb[0].mxu0
    %v2037 = vadd.f32 %v1945, %v2036
    %v2038 = vpop.f32.mrb[0].mxu0
    %v2039 = vpop.f32.mrb[0].mxu0
    %v2040 = vadd.f32 %v1945, %v2039
    %v2041 = vpop.f32.mrb[0].mxu0
    %2042 = vdwg.mxu0
    %v2043 = vadd.f32 %v1803, %v2029
    %v2044 = vadd.f32 %v1804, %v2032
    %v2045 = vadd.f32 %v1805, %v2037
    %v2046 = vadd.f32 %v1806, %v2040
    %v2047 = vld [vmem:[#allocation11 + $0x1] sm:$0x1]
    %v2048 = vld [vmem:[#allocation12 + $0x1] sm:$0x1]
    %v2049 = vsel %vm248, %v2043, 0.0
    %2050 = vadd.xlane.f32.xlu0 %v2049
    %v2051 = vpop.xlane.xlu0 %2050
    %v2052 = vsel %vm248, %v2044, 0.0
    %2053 = vadd.xlane.f32.xlu0 %v2052
    %v2054 = vpop.xlane.xlu0 %2053
    %v2055 = vsel %vm248, %v2045, 0.0
    %2056 = vadd.xlane.f32.xlu0 %v2055
    %v2057 = vpop.xlane.xlu0 %2056
    %v2058 = vsel %vm248, %v2046, 0.0
    %2059 = vadd.xlane.f32.xlu0 %v2058
    %v2060 = vpop.xlane.xlu0 %2059
    %v2061 = vmul.f32 %v2051, %v861
    %v2062 = vmul.f32 %v2054, %v861
    %v2063 = vmul.f32 %v2057, %v861
    %v2064 = vmul.f32 %v2060, %v861
    %v2065 = vsub.f32 %v2043, %v2061
    %v2066 = vsub.f32 %v2044, %v2062
    %v2067 = vsub.f32 %v2045, %v2063
    %v2068 = vsub.f32 %v2046, %v2064
    %v2069 = vmul.f32 %v2065, %v2065
    %v2070 = vmul.f32 %v2066, %v2066
    %v2071 = vmul.f32 %v2067, %v2067
    %v2072 = vmul.f32 %v2068, %v2068
    %v2073 = vsel %vm248, %v2069, 0.0
    %2074 = vadd.xlane.f32.xlu0 %v2073
    %v2075 = vpop.xlane.xlu0 %2074
    %v2076 = vsel %vm248, %v2070, 0.0
    %2077 = vadd.xlane.f32.xlu0 %v2076
    %v2078 = vpop.xlane.xlu0 %2077
    %v2079 = vsel %vm248, %v2071, 0.0
    %2080 = vadd.xlane.f32.xlu0 %v2079
    %v2081 = vpop.xlane.xlu0 %2080
    %v2082 = vsel %vm248, %v2072, 0.0
    %2083 = vadd.xlane.f32.xlu0 %v2082
    %v2084 = vpop.xlane.xlu0 %2083
    %v2085 = vmul.f32 %v2075, %v861
    %v2086 = vmul.f32 %v2078, %v861
    %v2087 = vmul.f32 %v2081, %v861
    %v2088 = vmul.f32 %v2084, %v861
    %v2089 = vadd.f32 %v2085, 1e-12
    %v2090 = vadd.f32 %v2086, 1e-12
    %v2091 = vadd.f32 %v2087, 1e-12
    %v2092 = vadd.f32 %v2088, 1e-12
    %v2093 = vrsqrt.pop %v2089
    %v2094 = vrsqrt.pop %v2090
    %v2095 = vrsqrt.pop %v2091
    %v2096 = vrsqrt.pop %v2092
    %v2097 = vmul.f32 %v2065, %v2093
    %v2098 = vmul.f32 %v2066, %v2094
    %v2099 = vmul.f32 %v2067, %v2095
    %v2100 = vmul.f32 %v2068, %v2096
    %v2101 = vlaneseq
    %v2102 = vshrl.u32 %v2101, 7
    %v2103 = vsub.s32 0, %v2102
    %v2104 = vrot.slane %v2047, %v2103
    %v2105 = vmul.f32 %v2097, %v2104
    %v2106 = vmul.f32 %v2098, %v2104
    %v2107 = vmul.f32 %v2099, %v2104
    %v2108 = vmul.f32 %v2100, %v2104
    %v2109 = vlaneseq
    %v2110 = vshrl.u32 %v2109, 7
    %v2111 = vsub.s32 0, %v2110
    %v2112 = vrot.slane %v2048, %v2111
    %v2113 = vadd.f32 %v2105, %v2112
    %v2114 = vadd.f32 %v2106, %v2112
    %v2115 = vadd.f32 %v2107, %v2112
    %v2116 = vadd.f32 %v2108, %v2112
    %v2117 = vpack.c.bf16 %v2114, %v2113
    %v2118 = vpack.c.bf16 %v2116, %v2115
    %s2119 = scalar_lea.vmem %s3, 32
    %v2120 = vld [vmem:[%s2119] sm:$0xf]
    %v2121 = vld [vmem:[%s2119 + $0x4] sm:$0xf]
    %v2122 = vld [vmem:[%s2119 + $0x8] sm:$0xf]
    %v2123 = vld [vmem:[%s2119 + $0xc] sm:$0xf]
    %v2124 = vld [vmem:[%s4 + $0x2] sm:$0x1]
    %v2125 = vlaneseq
    %v2126 = vshrl.u32 %v2125, 7
    %v2127 = vsub.s32 0, %v2126
    %v2128 = vrot.slane %v2124, %v2127
    %v2133 = vunpack.c.l.b16 %v2120
    %v2134 = vunpack.c.l.b16 %v2121
    %v2135 = vunpack.c.l.b16 %v2122
    %v2136 = vunpack.c.l.b16 %v2123
    %v2137 = vpack.c.b16 %v2134, %v2133
    %v2138 = vpack.c.b16 %v2136, %v2135
    %v2142 = vsel %vm248, %v2117, 0
    %v2145 = vsel %vm248, %v2118, 0
    %2147 = vmatprep.subr.bf16.mxu0 0
    %2148 = vmatpush1.bf16.msra.mxu0 %v2137
    %2149 = vmatprep.subr.bf16.mxu0 0
    %2150 = vmatpush1.bf16.msra.mxu0 %v2138
    %2151 = vmatprep.subr.bf16.mxu0 0
    %2152 = vmatpush1.bf16.msra.mxu0 0
    %2153 = vmatprep.subr.bf16.mxu0 0
    %2154 = vmatpush1.bf16.msra.mxu0 0
    %2155 = vmatprep.subr.bf16.mxu0 0
    %2156 = vmatpush1.bf16.msra.mxu0 0
    %2157 = vmatprep.subr.bf16.mxu0 0
    %2158 = vmatpush1.bf16.msra.mxu0 0
    %2159 = vmatprep.subr.bf16.mxu0 0
    %2160 = vmatpush1.bf16.msra.mxu0 0
    %2161 = vmatprep.subr.bf16.mxu0 0
    %2162 = vmatpush1.bf16.msra.mxu0 0
    %2163 = vmatprep.subr.bf16.mxu0 0
    %2164 = vmatpush1.bf16.msra.mxu0 0
    %2165 = vmatprep.subr.bf16.mxu0 0
    %2166 = vmatpush1.bf16.msra.mxu0 0
    %2167 = vmatprep.subr.bf16.mxu0 0
    %2168 = vmatpush1.bf16.msra.mxu0 0
    %2169 = vmatprep.subr.bf16.mxu0 0
    %2170 = vmatpush1.bf16.msra.mxu0 0
    %2171 = vmatprep.subr.bf16.mxu0 0
    %2172 = vmatpush1.bf16.msra.mxu0 0
    %2173 = vmatprep.subr.bf16.mxu0 0
    %2174 = vmatpush1.bf16.msra.mxu0 0
    %2175 = vmatprep.subr.bf16.mxu0 0
    %2176 = vmatpush1.bf16.msra.mxu0 0
    %2177 = vmatprep.subr.bf16.mxu0 0
    %2178 = vmatpush1.bf16.msra.mxu0 0
    %2179 = vmatprep.mubr.bf16.mxu0 0
    %2180 = vmatmul.mubr.bf16.gmra.mrb[0].mxu0 %v2142
    %v2181 = vpop.f32.mrb[0].mxu0
    %v2182 = vadd.f32 %v2128, %v2181
    %v2183 = vpop.f32.mrb[0].mxu0
    %v2184 = vpop.f32.mrb[0].mxu0
    %v2185 = vadd.f32 %v2128, %v2184
    %v2186 = vpop.f32.mrb[0].mxu0
    %2187 = vmatprep.mubr.bf16.mxu0 0
    %2188 = vmatmul.mubr.bf16.gmra.mrb[0].mxu0 %v2145
    %v2189 = vpop.f32.mrb[0].mxu0
    %v2190 = vadd.f32 %v2128, %v2189
    %v2191 = vpop.f32.mrb[0].mxu0
    %v2192 = vpop.f32.mrb[0].mxu0
    %v2193 = vadd.f32 %v2128, %v2192
    %v2194 = vpop.f32.mrb[0].mxu0
    %2195 = vdwg.mxu0
    %v2196 = vmul.f32 %v2182, %v321
    %v2197 = vmul.f32 %v2185, %v323
    %v2198 = vmul.f32 %v2190, %v325
    %v2199 = vmul.f32 %v2193, %v327
    %v2200 = vmul.f32 %v2182, %v329
    %v2201 = vmul.f32 %v2185, %v331
    %v2202 = vmul.f32 %v2190, %v333
    %v2203 = vmul.f32 %v2193, %v335
    %v2204 = vmul.f32 %v2182, %v337
    %v2205 = vmul.f32 %v2185, %v339
    %v2206 = vmul.f32 %v2190, %v341
    %v2207 = vmul.f32 %v2193, %v343
    %v2208 = vmul.f32 %v2182, %v345
    %v2209 = vmul.f32 %v2185, %v347
    %v2210 = vmul.f32 %v2190, %v349
    %v2211 = vmul.f32 %v2193, %v351
    %v2212 = vpack.c.bf16 %v2197, %v2196
    %v2213 = vpack.c.bf16 %v2199, %v2198
    %v2214 = vpack.c.bf16 %v2201, %v2200
    %v2215 = vpack.c.bf16 %v2203, %v2202
    %v2216 = vpack.c.bf16 %v2205, %v2204
    %v2217 = vpack.c.bf16 %v2207, %v2206
    %v2218 = vpack.c.bf16 %v2209, %v2208
    %v2219 = vpack.c.bf16 %v2211, %v2210
    %v2220 = vmul.f32 %v2182, %v393
    %v2221 = vmul.f32 %v2185, %v395
    %v2222 = vmul.f32 %v2190, %v397
    %v2223 = vmul.f32 %v2193, %v399
    %v2224 = vmul.f32 %v2182, %v401
    %v2225 = vmul.f32 %v2185, %v403
    %v2226 = vmul.f32 %v2190, %v405
    %v2227 = vmul.f32 %v2193, %v407
    %v2228 = vmul.f32 %v2182, %v409
    %v2229 = vmul.f32 %v2185, %v411
    %v2230 = vmul.f32 %v2190, %v413
    %v2231 = vmul.f32 %v2193, %v415
    %v2232 = vmul.f32 %v2182, %v417
    %v2233 = vmul.f32 %v2185, %v419
    %v2234 = vmul.f32 %v2190, %v421
    %v2235 = vmul.f32 %v2193, %v423
    %v2236 = vpack.c.bf16 %v2221, %v2220
    %v2237 = vpack.c.bf16 %v2223, %v2222
    %v2238 = vpack.c.bf16 %v2225, %v2224
    %v2239 = vpack.c.bf16 %v2227, %v2226
    %v2240 = vpack.c.bf16 %v2229, %v2228
    %v2241 = vpack.c.bf16 %v2231, %v2230
    %v2242 = vpack.c.bf16 %v2233, %v2232
    %v2243 = vpack.c.bf16 %v2235, %v2234
    %v2244 = vpack.c.bf16 %v2185, %v2182
    %v2245 = vpack.c.bf16 %v2193, %v2190
    %2254 = vrot.lane.b32.xlu0 %v2212, 96
    %v2255 = vpop.permute.xlu0 %2254
    %2256 = vrot.lane.b32.xlu0 %v2213, 96
    %v2257 = vpop.permute.xlu0 %2256
    %2258 = vrot.lane.b32.xlu0 %v2214, 96
    %v2259 = vpop.permute.xlu0 %2258
    %2260 = vrot.lane.b32.xlu0 %v2215, 96
    %v2261 = vpop.permute.xlu0 %2260
    %2262 = vrot.lane.b32.xlu0 %v2216, 96
    %v2263 = vpop.permute.xlu0 %2262
    %2264 = vrot.lane.b32.xlu0 %v2217, 96
    %v2265 = vpop.permute.xlu0 %2264
    %2266 = vrot.lane.b32.xlu0 %v2218, 96
    %v2267 = vpop.permute.xlu0 %2266
    %2268 = vrot.lane.b32.xlu0 %v2219, 96
    %v2269 = vpop.permute.xlu0 %2268
    %v2271 = vsel %vm248, %v2244, 0
    %v2274 = vsel %vm248, %v2245, 0
    %v2277 = vsel %vm248, %v2255, 0
    %v2280 = vsel %vm248, %v2257, 0
    %v2283 = vsel %vm248, %v2259, 0
    %v2286 = vsel %vm248, %v2261, 0
    %v2289 = vsel %vm248, %v2263, 0
    %v2292 = vsel %vm248, %v2265, 0
    %v2295 = vsel %vm248, %v2267, 0
    %v2298 = vsel %vm248, %v2269, 0
    %2300 = vmatprep.subr.bf16.mxu0 0
    %2301 = vmatpush1.bf16.xpose.msra.mxu0 %v2277
    %2302 = vmatprep.subr.bf16.mxu0 0
    %2303 = vmatpush1.bf16.xpose.msra.mxu0 %v2280
    %2304 = vmatprep.subr.bf16.mxu0 0
    %2305 = vmatpush1.bf16.xpose.msra.mxu0 %v2283
    %2306 = vmatprep.subr.bf16.mxu0 0
    %2307 = vmatpush1.bf16.xpose.msra.mxu0 %v2286
    %2308 = vmatprep.subr.bf16.mxu0 0
    %2309 = vmatpush1.bf16.xpose.msra.mxu0 %v2289
    %2310 = vmatprep.subr.bf16.mxu0 0
    %2311 = vmatpush1.bf16.xpose.msra.mxu0 %v2292
    %2312 = vmatprep.subr.bf16.mxu0 0
    %2313 = vmatpush1.bf16.xpose.msra.mxu0 %v2295
    %2314 = vmatprep.subr.bf16.mxu0 0
    %2315 = vmatpush1.bf16.xpose.msra.mxu0 %v2298
    %2316 = vmatprep.subr.bf16.mxu0 0
    %2317 = vmatpush1.bf16.xpose.msra.mxu0 0
    %2318 = vmatprep.subr.bf16.mxu0 0
    %2319 = vmatpush1.bf16.xpose.msra.mxu0 0
    %2320 = vmatprep.subr.bf16.mxu0 0
    %2321 = vmatpush1.bf16.xpose.msra.mxu0 0
    %2322 = vmatprep.subr.bf16.mxu0 0
    %2323 = vmatpush1.bf16.xpose.msra.mxu0 0
    %2324 = vmatprep.subr.bf16.mxu0 0
    %2325 = vmatpush1.bf16.xpose.msra.mxu0 0
    %2326 = vmatprep.subr.bf16.mxu0 0
    %2327 = vmatpush1.bf16.xpose.msra.mxu0 0
    %2328 = vmatprep.subr.bf16.mxu0 0
    %2329 = vmatpush1.bf16.xpose.msra.mxu0 0
    %2330 = vmatprep.subr.bf16.mxu0 0
    %2331 = vmatpush1.bf16.xpose.msra.mxu0 0
    %2332 = vmatprep.mubr.bf16.mxu0 0
    %2333 = vmatmul.mubr.bf16.gmra.mrb[0].mxu0 %v2271
    %v2334 = vpop.f32.mrb[0].mxu0
    %v2335 = vadd.f32 %v205, %v2334
    %v2336 = vpop.f32.mrb[0].mxu0
    %v2337 = vpop.f32.mrb[0].mxu0
    %v2338 = vadd.f32 %v206, %v2337
    %v2339 = vpop.f32.mrb[0].mxu0
    %2340 = vmatprep.mubr.bf16.mxu0 0
    %2341 = vmatmul.mubr.bf16.gmra.mrb[0].mxu0 %v2274
    %v2342 = vpop.f32.mrb[0].mxu0
    %v2343 = vadd.f32 %v207, %v2342
    %v2344 = vpop.f32.mrb[0].mxu0
    %v2345 = vpop.f32.mrb[0].mxu0
    %v2346 = vadd.f32 %v208, %v2345
    %v2347 = vpop.f32.mrb[0].mxu0
    %2348 = vdwg.mxu0
    %2349 = vmax.xlane.f32.xlu0 %v2335
    %v2350 = vpop.xlane.xlu0 %2349
    %2351 = vmax.xlane.f32.xlu0 %v2338
    %v2352 = vpop.xlane.xlu0 %2351
    %2353 = vmax.xlane.f32.xlu0 %v2343
    %v2354 = vpop.xlane.xlu0 %2353
    %2355 = vmax.xlane.f32.xlu0 %v2346
    %v2356 = vpop.xlane.xlu0 %2355
    %v2357 = vsub.f32 %v2335, %v2350
    %v2358 = vsub.f32 %v2338, %v2352
    %v2359 = vsub.f32 %v2343, %v2354
    %v2360 = vsub.f32 %v2346, %v2356
    %v2361 = vmul.f32 %v2357, 1.442695
    %v2362 = vpow.pop %v2361
    %v2363 = vmul.f32 %v2358, 1.442695
    %v2364 = vpow.pop %v2363
    %v2365 = vmul.f32 %v2359, 1.442695
    %v2366 = vpow.pop %v2365
    %v2367 = vmul.f32 %v2360, 1.442695
    %v2368 = vpow.pop %v2367
    %2369 = vmatprep.subr.mxu0 0.0
    %2370 = vmatpush1.msra.mxu0 %v209
    %2371 = vmatprep.subr.mxu0 0.0
    %2372 = vmatpush1.msra.mxu0 %v210
    %2373 = vmatprep.subr.mxu0 0.0
    %2374 = vmatpush1.msra.mxu0 %v211
    %2375 = vmatprep.subr.mxu0 0.0
    %2376 = vmatpush1.msra.mxu0 %v212
    %2377 = vmatprep.subr.mxu0 0.0
    %2378 = vmatpush1.msra.mxu0 %v213
    %2379 = vmatprep.subr.mxu0 0.0
    %2380 = vmatpush1.msra.mxu0 %v214
    %2381 = vmatprep.subr.mxu0 0.0
    %2382 = vmatpush1.msra.mxu0 %v215
    %2383 = vmatprep.subr.mxu0 0.0
    %2384 = vmatpush1.msra.mxu0 %v216
    %2385 = vmatprep.subr.mxu0 0.0
    %2386 = vmatpush1.msra.mxu0 %v217
    %2387 = vmatprep.subr.mxu0 0.0
    %2388 = vmatpush1.msra.mxu0 %v218
    %2389 = vmatprep.subr.mxu0 0.0
    %2390 = vmatpush1.msra.mxu0 %v219
    %2391 = vmatprep.subr.mxu0 0.0
    %2392 = vmatpush1.msra.mxu0 %v220
    %2393 = vmatprep.subr.mxu0 0.0
    %2394 = vmatpush1.msra.mxu0 %v221
    %2395 = vmatprep.subr.mxu0 0.0
    %2396 = vmatpush1.msra.mxu0 %v222
    %2397 = vmatprep.subr.mxu0 0.0
    %2398 = vmatpush1.msra.mxu0 %v223
    %2399 = vmatprep.subr.mxu0 0.0
    %2400 = vmatpush1.msra.mxu0 %v224
    %2401 = vmatprep.subr.mxu0 0.0
    %2402 = vmatpush1.msra.mxu0 0.0
    %2403 = vmatprep.subr.mxu0 0.0
    %2404 = vmatpush1.msra.mxu0 0.0
    %2405 = vmatprep.subr.mxu0 0.0
    %2406 = vmatpush1.msra.mxu0 0.0
    %2407 = vmatprep.subr.mxu0 0.0
    %2408 = vmatpush1.msra.mxu0 0.0
    %2409 = vmatprep.subr.mxu0 0.0
    %2410 = vmatpush1.msra.mxu0 0.0
    %2411 = vmatprep.subr.mxu0 0.0
    %2412 = vmatpush1.msra.mxu0 0.0
    %2413 = vmatprep.subr.mxu0 0.0
    %2414 = vmatpush1.msra.mxu0 0.0
    %2415 = vmatprep.subr.mxu0 0.0
    %2416 = vmatpush1.msra.mxu0 0.0
    %2417 = vmatprep.subr.mxu0 0.0
    %2418 = vmatpush1.msra.mxu0 0.0
    %2419 = vmatprep.subr.mxu0 0.0
    %2420 = vmatpush1.msra.mxu0 0.0
    %2421 = vmatprep.subr.mxu0 0.0
    %2422 = vmatpush1.msra.mxu0 0.0
    %2423 = vmatprep.subr.mxu0 0.0
    %2424 = vmatpush1.msra.mxu0 0.0
    %2425 = vmatprep.subr.mxu0 0.0
    %2426 = vmatpush1.msra.mxu0 0.0
    %2427 = vmatprep.subr.mxu0 0.0
    %2428 = vmatpush1.msra.mxu0 0.0
    %2429 = vmatprep.subr.mxu0 0.0
    %2430 = vmatpush1.msra.mxu0 0.0
    %2431 = vmatprep.subr.mxu0 0.0
    %2432 = vmatpush1.msra.mxu0 0.0
    %2433 = vmatprep.mubr.f32.mxu0 0.0
    %2434 = vmatmul.mubr.f32.gmra.mrb[0].mxu0 %v2362
    %v2435 = vpop.f32.mrb[0].mxu0
    %v2436 = vadd.f32 0.0, %v2435
    %v2437 = vpop.f32.mrb[0].mxu0
    %2438 = vmatprep.mubr.f32.mxu0 0.0
    %2439 = vmatmul.mubr.f32.gmra.mrb[0].mxu0 %v2364
    %v2440 = vpop.f32.mrb[0].mxu0
    %v2441 = vadd.f32 0.0, %v2440
    %v2442 = vpop.f32.mrb[0].mxu0
    %2443 = vmatprep.mubr.f32.mxu0 0.0
    %2444 = vmatmul.mubr.f32.gmra.mrb[0].mxu0 %v2366
    %v2445 = vpop.f32.mrb[0].mxu0
    %v2446 = vadd.f32 0.0, %v2445
    %v2447 = vpop.f32.mrb[0].mxu0
    %2448 = vmatprep.mubr.f32.mxu0 0.0
    %2449 = vmatmul.mubr.f32.gmra.mrb[0].mxu0 %v2368
    %v2450 = vpop.f32.mrb[0].mxu0
    %v2451 = vadd.f32 0.0, %v2450
    %v2452 = vpop.f32.mrb[0].mxu0
    %2453 = vdwg.mxu0
    %v2454 = vpack.c.bf16 %v2364, %v2362
    %v2455 = vpack.c.bf16 %v2368, %v2366
    %2464 = vrot.lane.b32.xlu0 %v2236, 64
    %v2465 = vpop.permute.xlu0 %2464
    %2466 = vrot.lane.b32.xlu0 %v2237, 64
    %v2467 = vpop.permute.xlu0 %2466
    %2468 = vrot.lane.b32.xlu0 %v2238, 64
    %v2469 = vpop.permute.xlu0 %2468
    %2470 = vrot.lane.b32.xlu0 %v2239, 64
    %v2471 = vpop.permute.xlu0 %2470
    %2472 = vrot.lane.b32.xlu0 %v2240, 64
    %v2473 = vpop.permute.xlu0 %2472
    %2474 = vrot.lane.b32.xlu0 %v2241, 64
    %v2475 = vpop.permute.xlu0 %2474
    %2476 = vrot.lane.b32.xlu0 %v2242, 64
    %v2477 = vpop.permute.xlu0 %2476
    %2478 = vrot.lane.b32.xlu0 %v2243, 64
    %v2479 = vpop.permute.xlu0 %2478
    %2488 = vmatprep.subr.bf16.mxu0 0
    %2489 = vmatpush1.bf16.msra.mxu0 %v2465
    %2490 = vmatprep.subr.bf16.mxu0 0
    %2491 = vmatpush1.bf16.msra.mxu0 %v2467
    %2492 = vmatprep.subr.bf16.mxu0 0
    %2493 = vmatpush1.bf16.msra.mxu0 %v2469
    %2494 = vmatprep.subr.bf16.mxu0 0
    %2495 = vmatpush1.bf16.msra.mxu0 %v2471
    %2496 = vmatprep.subr.bf16.mxu0 0
    %2497 = vmatpush1.bf16.msra.mxu0 %v2473
    %2498 = vmatprep.subr.bf16.mxu0 0
    %2499 = vmatpush1.bf16.msra.mxu0 %v2475
    %2500 = vmatprep.subr.bf16.mxu0 0
    %2501 = vmatpush1.bf16.msra.mxu0 %v2477
    %2502 = vmatprep.subr.bf16.mxu0 0
    %2503 = vmatpush1.bf16.msra.mxu0 %v2479
    %2504 = vmatprep.subr.bf16.mxu0 0
    %2505 = vmatpush1.bf16.msra.mxu0 0
    %2506 = vmatprep.subr.bf16.mxu0 0
    %2507 = vmatpush1.bf16.msra.mxu0 0
    %2508 = vmatprep.subr.bf16.mxu0 0
    %2509 = vmatpush1.bf16.msra.mxu0 0
    %2510 = vmatprep.subr.bf16.mxu0 0
    %2511 = vmatpush1.bf16.msra.mxu0 0
    %2512 = vmatprep.subr.bf16.mxu0 0
    %2513 = vmatpush1.bf16.msra.mxu0 0
    %2514 = vmatprep.subr.bf16.mxu0 0
    %2515 = vmatpush1.bf16.msra.mxu0 0
    %2516 = vmatprep.subr.bf16.mxu0 0
    %2517 = vmatpush1.bf16.msra.mxu0 0
    %2518 = vmatprep.subr.bf16.mxu0 0
    %2519 = vmatpush1.bf16.msra.mxu0 0
    %2520 = vmatprep.mubr.bf16.mxu0 0
    %2521 = vmatmul.mubr.bf16.gmra.mrb[0].mxu0 %v2454
    %v2522 = vpop.f32.mrb[0].mxu0
    %v2523 = vadd.f32 0.0, %v2522
    %v2524 = vpop.f32.mrb[0].mxu0
    %v2525 = vpop.f32.mrb[0].mxu0
    %v2526 = vadd.f32 0.0, %v2525
    %v2527 = vpop.f32.mrb[0].mxu0
    %2528 = vmatprep.mubr.bf16.mxu0 0
    %2529 = vmatmul.mubr.bf16.gmra.mrb[0].mxu0 %v2455
    %v2530 = vpop.f32.mrb[0].mxu0
    %v2531 = vadd.f32 0.0, %v2530
    %v2532 = vpop.f32.mrb[0].mxu0
    %v2533 = vpop.f32.mrb[0].mxu0
    %v2534 = vadd.f32 0.0, %v2533
    %v2535 = vpop.f32.mrb[0].mxu0
    %2536 = vdwg.mxu0
    %v2537 = vrcp.pop %v2436
    %v2538 = vrcp.pop %v2441
    %v2539 = vrcp.pop %v2446
    %v2540 = vrcp.pop %v2451
    %v2541 = vmul.f32 %v2523, %v2537
    %v2542 = vmul.f32 %v2526, %v2538
    %v2543 = vmul.f32 %v2531, %v2539
    %v2544 = vmul.f32 %v2534, %v2540
    %v2545 = vpack.c.bf16 %v2542, %v2541
    %v2546 = vpack.c.bf16 %v2544, %v2543
    %s2547 = scalar_lea.vmem %s5, 32
    %v2548 = vld [vmem:[%s2547] sm:$0xf]
    %v2549 = vld [vmem:[%s2547 + $0x4] sm:$0xf]
    %v2550 = vld [vmem:[%s2547 + $0x8] sm:$0xf]
    %v2551 = vld [vmem:[%s2547 + $0xc] sm:$0xf]
    %v2552 = vld [vmem:[%s6 + $0x2] sm:$0x1]
    %v2553 = vlaneseq
    %v2554 = vshrl.u32 %v2553, 7
    %v2555 = vsub.s32 0, %v2554
    %v2556 = vrot.slane %v2552, %v2555
    %v2561 = vunpack.c.l.b16 %v2548
    %v2562 = vunpack.c.l.b16 %v2549
    %v2563 = vunpack.c.l.b16 %v2550
    %v2564 = vunpack.c.l.b16 %v2551
    %v2565 = vpack.c.b16 %v2562, %v2561
    %v2566 = vpack.c.b16 %v2564, %v2563
    %v2570 = vsel %vm248, %v2545, 0
    %v2573 = vsel %vm248, %v2546, 0
    %2575 = vmatprep.subr.bf16.mxu0 0
    %2576 = vmatpush1.bf16.msra.mxu0 %v2565
    %2577 = vmatprep.subr.bf16.mxu0 0
    %2578 = vmatpush1.bf16.msra.mxu0 %v2566
    %2579 = vmatprep.subr.bf16.mxu0 0
    %2580 = vmatpush1.bf16.msra.mxu0 0
    %2581 = vmatprep.subr.bf16.mxu0 0
    %2582 = vmatpush1.bf16.msra.mxu0 0
    %2583 = vmatprep.subr.bf16.mxu0 0
    %2584 = vmatpush1.bf16.msra.mxu0 0
    %2585 = vmatprep.subr.bf16.mxu0 0
    %2586 = vmatpush1.bf16.msra.mxu0 0
    %2587 = vmatprep.subr.bf16.mxu0 0
    %2588 = vmatpush1.bf16.msra.mxu0 0
    %2589 = vmatprep.subr.bf16.mxu0 0
    %2590 = vmatpush1.bf16.msra.mxu0 0
    %2591 = vmatprep.subr.bf16.mxu0 0
    %2592 = vmatpush1.bf16.msra.mxu0 0
    %2593 = vmatprep.subr.bf16.mxu0 0
    %2594 = vmatpush1.bf16.msra.mxu0 0
    %2595 = vmatprep.subr.bf16.mxu0 0
    %2596 = vmatpush1.bf16.msra.mxu0 0
    %2597 = vmatprep.subr.bf16.mxu0 0
    %2598 = vmatpush1.bf16.msra.mxu0 0
    %2599 = vmatprep.subr.bf16.mxu0 0
    %2600 = vmatpush1.bf16.msra.mxu0 0
    %2601 = vmatprep.subr.bf16.mxu0 0
    %2602 = vmatpush1.bf16.msra.mxu0 0
    %2603 = vmatprep.subr.bf16.mxu0 0
    %2604 = vmatpush1.bf16.msra.mxu0 0
    %2605 = vmatprep.subr.bf16.mxu0 0
    %2606 = vmatpush1.bf16.msra.mxu0 0
    %2607 = vmatprep.mubr.bf16.mxu0 0
    %2608 = vmatmul.mubr.bf16.gmra.mrb[0].mxu0 %v2570
    %v2609 = vpop.f32.mrb[0].mxu0
    %v2610 = vadd.f32 %v2556, %v2609
    %v2611 = vpop.f32.mrb[0].mxu0
    %v2612 = vpop.f32.mrb[0].mxu0
    %v2613 = vadd.f32 %v2556, %v2612
    %v2614 = vpop.f32.mrb[0].mxu0
    %2615 = vmatprep.mubr.bf16.mxu0 0
    %2616 = vmatmul.mubr.bf16.gmra.mrb[0].mxu0 %v2573
    %v2617 = vpop.f32.mrb[0].mxu0
    %v2618 = vadd.f32 %v2556, %v2617
    %v2619 = vpop.f32.mrb[0].mxu0
    %v2620 = vpop.f32.mrb[0].mxu0
    %v2621 = vadd.f32 %v2556, %v2620
    %v2622 = vpop.f32.mrb[0].mxu0
    %2623 = vdwg.mxu0
    %v2624 = vadd.f32 %v2113, %v2610
    %v2625 = vadd.f32 %v2114, %v2613
    %v2626 = vadd.f32 %v2115, %v2618
    %v2627 = vadd.f32 %v2116, %v2621
    %v2628 = vld [vmem:[%s7 + $0x2] sm:$0x1]
    %v2629 = vld [vmem:[%s8 + $0x2] sm:$0x1]
    %v2630 = vsel %vm248, %v2624, 0.0
    %2631 = vadd.xlane.f32.xlu0 %v2630
    %v2632 = vpop.xlane.xlu0 %2631
    %v2633 = vsel %vm248, %v2625, 0.0
    %2634 = vadd.xlane.f32.xlu0 %v2633
    %v2635 = vpop.xlane.xlu0 %2634
    %v2636 = vsel %vm248, %v2626, 0.0
    %2637 = vadd.xlane.f32.xlu0 %v2636
    %v2638 = vpop.xlane.xlu0 %2637
    %v2639 = vsel %vm248, %v2627, 0.0
    %2640 = vadd.xlane.f32.xlu0 %v2639
    %v2641 = vpop.xlane.xlu0 %2640
    %v2642 = vmul.f32 %v2632, %v861
    %v2643 = vmul.f32 %v2635, %v861
    %v2644 = vmul.f32 %v2638, %v861
    %v2645 = vmul.f32 %v2641, %v861
    %v2646 = vsub.f32 %v2624, %v2642
    %v2647 = vsub.f32 %v2625, %v2643
    %v2648 = vsub.f32 %v2626, %v2644
    %v2649 = vsub.f32 %v2627, %v2645
    %v2650 = vmul.f32 %v2646, %v2646
    %v2651 = vmul.f32 %v2647, %v2647
    %v2652 = vmul.f32 %v2648, %v2648
    %v2653 = vmul.f32 %v2649, %v2649
    %v2654 = vsel %vm248, %v2650, 0.0
    %2655 = vadd.xlane.f32.xlu0 %v2654
    %v2656 = vpop.xlane.xlu0 %2655
    %v2657 = vsel %vm248, %v2651, 0.0
    %2658 = vadd.xlane.f32.xlu0 %v2657
    %v2659 = vpop.xlane.xlu0 %2658
    %v2660 = vsel %vm248, %v2652, 0.0
    %2661 = vadd.xlane.f32.xlu0 %v2660
    %v2662 = vpop.xlane.xlu0 %2661
    %v2663 = vsel %vm248, %v2653, 0.0
    %2664 = vadd.xlane.f32.xlu0 %v2663
    %v2665 = vpop.xlane.xlu0 %2664
    %v2666 = vmul.f32 %v2656, %v861
    %v2667 = vmul.f32 %v2659, %v861
    %v2668 = vmul.f32 %v2662, %v861
    %v2669 = vmul.f32 %v2665, %v861
    %v2670 = vadd.f32 %v2666, 1e-12
    %v2671 = vadd.f32 %v2667, 1e-12
    %v2672 = vadd.f32 %v2668, 1e-12
    %v2673 = vadd.f32 %v2669, 1e-12
    %v2674 = vrsqrt.pop %v2670
    %v2675 = vrsqrt.pop %v2671
    %v2676 = vrsqrt.pop %v2672
    %v2677 = vrsqrt.pop %v2673
    %v2678 = vmul.f32 %v2646, %v2674
    %v2679 = vmul.f32 %v2647, %v2675
    %v2680 = vmul.f32 %v2648, %v2676
    %v2681 = vmul.f32 %v2649, %v2677
    %v2682 = vlaneseq
    %v2683 = vshrl.u32 %v2682, 7
    %v2684 = vsub.s32 0, %v2683
    %v2685 = vrot.slane %v2628, %v2684
    %v2686 = vmul.f32 %v2678, %v2685
    %v2687 = vmul.f32 %v2679, %v2685
    %v2688 = vmul.f32 %v2680, %v2685
    %v2689 = vmul.f32 %v2681, %v2685
    %v2690 = vlaneseq
    %v2691 = vshrl.u32 %v2690, 7
    %v2692 = vsub.s32 0, %v2691
    %v2693 = vrot.slane %v2629, %v2692
    %v2694 = vadd.f32 %v2686, %v2693
    %v2695 = vadd.f32 %v2687, %v2693
    %v2696 = vadd.f32 %v2688, %v2693
    %v2697 = vadd.f32 %v2689, %v2693
    %v2698 = vpack.c.bf16 %v2695, %v2694
    %v2699 = vpack.c.bf16 %v2697, %v2696
    %s2700 = scalar_lea.vmem %s9, 32
    %v2701 = vld [vmem:[%s2700] sm:$0xf]
    %v2702 = vld [vmem:[%s2700 + $0x4] sm:$0xf]
    %v2703 = vld [vmem:[%s2700 + $0x8] sm:$0xf]
    %v2704 = vld [vmem:[%s2700 + $0xc] sm:$0xf]
    %v2705 = vld [vmem:[#allocation8 + $0x2] sm:$0x1]
    %v2706 = vlaneseq
    %v2707 = vshrl.u32 %v2706, 7
    %v2708 = vsub.s32 0, %v2707
    %v2709 = vrot.slane %v2705, %v2708
    %v2714 = vunpack.c.l.b16 %v2701
    %v2715 = vunpack.c.l.b16 %v2702
    %v2716 = vunpack.c.l.b16 %v2703
    %v2717 = vunpack.c.l.b16 %v2704
    %v2718 = vpack.c.b16 %v2715, %v2714
    %v2719 = vpack.c.b16 %v2717, %v2716
    %v2723 = vsel %vm248, %v2698, 0
    %v2726 = vsel %vm248, %v2699, 0
    %2728 = vmatprep.subr.bf16.mxu0 0
    %2729 = vmatpush1.bf16.msra.mxu0 %v2718
    %2730 = vmatprep.subr.bf16.mxu0 0
    %2731 = vmatpush1.bf16.msra.mxu0 %v2719
    %2732 = vmatprep.subr.bf16.mxu0 0
    %2733 = vmatpush1.bf16.msra.mxu0 0
    %2734 = vmatprep.subr.bf16.mxu0 0
    %2735 = vmatpush1.bf16.msra.mxu0 0
    %2736 = vmatprep.subr.bf16.mxu0 0
    %2737 = vmatpush1.bf16.msra.mxu0 0
    %2738 = vmatprep.subr.bf16.mxu0 0
    %2739 = vmatpush1.bf16.msra.mxu0 0
    %2740 = vmatprep.subr.bf16.mxu0 0
    %2741 = vmatpush1.bf16.msra.mxu0 0
    %2742 = vmatprep.subr.bf16.mxu0 0
    %2743 = vmatpush1.bf16.msra.mxu0 0
    %2744 = vmatprep.subr.bf16.mxu0 0
    %2745 = vmatpush1.bf16.msra.mxu0 0
    %2746 = vmatprep.subr.bf16.mxu0 0
    %2747 = vmatpush1.bf16.msra.mxu0 0
    %2748 = vmatprep.subr.bf16.mxu0 0
    %2749 = vmatpush1.bf16.msra.mxu0 0
    %2750 = vmatprep.subr.bf16.mxu0 0
    %2751 = vmatpush1.bf16.msra.mxu0 0
    %2752 = vmatprep.subr.bf16.mxu0 0
    %2753 = vmatpush1.bf16.msra.mxu0 0
    %2754 = vmatprep.subr.bf16.mxu0 0
    %2755 = vmatpush1.bf16.msra.mxu0 0
    %2756 = vmatprep.subr.bf16.mxu0 0
    %2757 = vmatpush1.bf16.msra.mxu0 0
    %2758 = vmatprep.subr.bf16.mxu0 0
    %2759 = vmatpush1.bf16.msra.mxu0 0
    %2760 = vmatprep.mubr.bf16.mxu0 0
    %2761 = vmatmul.mubr.bf16.gmra.mrb[0].mxu0 %v2723
    %v2762 = vpop.f32.mrb[0].mxu0
    %v2763 = vadd.f32 %v2709, %v2762
    %v2764 = vpop.f32.mrb[0].mxu0
    %v2765 = vpop.f32.mrb[0].mxu0
    %v2766 = vadd.f32 %v2709, %v2765
    %v2767 = vpop.f32.mrb[0].mxu0
    %2768 = vmatprep.mubr.bf16.mxu0 0
    %2769 = vmatmul.mubr.bf16.gmra.mrb[0].mxu0 %v2726
    %v2770 = vpop.f32.mrb[0].mxu0
    %v2771 = vadd.f32 %v2709, %v2770
    %v2772 = vpop.f32.mrb[0].mxu0
    %v2773 = vpop.f32.mrb[0].mxu0
    %v2774 = vadd.f32 %v2709, %v2773
    %v2775 = vpop.f32.mrb[0].mxu0
    %2776 = vdwg.mxu0
    %v2777 = vmul.f32 %v2763, %v2763
    %v2778 = vmul.f32 %v2766, %v2766
    %v2779 = vmul.f32 %v2771, %v2771
    %v2780 = vmul.f32 %v2774, %v2774
    %v2781 = vmul.f32 %v2763, %v2777
    %v2782 = vmul.f32 %v2766, %v2778
    %v2783 = vmul.f32 %v2771, %v2779
    %v2784 = vmul.f32 %v2774, %v2780
    %v2785 = vmul.f32 %v2781, 0.044715
    %v2786 = vmul.f32 %v2782, 0.044715
    %v2787 = vmul.f32 %v2783, 0.044715
    %v2788 = vmul.f32 %v2784, 0.044715
    %v2789 = vadd.f32 %v2763, %v2785
    %v2790 = vadd.f32 %v2766, %v2786
    %v2791 = vadd.f32 %v2771, %v2787
    %v2792 = vadd.f32 %v2774, %v2788
    %v2793 = vmul.f32 %v2789, 0.7978846
    %v2794 = vmul.f32 %v2790, 0.7978846
    %v2795 = vmul.f32 %v2791, 0.7978846
    %v2796 = vmul.f32 %v2792, 0.7978846
    %v2797 = vtanh.pop %v2793
    %v2798 = vtanh.pop %v2794
    %v2799 = vtanh.pop %v2795
    %v2800 = vtanh.pop %v2796
    %v2801 = vadd.f32 %v2797, 1.0
    %v2802 = vadd.f32 %v2798, 1.0
    %v2803 = vadd.f32 %v2799, 1.0
    %v2804 = vadd.f32 %v2800, 1.0
    %v2805 = vmul.f32 %v2801, 0.5
    %v2806 = vmul.f32 %v2802, 0.5
    %v2807 = vmul.f32 %v2803, 0.5
    %v2808 = vmul.f32 %v2804, 0.5
    %v2809 = vmul.f32 %v2763, %v2805
    %v2810 = vmul.f32 %v2766, %v2806
    %v2811 = vmul.f32 %v2771, %v2807
    %v2812 = vmul.f32 %v2774, %v2808
    %v2813 = vpack.c.bf16 %v2810, %v2809
    %v2814 = vpack.c.bf16 %v2812, %v2811
    %s2815 = scalar_lea.vmem %s11, 128
    %v2816 = vld [vmem:[%s2815] sm:$0xf]
    %v2817 = vld [vmem:[%s2815 + $0x4] sm:$0xf]
    %v2818 = vld [vmem:[%s2815 + $0x8] sm:$0xf]
    %v2819 = vld [vmem:[%s2815 + $0xc] sm:$0xf]
    %v2820 = vld [vmem:[%s2815 + $0x10] sm:$0xf]
    %v2821 = vld [vmem:[%s2815 + $0x14] sm:$0xf]
    %v2822 = vld [vmem:[%s2815 + $0x18] sm:$0xf]
    %v2823 = vld [vmem:[%s2815 + $0x1c] sm:$0xf]
    %v2824 = vld [vmem:[%s2815 + $0x20] sm:$0xf]
    %v2825 = vld [vmem:[%s2815 + $0x24] sm:$0xf]
    %v2826 = vld [vmem:[%s2815 + $0x28] sm:$0xf]
    %v2827 = vld [vmem:[%s2815 + $0x2c] sm:$0xf]
    %v2828 = vld [vmem:[%s2815 + $0x30] sm:$0xf]
    %v2829 = vld [vmem:[%s2815 + $0x34] sm:$0xf]
    %v2830 = vld [vmem:[%s2815 + $0x38] sm:$0xf]
    %v2831 = vld [vmem:[%s2815 + $0x3c] sm:$0xf]
    %v2832 = vld [vmem:[#allocation9 + $0x2] sm:$0x1]
    %v2833 = vlaneseq
    %v2834 = vshrl.u32 %v2833, 7
    %v2835 = vsub.s32 0, %v2834
    %v2836 = vrot.slane %v2832, %v2835
    %v2853 = vunpack.c.l.b16 %v2816
    %v2854 = vunpack.c.l.b16 %v2817
    %v2855 = vunpack.c.l.b16 %v2818
    %v2856 = vunpack.c.l.b16 %v2819
    %v2857 = vunpack.c.l.b16 %v2820
    %v2858 = vunpack.c.l.b16 %v2821
    %v2859 = vunpack.c.l.b16 %v2822
    %v2860 = vunpack.c.l.b16 %v2823
    %v2861 = vunpack.c.l.b16 %v2824
    %v2862 = vunpack.c.l.b16 %v2825
    %v2863 = vunpack.c.l.b16 %v2826
    %v2864 = vunpack.c.l.b16 %v2827
    %v2865 = vunpack.c.l.b16 %v2828
    %v2866 = vunpack.c.l.b16 %v2829
    %v2867 = vunpack.c.l.b16 %v2830
    %v2868 = vunpack.c.l.b16 %v2831
    %v2869 = vpack.c.b16 %v2854, %v2853
    %v2870 = vpack.c.b16 %v2856, %v2855
    %v2871 = vpack.c.b16 %v2858, %v2857
    %v2872 = vpack.c.b16 %v2860, %v2859
    %v2873 = vpack.c.b16 %v2862, %v2861
    %v2874 = vpack.c.b16 %v2864, %v2863
    %v2875 = vpack.c.b16 %v2866, %v2865
    %v2876 = vpack.c.b16 %v2868, %v2867
    %2885 = vmatprep.subr.bf16.mxu0 0
    %2886 = vmatpush1.bf16.msra.mxu0 %v2869
    %2887 = vmatprep.subr.bf16.mxu0 0
    %2888 = vmatpush1.bf16.msra.mxu0 %v2870
    %2889 = vmatprep.subr.bf16.mxu0 0
    %2890 = vmatpush1.bf16.msra.mxu0 %v2871
    %2891 = vmatprep.subr.bf16.mxu0 0
    %2892 = vmatpush1.bf16.msra.mxu0 %v2872
    %2893 = vmatprep.subr.bf16.mxu0 0
    %2894 = vmatpush1.bf16.msra.mxu0 %v2873
    %2895 = vmatprep.subr.bf16.mxu0 0
    %2896 = vmatpush1.bf16.msra.mxu0 %v2874
    %2897 = vmatprep.subr.bf16.mxu0 0
    %2898 = vmatpush1.bf16.msra.mxu0 %v2875
    %2899 = vmatprep.subr.bf16.mxu0 0
    %2900 = vmatpush1.bf16.msra.mxu0 %v2876
    %2901 = vmatprep.subr.bf16.mxu0 0
    %2902 = vmatpush1.bf16.msra.mxu0 0
    %2903 = vmatprep.subr.bf16.mxu0 0
    %2904 = vmatpush1.bf16.msra.mxu0 0
    %2905 = vmatprep.subr.bf16.mxu0 0
    %2906 = vmatpush1.bf16.msra.mxu0 0
    %2907 = vmatprep.subr.bf16.mxu0 0
    %2908 = vmatpush1.bf16.msra.mxu0 0
    %2909 = vmatprep.subr.bf16.mxu0 0
    %2910 = vmatpush1.bf16.msra.mxu0 0
    %2911 = vmatprep.subr.bf16.mxu0 0
    %2912 = vmatpush1.bf16.msra.mxu0 0
    %2913 = vmatprep.subr.bf16.mxu0 0
    %2914 = vmatpush1.bf16.msra.mxu0 0
    %2915 = vmatprep.subr.bf16.mxu0 0
    %2916 = vmatpush1.bf16.msra.mxu0 0
    %2917 = vmatprep.mubr.bf16.mxu0 0
    %2918 = vmatmul.mubr.bf16.gmra.mrb[0].mxu0 %v2813
    %v2919 = vpop.f32.mrb[0].mxu0
    %v2920 = vadd.f32 %v2836, %v2919
    %v2921 = vpop.f32.mrb[0].mxu0
    %v2922 = vpop.f32.mrb[0].mxu0
    %v2923 = vadd.f32 %v2836, %v2922
    %v2924 = vpop.f32.mrb[0].mxu0
    %2925 = vmatprep.mubr.bf16.mxu0 0
    %2926 = vmatmul.mubr.bf16.gmra.mrb[0].mxu0 %v2814
    %v2927 = vpop.f32.mrb[0].mxu0
    %v2928 = vadd.f32 %v2836, %v2927
    %v2929 = vpop.f32.mrb[0].mxu0
    %v2930 = vpop.f32.mrb[0].mxu0
    %v2931 = vadd.f32 %v2836, %v2930
    %v2932 = vpop.f32.mrb[0].mxu0
    %2933 = vdwg.mxu0
    %v2934 = vadd.f32 %v2694, %v2920
    %v2935 = vadd.f32 %v2695, %v2923
    %v2936 = vadd.f32 %v2696, %v2928
    %v2937 = vadd.f32 %v2697, %v2931
    %v2938 = vld [vmem:[#allocation11 + $0x2] sm:$0x1]
    %v2939 = vld [vmem:[#allocation12 + $0x2] sm:$0x1]
    %v2940 = vsel %vm248, %v2934, 0.0
    %2941 = vadd.xlane.f32.xlu0 %v2940
    %v2942 = vpop.xlane.xlu0 %2941
    %v2943 = vsel %vm248, %v2935, 0.0
    %2944 = vadd.xlane.f32.xlu0 %v2943
    %v2945 = vpop.xlane.xlu0 %2944
    %v2946 = vsel %vm248, %v2936, 0.0
    %2947 = vadd.xlane.f32.xlu0 %v2946
    %v2948 = vpop.xlane.xlu0 %2947
    %v2949 = vsel %vm248, %v2937, 0.0
    %2950 = vadd.xlane.f32.xlu0 %v2949
    %v2951 = vpop.xlane.xlu0 %2950
    %v2952 = vmul.f32 %v2942, %v861
    %v2953 = vmul.f32 %v2945, %v861
    %v2954 = vmul.f32 %v2948, %v861
    %v2955 = vmul.f32 %v2951, %v861
    %v2956 = vsub.f32 %v2934, %v2952
    %v2957 = vsub.f32 %v2935, %v2953
    %v2958 = vsub.f32 %v2936, %v2954
    %v2959 = vsub.f32 %v2937, %v2955
    %v2960 = vmul.f32 %v2956, %v2956
    %v2961 = vmul.f32 %v2957, %v2957
    %v2962 = vmul.f32 %v2958, %v2958
    %v2963 = vmul.f32 %v2959, %v2959
    %v2964 = vsel %vm248, %v2960, 0.0
    %2965 = vadd.xlane.f32.xlu0 %v2964
    %v2966 = vpop.xlane.xlu0 %2965
    %v2967 = vsel %vm248, %v2961, 0.0
    %2968 = vadd.xlane.f32.xlu0 %v2967
    %v2969 = vpop.xlane.xlu0 %2968
    %v2970 = vsel %vm248, %v2962, 0.0
    %2971 = vadd.xlane.f32.xlu0 %v2970
    %v2972 = vpop.xlane.xlu0 %2971
    %v2973 = vsel %vm248, %v2963, 0.0
    %2974 = vadd.xlane.f32.xlu0 %v2973
    %v2975 = vpop.xlane.xlu0 %2974
    %v2976 = vmul.f32 %v2966, %v861
    %v2977 = vmul.f32 %v2969, %v861
    %v2978 = vmul.f32 %v2972, %v861
    %v2979 = vmul.f32 %v2975, %v861
    %v2980 = vadd.f32 %v2976, 1e-12
    %v2981 = vadd.f32 %v2977, 1e-12
    %v2982 = vadd.f32 %v2978, 1e-12
    %v2983 = vadd.f32 %v2979, 1e-12
    %v2984 = vrsqrt.pop %v2980
    %v2985 = vrsqrt.pop %v2981
    %v2986 = vrsqrt.pop %v2982
    %v2987 = vrsqrt.pop %v2983
    %v2988 = vmul.f32 %v2956, %v2984
    %v2989 = vmul.f32 %v2957, %v2985
    %v2990 = vmul.f32 %v2958, %v2986
    %v2991 = vmul.f32 %v2959, %v2987
    %v2992 = vlaneseq
    %v2993 = vshrl.u32 %v2992, 7
    %v2994 = vsub.s32 0, %v2993
    %v2995 = vrot.slane %v2938, %v2994
    %v2996 = vmul.f32 %v2988, %v2995
    %v2997 = vmul.f32 %v2989, %v2995
    %v2998 = vmul.f32 %v2990, %v2995
    %v2999 = vmul.f32 %v2991, %v2995
    %v3000 = vlaneseq
    %v3001 = vshrl.u32 %v3000, 7
    %v3002 = vsub.s32 0, %v3001
    %v3003 = vrot.slane %v2939, %v3002
    %v3004 = vadd.f32 %v2996, %v3003
    %v3005 = vadd.f32 %v2997, %v3003
    %v3006 = vadd.f32 %v2998, %v3003
    %v3007 = vadd.f32 %v2999, %v3003
    %3012 = vrot.lane.b32.xlu0 %v2113, 32
    %v3013 = vpop.permute.xlu0 %3012
    %3014 = vrot.lane.b32.xlu0 %v2114, 32
    %v3015 = vpop.permute.xlu0 %3014
    %3016 = vrot.lane.b32.xlu0 %v2115, 32
    %v3017 = vpop.permute.xlu0 %3016
    %3018 = vrot.lane.b32.xlu0 %v2116, 32
    %v3019 = vpop.permute.xlu0 %3018
    %3028 = vrot.lane.b32.xlu0 %v1222, 64
    %v3029 = vpop.permute.xlu0 %3028
    %3030 = vrot.lane.b32.xlu0 %v1223, 64
    %v3031 = vpop.permute.xlu0 %3030
    %3032 = vrot.lane.b32.xlu0 %v1224, 64
    %v3033 = vpop.permute.xlu0 %3032
    %3034 = vrot.lane.b32.xlu0 %v1225, 64
    %v3035 = vpop.permute.xlu0 %3034
    %v3040 = vsel %vm248, %v3004, %v3013
    %v3041 = vsel %vm248, %v3005, %v3015
    %v3042 = vsel %vm248, %v3006, %v3017
    %v3043 = vsel %vm248, %v3007, %v3019
    %vm3044 = vcmask 523264
    %v3045 = vsel %vm3044, %v3040, %v3029
    %v3046 = vsel %vm3044, %v3041, %v3031
    %v3047 = vsel %vm3044, %v3042, %v3033
    %v3048 = vsel %vm3044, %v3043, %v3035
    %v3049 = vpack.c.bf16 %v3046, %v3045
    %v3050 = vpack.c.bf16 %v3048, %v3047
    %v3051 = vld [vmem:[%s15] sm:$0x1]
    %v3052 = vld [vmem:[#allocation2] sm:$0x1]
    %3054 = vset.pattern.permute.xlu0 0
    %3055 = vperm.xlu0 %3054, %v3052
    %v3056 = vpop.permute.xlu0 %3055
    %v3058 = vlaneseq
    %v3059 = vshrl.u32 %v3058, 7
    %v3060 = vsub.s32 0, %v3059
    %v3061 = vrot.slane %v3056, %v3060
    %vm3062 = vcmask 785408
    %v3064 = vsel %vm3062, %v3051, 0
    %v3067 = vsel %vm3062, %v3049, 0
    %v3070 = vsel %vm3062, %v3050, 0
    %3072 = vmatprep.subr.bf16.mxu0 0
    %3073 = vmatpush1.bf16.xpose.msra.mxu0 %v3067
    %3074 = vmatprep.subr.bf16.mxu0 0
    %3075 = vmatpush1.bf16.xpose.msra.mxu0 %v3070
    %3076 = vmatprep.subr.bf16.mxu0 0
    %3077 = vmatpush1.bf16.xpose.msra.mxu0 0
    %3078 = vmatprep.subr.bf16.mxu0 0
    %3079 = vmatpush1.bf16.xpose.msra.mxu0 0
    %3080 = vmatprep.subr.bf16.mxu0 0
    %3081 = vmatpush1.bf16.xpose.msra.mxu0 0
    %3082 = vmatprep.subr.bf16.mxu0 0
    %3083 = vmatpush1.bf16.xpose.msra.mxu0 0
    %3084 = vmatprep.subr.bf16.mxu0 0
    %3085 = vmatpush1.bf16.xpose.msra.mxu0 0
    %3086 = vmatprep.subr.bf16.mxu0 0
    %3087 = vmatpush1.bf16.xpose.msra.mxu0 0
    %3088 = vmatprep.subr.bf16.mxu0 0
    %3089 = vmatpush1.bf16.xpose.msra.mxu0 0
    %3090 = vmatprep.subr.bf16.mxu0 0
    %3091 = vmatpush1.bf16.xpose.msra.mxu0 0
    %3092 = vmatprep.subr.bf16.mxu0 0
    %3093 = vmatpush1.bf16.xpose.msra.mxu0 0
    %3094 = vmatprep.subr.bf16.mxu0 0
    %3095 = vmatpush1.bf16.xpose.msra.mxu0 0
    %3096 = vmatprep.subr.bf16.mxu0 0
    %3097 = vmatpush1.bf16.xpose.msra.mxu0 0
    %3098 = vmatprep.subr.bf16.mxu0 0
    %3099 = vmatpush1.bf16.xpose.msra.mxu0 0
    %3100 = vmatprep.subr.bf16.mxu0 0
    %3101 = vmatpush1.bf16.xpose.msra.mxu0 0
    %3102 = vmatprep.subr.bf16.mxu0 0
    %3103 = vmatpush1.bf16.xpose.msra.mxu0 0
    %3104 = vmatprep.mubr.bf16.mxu0 0
    %3105 = vmatmul.mubr.bf16.gmra.mrb[0].mxu0 %v3064
    %v3106 = vpop.f32.mrb[0].mxu0
    %v3107 = vadd.f32 %v3061, %v3106
    %v3108 = vpop.f32.mrb[0].mxu0
    %v3109 = vpop.f32.mrb[0].mxu0
    %v3110 = vpop.f32.mrb[0].mxu0
    %3111 = vdwg.mxu0
    %v3112 = vld [vmem:[%s17] sm:$0x3]
    %vm3113 = vcmp.gt.f32.partialorder %v3112, 0.5
    %v3114 = vlaneseq
    %v3115 = vshrl.u32 %v3114, 7
    %v3116 = vsub.s32 0, %v3115
    %v3117 = vrot.slane %v3107, %v3116
    %v3118 = vsel %vm3113, %v3117, -1e+30
    %v3119 = vld [vmem:[#allocation14] sm:$0x3]
    %vm3120 = vcmp.gt.f32.partialorder %v3119, 0.5
    %v3121 = vsel %vm3120, %v3117, -1e+30
    %vm3122 = vcmask 254976
    %v3123 = vsel %vm3122, %v3118, -inf
    %3124 = vmax.xlane.f32.xlu0 %v3123
    %v3125 = vpop.xlane.xlu0 %3124
    %v3126 = vsub.f32 %v3118, %v3125
    %v3127 = vmul.f32 %v3126, 1.442695
    %v3128 = vpow.pop %v3127
    %v3129 = vsel %vm3122, %v3128, 0.0
    %3130 = vadd.xlane.f32.xlu0 %v3129
    %v3131 = vpop.xlane.xlu0 %3130
    %v3132 = vrcp.pop %v3131
    %v3133 = vmul.f32 %v3128, %v3132
    %v3134 = vpack.c.bf16 %v3133, %v3133
    %v3135 = vsel %vm3122, %v3121, -inf
    %3136 = vmax.xlane.f32.xlu0 %v3135
    %v3137 = vpop.xlane.xlu0 %3136
    %v3138 = vsub.f32 %v3121, %v3137
    %v3139 = vmul.f32 %v3138, 1.442695
    %v3140 = vpow.pop %v3139
    %v3141 = vsel %vm3122, %v3140, 0.0
    %3142 = vadd.xlane.f32.xlu0 %v3141
    %v3143 = vpop.xlane.xlu0 %3142
    %v3144 = vrcp.pop %v3143
    %v3145 = vmul.f32 %v3140, %v3144
    %v3146 = vpack.c.bf16 %v3145, %v3145
    %v3148 = vsel %vm248, %v3134, 0
    %3150 = vmatprep.subr.bf16.mxu0 0
    %3151 = vmatpush1.bf16.msra.mxu0 %v3049
    %3152 = vmatprep.subr.bf16.mxu0 0
    %3153 = vmatpush1.bf16.msra.mxu0 %v3050
    %3154 = vmatprep.subr.bf16.mxu0 0
    %3155 = vmatpush1.bf16.msra.mxu0 0
    %3156 = vmatprep.subr.bf16.mxu0 0
    %3157 = vmatpush1.bf16.msra.mxu0 0
    %3158 = vmatprep.subr.bf16.mxu0 0
    %3159 = vmatpush1.bf16.msra.mxu0 0
    %3160 = vmatprep.subr.bf16.mxu0 0
    %3161 = vmatpush1.bf16.msra.mxu0 0
    %3162 = vmatprep.subr.bf16.mxu0 0
    %3163 = vmatpush1.bf16.msra.mxu0 0
    %3164 = vmatprep.subr.bf16.mxu0 0
    %3165 = vmatpush1.bf16.msra.mxu0 0
    %3166 = vmatprep.subr.bf16.mxu0 0
    %3167 = vmatpush1.bf16.msra.mxu0 0
    %3168 = vmatprep.subr.bf16.mxu0 0
    %3169 = vmatpush1.bf16.msra.mxu0 0
    %3170 = vmatprep.subr.bf16.mxu0 0
    %3171 = vmatpush1.bf16.msra.mxu0 0
    %3172 = vmatprep.subr.bf16.mxu0 0
    %3173 = vmatpush1.bf16.msra.mxu0 0
    %3174 = vmatprep.subr.bf16.mxu0 0
    %3175 = vmatpush1.bf16.msra.mxu0 0
    %3176 = vmatprep.subr.bf16.mxu0 0
    %3177 = vmatpush1.bf16.msra.mxu0 0
    %3178 = vmatprep.subr.bf16.mxu0 0
    %3179 = vmatpush1.bf16.msra.mxu0 0
    %3180 = vmatprep.subr.bf16.mxu0 0
    %3181 = vmatpush1.bf16.msra.mxu0 0
    %3182 = vmatprep.mubr.bf16.mxu0 0
    %3183 = vmatmul.mubr.bf16.gmra.mrb[0].mxu0 %v3148
    %v3184 = vpop.f32.mrb[0].mxu0
    %v3185 = vadd.f32 0.0, %v3184
    %v3186 = vpop.f32.mrb[0].mxu0
    %v3187 = vpop.f32.mrb[0].mxu0
    %v3188 = vpop.f32.mrb[0].mxu0
    %3189 = vdwg.mxu0
    %v3191 = vsel %vm248, %v3146, 0
    %3193 = vmatprep.subr.bf16.mxu0 0
    %3194 = vmatpush1.bf16.msra.mxu0 %v3049
    %3195 = vmatprep.subr.bf16.mxu0 0
    %3196 = vmatpush1.bf16.msra.mxu0 %v3050
    %3197 = vmatprep.subr.bf16.mxu0 0
    %3198 = vmatpush1.bf16.msra.mxu0 0
    %3199 = vmatprep.subr.bf16.mxu0 0
    %3200 = vmatpush1.bf16.msra.mxu0 0
    %3201 = vmatprep.subr.bf16.mxu0 0
    %3202 = vmatpush1.bf16.msra.mxu0 0
    %3203 = vmatprep.subr.bf16.mxu0 0
    %3204 = vmatpush1.bf16.msra.mxu0 0
    %3205 = vmatprep.subr.bf16.mxu0 0
    %3206 = vmatpush1.bf16.msra.mxu0 0
    %3207 = vmatprep.subr.bf16.mxu0 0
    %3208 = vmatpush1.bf16.msra.mxu0 0
    %3209 = vmatprep.subr.bf16.mxu0 0
    %3210 = vmatpush1.bf16.msra.mxu0 0
    %3211 = vmatprep.subr.bf16.mxu0 0
    %3212 = vmatpush1.bf16.msra.mxu0 0
    %3213 = vmatprep.subr.bf16.mxu0 0
    %3214 = vmatpush1.bf16.msra.mxu0 0
    %3215 = vmatprep.subr.bf16.mxu0 0
    %3216 = vmatpush1.bf16.msra.mxu0 0
    %3217 = vmatprep.subr.bf16.mxu0 0
    %3218 = vmatpush1.bf16.msra.mxu0 0
    %3219 = vmatprep.subr.bf16.mxu0 0
    %3220 = vmatpush1.bf16.msra.mxu0 0
    %3221 = vmatprep.subr.bf16.mxu0 0
    %3222 = vmatpush1.bf16.msra.mxu0 0
    %3223 = vmatprep.subr.bf16.mxu0 0
    %3224 = vmatpush1.bf16.msra.mxu0 0
    %3225 = vmatprep.mubr.bf16.mxu0 0
    %3226 = vmatmul.mubr.bf16.gmra.mrb[0].mxu0 %v3191
    %v3227 = vpop.f32.mrb[0].mxu0
    %v3228 = vadd.f32 0.0, %v3227
    %v3229 = vpop.f32.mrb[0].mxu0
    %v3230 = vpop.f32.mrb[0].mxu0
    %v3231 = vpop.f32.mrb[0].mxu0
    %3232 = vdwg.mxu0
    %v3233 = vld [vmem:[#allocation15] sm:$0x1]
    %v3235 = vsel %vm248, %v3233, 0
    %3237 = vmatprep.subr.bf16.mxu0 0
    %3238 = vmatpush1.bf16.msra.mxu0 %v3049
    %3239 = vmatprep.subr.bf16.mxu0 0
    %3240 = vmatpush1.bf16.msra.mxu0 %v3050
    %3241 = vmatprep.subr.bf16.mxu0 0
    %3242 = vmatpush1.bf16.msra.mxu0 0
    %3243 = vmatprep.subr.bf16.mxu0 0
    %3244 = vmatpush1.bf16.msra.mxu0 0
    %3245 = vmatprep.subr.bf16.mxu0 0
    %3246 = vmatpush1.bf16.msra.mxu0 0
    %3247 = vmatprep.subr.bf16.mxu0 0
    %3248 = vmatpush1.bf16.msra.mxu0 0
    %3249 = vmatprep.subr.bf16.mxu0 0
    %3250 = vmatpush1.bf16.msra.mxu0 0
    %3251 = vmatprep.subr.bf16.mxu0 0
    %3252 = vmatpush1.bf16.msra.mxu0 0
    %3253 = vmatprep.subr.bf16.mxu0 0
    %3254 = vmatpush1.bf16.msra.mxu0 0
    %3255 = vmatprep.subr.bf16.mxu0 0
    %3256 = vmatpush1.bf16.msra.mxu0 0
    %3257 = vmatprep.subr.bf16.mxu0 0
    %3258 = vmatpush1.bf16.msra.mxu0 0
    %3259 = vmatprep.subr.bf16.mxu0 0
    %3260 = vmatpush1.bf16.msra.mxu0 0
    %3261 = vmatprep.subr.bf16.mxu0 0
    %3262 = vmatpush1.bf16.msra.mxu0 0
    %3263 = vmatprep.subr.bf16.mxu0 0
    %3264 = vmatpush1.bf16.msra.mxu0 0
    %3265 = vmatprep.subr.bf16.mxu0 0
    %3266 = vmatpush1.bf16.msra.mxu0 0
    %3267 = vmatprep.subr.bf16.mxu0 0
    %3268 = vmatpush1.bf16.msra.mxu0 0
    %3269 = vmatprep.mubr.bf16.mxu0 0
    %3270 = vmatmul.mubr.bf16.gmra.mrb[0].mxu0 %v3235
    %v3271 = vpop.f32.mrb[0].mxu0
    %v3272 = vadd.f32 0.0, %v3271
    %v3273 = vpop.f32.mrb[0].mxu0
    %v3274 = vpop.f32.mrb[0].mxu0
    %v3275 = vpop.f32.mrb[0].mxu0
    %3276 = vdwg.mxu0
    %3278 = vrot.lane.b32.xlu0 %v3228, 96
    %v3279 = vpop.permute.xlu0 %3278
    %3282 = vrot.lane.b32.xlu0 %v3272, 64
    %v3283 = vpop.permute.xlu0 %3282
    %v3285 = vsel %vm3062, %v3185, %v3279
    %v3286 = vsel %vm3044, %v3279, %v3283
    %v3287 = vpack.c.bf16 %v3285, %v3285
    %v3288 = vpack.c.bf16 %v3286, %v3286
    %v3289 = vpack.c.bf16 %v3283, %v3283
    %v3290 = vld [vmem:[%s20] sm:$0xff]
    %v3291 = vld [vmem:[%s20 + $0x8] sm:$0xff]
    %v3292 = vld [vmem:[%s20 + $0x10] sm:$0xff]
    %v3293 = vld [vmem:[%s20 + $0x18] sm:$0xff]
    %v3294 = vld [vmem:[%s20 + $0x20] sm:$0xff]
    %v3295 = vld [vmem:[%s20 + $0x28] sm:$0xff]
    %v3296 = vld [vmem:[%s20 + $0x30] sm:$0xff]
    %v3297 = vld [vmem:[%s20 + $0x38] sm:$0xff]
    %v3298 = vld [vmem:[%s20 + $0x40] sm:$0xff]
    %v3299 = vld [vmem:[%s20 + $0x48] sm:$0xff]
    %v3300 = vld [vmem:[%s20 + $0x50] sm:$0xff]
    %v3301 = vld [vmem:[%s20 + $0x58] sm:$0xff]
    %v3302 = vld [vmem:[%s20 + $0x60] sm:$0xff]
    %v3303 = vld [vmem:[%s20 + $0x68] sm:$0xff]
    %v3304 = vld [vmem:[%s20 + $0x70] sm:$0xff]
    %v3305 = vld [vmem:[%s20 + $0x78] sm:$0xff]
    %v3306 = vld [vmem:[%s20 + $0x80] sm:$0xff]
    %v3307 = vld [vmem:[%s20 + $0x88] sm:$0xff]
    %v3308 = vld [vmem:[%s20 + $0x90] sm:$0xff]
    %v3309 = vld [vmem:[%s20 + $0x98] sm:$0xff]
    %v3310 = vld [vmem:[%s20 + $0xa0] sm:$0xff]
    %v3311 = vld [vmem:[%s20 + $0xa8] sm:$0xff]
    %v3312 = vld [vmem:[%s20 + $0xb0] sm:$0xff]
    %v3313 = vld [vmem:[%s20 + $0xb8] sm:$0xff]
    %v3314 = vld [vmem:[%s20 + $0xc0] sm:$0xff]
    %v3315 = vld [vmem:[%s20 + $0xc8] sm:$0xff]
    %v3316 = vld [vmem:[%s20 + $0xd0] sm:$0xff]
    %v3317 = vld [vmem:[%s20 + $0xd8] sm:$0xff]
    %v3318 = vld [vmem:[%s20 + $0xe0] sm:$0xff]
    %v3319 = vld [vmem:[%s20 + $0xe8] sm:$0xff]
    %v3320 = vld [vmem:[%s20 + $0xf0] sm:$0xff]
    %v3321 = vld [vmem:[%s20 + $0xf8] sm:$0xff]
    %v3322 = vld [vmem:[%s20 + $0x100] sm:$0xff]
    %v3323 = vld [vmem:[%s20 + $0x108] sm:$0xff]
    %v3324 = vld [vmem:[%s20 + $0x110] sm:$0xff]
    %v3325 = vld [vmem:[%s20 + $0x118] sm:$0xff]
    %v3326 = vld [vmem:[%s20 + $0x120] sm:$0xff]
    %v3327 = vld [vmem:[%s20 + $0x128] sm:$0xff]
    %v3328 = vld [vmem:[%s20 + $0x130] sm:$0xff]
    %v3329 = vld [vmem:[%s20 + $0x138] sm:$0xff]
    %v3330 = vld [vmem:[%s20 + $0x140] sm:$0xff]
    %v3331 = vld [vmem:[%s20 + $0x148] sm:$0xff]
    %v3332 = vld [vmem:[%s20 + $0x150] sm:$0xff]
    %v3333 = vld [vmem:[%s20 + $0x158] sm:$0xff]
    %v3334 = vld [vmem:[%s20 + $0x160] sm:$0xff]
    %v3335 = vld [vmem:[%s20 + $0x168] sm:$0xff]
    %v3336 = vld [vmem:[%s20 + $0x170] sm:$0xff]
    %v3337 = vld [vmem:[%s20 + $0x178] sm:$0xff]
    %v3338 = vld [vmem:[%s20 + $0x180] sm:$0xff]
    %v3339 = vld [vmem:[%s20 + $0x188] sm:$0xff]
    %v3340 = vld [vmem:[%s20 + $0x190] sm:$0xff]
    %v3341 = vld [vmem:[%s20 + $0x198] sm:$0xff]
    %v3342 = vld [vmem:[%s20 + $0x1a0] sm:$0xff]
    %v3343 = vld [vmem:[%s20 + $0x1a8] sm:$0xff]
    %v3344 = vld [vmem:[%s20 + $0x1b0] sm:$0xff]
    %v3345 = vld [vmem:[%s20 + $0x1b8] sm:$0xff]
    %v3346 = vld [vmem:[%s20 + $0x1c0] sm:$0xff]
    %v3347 = vld [vmem:[%s20 + $0x1c8] sm:$0xff]
    %v3348 = vld [vmem:[%s20 + $0x1d0] sm:$0xff]
    %v3349 = vld [vmem:[%s20 + $0x1d8] sm:$0xff]
    %v3350 = vld [vmem:[%s20 + $0x1e0] sm:$0xff]
    %v3351 = vld [vmem:[%s20 + $0x1e8] sm:$0xff]
    %v3352 = vld [vmem:[%s20 + $0x1f0] sm:$0xff]
    %v3353 = vld [vmem:[%s20 + $0x1f8] sm:$0xff]
    %v3354 = vld [vmem:[%s20 + $0x200] sm:$0xff]
    %v3355 = vld [vmem:[%s20 + $0x208] sm:$0xff]
    %v3356 = vld [vmem:[%s20 + $0x210] sm:$0xff]
    %v3357 = vld [vmem:[%s20 + $0x218] sm:$0xff]
    %v3358 = vld [vmem:[%s20 + $0x220] sm:$0xff]
    %v3359 = vld [vmem:[%s20 + $0x228] sm:$0xff]
    %v3360 = vld [vmem:[%s20 + $0x230] sm:$0xff]
    %v3361 = vld [vmem:[%s20 + $0x238] sm:$0xff]
    %v3362 = vld [vmem:[#allocation17] sm:$0xf]
    %v3364 = vlaneseq
    %v3365 = vshrl.u32 %v3364, 7
    %v3366 = vsub.s32 0, %v3365
    %v3367 = vrot.slane %v3362, %v3366
    %v3368 = vlaneseq
    %v3369 = vshrl.u32 %v3368, 7
    %v3370 = vsub.s32 1, %v3369
    %v3371 = vrot.slane %v3362, %v3370
    %v3372 = vlaneseq
    %v3373 = vshrl.u32 %v3372, 7
    %v3374 = vsub.s32 2, %v3373
    %v3375 = vrot.slane %v3362, %v3374
    %v3376 = vlaneseq
    %v3377 = vshrl.u32 %v3376, 7
    %v3378 = vsub.s32 3, %v3377
    %v3379 = vrot.slane %v3362, %v3378
    %v3456 = vunpack.c.l.b16 %v3290
    %v3457 = vunpack.c.h.b16 %v3290
    %v3458 = vunpack.c.l.b16 %v3291
    %v3459 = vunpack.c.h.b16 %v3291
    %v3460 = vunpack.c.l.b16 %v3292
    %v3461 = vunpack.c.h.b16 %v3292
    %v3462 = vunpack.c.l.b16 %v3293
    %v3463 = vunpack.c.h.b16 %v3293
    %v3464 = vunpack.c.l.b16 %v3294
    %v3465 = vunpack.c.h.b16 %v3294
    %v3466 = vunpack.c.l.b16 %v3295
    %v3467 = vunpack.c.h.b16 %v3295
    %v3468 = vunpack.c.l.b16 %v3296
    %v3469 = vunpack.c.h.b16 %v3296
    %v3470 = vunpack.c.l.b16 %v3297
    %v3471 = vunpack.c.h.b16 %v3297
    %v3472 = vunpack.c.l.b16 %v3298
    %v3473 = vunpack.c.h.b16 %v3298
    %v3474 = vunpack.c.l.b16 %v3299
    %v3475 = vunpack.c.h.b16 %v3299
    %v3476 = vunpack.c.l.b16 %v3300
    %v3477 = vunpack.c.h.b16 %v3300
    %v3478 = vunpack.c.l.b16 %v3301
    %v3479 = vunpack.c.h.b16 %v3301
    %v3480 = vunpack.c.l.b16 %v3302
    %v3481 = vunpack.c.h.b16 %v3302
    %v3482 = vunpack.c.l.b16 %v3303
    %v3483 = vunpack.c.h.b16 %v3303
    %v3484 = vunpack.c.l.b16 %v3304
    %v3485 = vunpack.c.h.b16 %v3304
    %v3486 = vunpack.c.l.b16 %v3305
    %v3487 = vunpack.c.h.b16 %v3305
    %v3488 = vunpack.c.l.b16 %v3306
    %v3489 = vunpack.c.h.b16 %v3306
    %v3490 = vunpack.c.l.b16 %v3307
    %v3491 = vunpack.c.h.b16 %v3307
    %v3492 = vunpack.c.l.b16 %v3308
    %v3493 = vunpack.c.h.b16 %v3308
    %v3494 = vunpack.c.l.b16 %v3309
    %v3495 = vunpack.c.h.b16 %v3309
    %v3496 = vunpack.c.l.b16 %v3310
    %v3497 = vunpack.c.h.b16 %v3310
    %v3498 = vunpack.c.l.b16 %v3311
    %v3499 = vunpack.c.h.b16 %v3311
    %v3500 = vunpack.c.l.b16 %v3312
    %v3501 = vunpack.c.h.b16 %v3312
    %v3502 = vunpack.c.l.b16 %v3313
    %v3503 = vunpack.c.h.b16 %v3313
    %v3504 = vunpack.c.l.b16 %v3314
    %v3505 = vunpack.c.h.b16 %v3314
    %v3506 = vunpack.c.l.b16 %v3315
    %v3507 = vunpack.c.h.b16 %v3315
    %v3508 = vunpack.c.l.b16 %v3316
    %v3509 = vunpack.c.h.b16 %v3316
    %v3510 = vunpack.c.l.b16 %v3317
    %v3511 = vunpack.c.h.b16 %v3317
    %v3512 = vunpack.c.l.b16 %v3318
    %v3513 = vunpack.c.h.b16 %v3318
    %v3514 = vunpack.c.l.b16 %v3319
    %v3515 = vunpack.c.h.b16 %v3319
    %v3516 = vunpack.c.l.b16 %v3320
    %v3517 = vunpack.c.h.b16 %v3320
    %v3518 = vunpack.c.l.b16 %v3321
    %v3519 = vunpack.c.h.b16 %v3321
    %v3520 = vunpack.c.l.b16 %v3322
    %v3521 = vunpack.c.h.b16 %v3322
    %v3522 = vunpack.c.l.b16 %v3323
    %v3523 = vunpack.c.h.b16 %v3323
    %v3524 = vunpack.c.l.b16 %v3324
    %v3525 = vunpack.c.h.b16 %v3324
    %v3526 = vunpack.c.l.b16 %v3325
    %v3527 = vunpack.c.h.b16 %v3325
    %v3528 = vunpack.c.l.b16 %v3326
    %v3529 = vunpack.c.h.b16 %v3326
    %v3530 = vunpack.c.l.b16 %v3327
    %v3531 = vunpack.c.h.b16 %v3327
    %v3532 = vunpack.c.l.b16 %v3328
    %v3533 = vunpack.c.h.b16 %v3328
    %v3534 = vunpack.c.l.b16 %v3329
    %v3535 = vunpack.c.h.b16 %v3329
    %v3536 = vunpack.c.l.b16 %v3330
    %v3537 = vunpack.c.h.b16 %v3330
    %v3538 = vunpack.c.l.b16 %v3331
    %v3539 = vunpack.c.h.b16 %v3331
    %v3540 = vunpack.c.l.b16 %v3332
    %v3541 = vunpack.c.h.b16 %v3332
    %v3542 = vunpack.c.l.b16 %v3333
    %v3543 = vunpack.c.h.b16 %v3333
    %v3544 = vunpack.c.l.b16 %v3334
    %v3545 = vunpack.c.h.b16 %v3334
    %v3546 = vunpack.c.l.b16 %v3335
    %v3547 = vunpack.c.h.b16 %v3335
    %v3548 = vunpack.c.l.b16 %v3336
    %v3549 = vunpack.c.h.b16 %v3336
    %v3550 = vunpack.c.l.b16 %v3337
    %v3551 = vunpack.c.h.b16 %v3337
    %v3552 = vunpack.c.l.b16 %v3338
    %v3553 = vunpack.c.h.b16 %v3338
    %v3554 = vunpack.c.l.b16 %v3339
    %v3555 = vunpack.c.h.b16 %v3339
    %v3556 = vunpack.c.l.b16 %v3340
    %v3557 = vunpack.c.h.b16 %v3340
    %v3558 = vunpack.c.l.b16 %v3341
    %v3559 = vunpack.c.h.b16 %v3341
    %v3560 = vunpack.c.l.b16 %v3342
    %v3561 = vunpack.c.h.b16 %v3342
    %v3562 = vunpack.c.l.b16 %v3343
    %v3563 = vunpack.c.h.b16 %v3343
    %v3564 = vunpack.c.l.b16 %v3344
    %v3565 = vunpack.c.h.b16 %v3344
    %v3566 = vunpack.c.l.b16 %v3345
    %v3567 = vunpack.c.h.b16 %v3345
    %v3568 = vunpack.c.l.b16 %v3346
    %v3569 = vunpack.c.h.b16 %v3346
    %v3570 = vunpack.c.l.b16 %v3347
    %v3571 = vunpack.c.h.b16 %v3347
    %v3572 = vunpack.c.l.b16 %v3348
    %v3573 = vunpack.c.h.b16 %v3348
    %v3574 = vunpack.c.l.b16 %v3349
    %v3575 = vunpack.c.h.b16 %v3349
    %v3576 = vunpack.c.l.b16 %v3350
    %v3577 = vunpack.c.h.b16 %v3350
    %v3578 = vunpack.c.l.b16 %v3351
    %v3579 = vunpack.c.h.b16 %v3351
    %v3580 = vunpack.c.l.b16 %v3352
    %v3581 = vunpack.c.h.b16 %v3352
    %v3582 = vunpack.c.l.b16 %v3353
    %v3583 = vunpack.c.h.b16 %v3353
    %v3584 = vunpack.c.l.b16 %v3354
    %v3585 = vunpack.c.h.b16 %v3354
    %v3586 = vunpack.c.l.b16 %v3355
    %v3587 = vunpack.c.h.b16 %v3355
    %v3588 = vunpack.c.l.b16 %v3356
    %v3589 = vunpack.c.h.b16 %v3356
    %v3590 = vunpack.c.l.b16 %v3357
    %v3591 = vunpack.c.h.b16 %v3357
    %v3592 = vunpack.c.l.b16 %v3358
    %v3593 = vunpack.c.h.b16 %v3358
    %v3594 = vunpack.c.l.b16 %v3359
    %v3595 = vunpack.c.h.b16 %v3359
    %v3596 = vunpack.c.l.b16 %v3360
    %v3597 = vunpack.c.h.b16 %v3360
    %v3598 = vunpack.c.l.b16 %v3361
    %v3599 = vunpack.c.h.b16 %v3361
    %v3600 = vpack.c.b16 %v3460, %v3456
    %v3601 = vpack.c.b16 %v3461, %v3457
    %v3602 = vpack.c.b16 %v3462, %v3458
    %v3603 = vpack.c.b16 %v3463, %v3459
    %v3604 = vpack.c.b16 %v3468, %v3464
    %v3605 = vpack.c.b16 %v3469, %v3465
    %v3606 = vpack.c.b16 %v3470, %v3466
    %v3607 = vpack.c.b16 %v3471, %v3467
    %v3608 = vpack.c.b16 %v3476, %v3472
    %v3609 = vpack.c.b16 %v3477, %v3473
    %v3610 = vpack.c.b16 %v3478, %v3474
    %v3611 = vpack.c.b16 %v3479, %v3475
    %v3612 = vpack.c.b16 %v3484, %v3480
    %v3613 = vpack.c.b16 %v3485, %v3481
    %v3614 = vpack.c.b16 %v3486, %v3482
    %v3615 = vpack.c.b16 %v3487, %v3483
    %v3616 = vpack.c.b16 %v3492, %v3488
    %v3617 = vpack.c.b16 %v3493, %v3489
    %v3618 = vpack.c.b16 %v3494, %v3490
    %v3619 = vpack.c.b16 %v3495, %v3491
    %v3620 = vpack.c.b16 %v3500, %v3496
    %v3621 = vpack.c.b16 %v3501, %v3497
    %v3622 = vpack.c.b16 %v3502, %v3498
    %v3623 = vpack.c.b16 %v3503, %v3499
    %v3624 = vpack.c.b16 %v3508, %v3504
    %v3625 = vpack.c.b16 %v3509, %v3505
    %v3626 = vpack.c.b16 %v3510, %v3506
    %v3627 = vpack.c.b16 %v3511, %v3507
    %v3628 = vpack.c.b16 %v3516, %v3512
    %v3629 = vpack.c.b16 %v3517, %v3513
    %v3630 = vpack.c.b16 %v3518, %v3514
    %v3631 = vpack.c.b16 %v3519, %v3515
    %v3632 = vpack.c.b16 %v3524, %v3520
    %v3633 = vpack.c.b16 %v3525, %v3521
    %v3634 = vpack.c.b16 %v3526, %v3522
    %v3635 = vpack.c.b16 %v3527, %v3523
    %v3636 = vpack.c.b16 %v3532, %v3528
    %v3637 = vpack.c.b16 %v3533, %v3529
    %v3638 = vpack.c.b16 %v3534, %v3530
    %v3639 = vpack.c.b16 %v3535, %v3531
    %v3640 = vpack.c.b16 %v3540, %v3536
    %v3641 = vpack.c.b16 %v3541, %v3537
    %v3642 = vpack.c.b16 %v3542, %v3538
    %v3643 = vpack.c.b16 %v3543, %v3539
    %v3644 = vpack.c.b16 %v3548, %v3544
    %v3645 = vpack.c.b16 %v3549, %v3545
    %v3646 = vpack.c.b16 %v3550, %v3546
    %v3647 = vpack.c.b16 %v3551, %v3547
    %v3648 = vpack.c.b16 %v3556, %v3552
    %v3649 = vpack.c.b16 %v3557, %v3553
    %v3650 = vpack.c.b16 %v3558, %v3554
    %v3651 = vpack.c.b16 %v3559, %v3555
    %v3652 = vpack.c.b16 %v3564, %v3560
    %v3653 = vpack.c.b16 %v3565, %v3561
    %v3654 = vpack.c.b16 %v3566, %v3562
    %v3655 = vpack.c.b16 %v3567, %v3563
    %v3656 = vpack.c.b16 %v3572, %v3568
    %v3657 = vpack.c.b16 %v3573, %v3569
    %v3658 = vpack.c.b16 %v3574, %v3570
    %v3659 = vpack.c.b16 %v3575, %v3571
    %v3660 = vpack.c.b16 %v3580, %v3576
    %v3661 = vpack.c.b16 %v3581, %v3577
    %v3662 = vpack.c.b16 %v3582, %v3578
    %v3663 = vpack.c.b16 %v3583, %v3579
    %v3664 = vpack.c.b16 %v3588, %v3584
    %v3665 = vpack.c.b16 %v3589, %v3585
    %v3666 = vpack.c.b16 %v3590, %v3586
    %v3667 = vpack.c.b16 %v3591, %v3587
    %v3668 = vpack.c.b16 %v3596, %v3592
    %v3669 = vpack.c.b16 %v3597, %v3593
    %v3670 = vpack.c.b16 %v3598, %v3594
    %v3671 = vpack.c.b16 %v3599, %v3595
    %v3745 = vsel %vm248, %v3289, 0
    %3747 = vmatprep.subr.bf16.mxu0 %v3601
    %3748 = vmatpush1.bf16.msra.mxu0 %v3600
    %3749 = vmatprep.subr.bf16.mxu0 %v3605
    %3750 = vmatpush1.bf16.msra.mxu0 %v3604
    %3751 = vmatprep.subr.bf16.mxu0 %v3609
    %3752 = vmatpush1.bf16.msra.mxu0 %v3608
    %3753 = vmatprep.subr.bf16.mxu0 %v3613
    %3754 = vmatpush1.bf16.msra.mxu0 %v3612
    %3755 = vmatprep.subr.bf16.mxu0 %v3617
    %3756 = vmatpush1.bf16.msra.mxu0 %v3616
    %3757 = vmatprep.subr.bf16.mxu0 %v3621
    %3758 = vmatpush1.bf16.msra.mxu0 %v3620
    %3759 = vmatprep.subr.bf16.mxu0 %v3625
    %3760 = vmatpush1.bf16.msra.mxu0 %v3624
    %3761 = vmatprep.subr.bf16.mxu0 %v3629
    %3762 = vmatpush1.bf16.msra.mxu0 %v3628
    %3763 = vmatprep.subr.bf16.mxu0 %v3633
    %3764 = vmatpush1.bf16.msra.mxu0 %v3632
    %3765 = vmatprep.subr.bf16.mxu0 %v3637
    %3766 = vmatpush1.bf16.msra.mxu0 %v3636
    %3767 = vmatprep.subr.bf16.mxu0 %v3641
    %3768 = vmatpush1.bf16.msra.mxu0 %v3640
    %3769 = vmatprep.subr.bf16.mxu0 %v3645
    %3770 = vmatpush1.bf16.msra.mxu0 %v3644
    %3771 = vmatprep.subr.bf16.mxu0 %v3649
    %3772 = vmatpush1.bf16.msra.mxu0 %v3648
    %3773 = vmatprep.subr.bf16.mxu0 %v3653
    %3774 = vmatpush1.bf16.msra.mxu0 %v3652
    %3775 = vmatprep.subr.bf16.mxu0 %v3657
    %3776 = vmatpush1.bf16.msra.mxu0 %v3656
    %3777 = vmatprep.subr.bf16.mxu0 %v3661
    %3778 = vmatpush1.bf16.msra.mxu0 %v3660
    %3779 = vmatprep.mubr.bf16.mxu0 %v3288
    %3780 = vmatmul.mubr.bf16.gmra.mrb[0].mxu0 %v3287
    %v3781 = vpop.f32.mrb[0].mxu0
    %v3782 = vadd.f32 %v3367, %v3781
    %v3783 = vpop.f32.mrb[0].mxu0
    %v3784 = vadd.f32 %v3371, %v3783
    %v3785 = vpop.f32.mrb[0].mxu0
    %v3786 = vpop.f32.mrb[0].mxu0
    %3787 = vdwg.mxu0
    %3788 = vmatprep.subr.bf16.mxu0 %v3665
    %3789 = vmatpush1.bf16.msra.mxu0 %v3664
    %3790 = vmatprep.subr.bf16.mxu0 %v3669
    %3791 = vmatpush1.bf16.msra.mxu0 %v3668
    %3792 = vmatprep.subr.bf16.mxu0 0
    %3793 = vmatpush1.bf16.msra.mxu0 0
    %3794 = vmatprep.subr.bf16.mxu0 0
    %3795 = vmatpush1.bf16.msra.mxu0 0
    %3796 = vmatprep.subr.bf16.mxu0 0
    %3797 = vmatpush1.bf16.msra.mxu0 0
    %3798 = vmatprep.subr.bf16.mxu0 0
    %3799 = vmatpush1.bf16.msra.mxu0 0
    %3800 = vmatprep.subr.bf16.mxu0 0
    %3801 = vmatpush1.bf16.msra.mxu0 0
    %3802 = vmatprep.subr.bf16.mxu0 0
    %3803 = vmatpush1.bf16.msra.mxu0 0
    %3804 = vmatprep.subr.bf16.mxu0 0
    %3805 = vmatpush1.bf16.msra.mxu0 0
    %3806 = vmatprep.subr.bf16.mxu0 0
    %3807 = vmatpush1.bf16.msra.mxu0 0
    %3808 = vmatprep.subr.bf16.mxu0 0
    %3809 = vmatpush1.bf16.msra.mxu0 0
    %3810 = vmatprep.subr.bf16.mxu0 0
    %3811 = vmatpush1.bf16.msra.mxu0 0
    %3812 = vmatprep.subr.bf16.mxu0 0
    %3813 = vmatpush1.bf16.msra.mxu0 0
    %3814 = vmatprep.subr.bf16.mxu0 0
    %3815 = vmatpush1.bf16.msra.mxu0 0
    %3816 = vmatprep.subr.bf16.mxu0 0
    %3817 = vmatpush1.bf16.msra.mxu0 0
    %3818 = vmatprep.subr.bf16.mxu0 0
    %3819 = vmatpush1.bf16.msra.mxu0 0
    %3820 = vmatprep.mubr.bf16.mxu0 0
    %3821 = vmatmul.mubr.bf16.gmra.mrb[0].mxu0 %v3745
    %v3822 = vpop.f32.mrb[0].mxu0
    %v3823 = vadd.f32 %v3782, %v3822
    %v3824 = vpop.f32.mrb[0].mxu0
    %v3825 = vadd.f32 %v3784, %v3824
    %v3826 = vpop.f32.mrb[0].mxu0
    %v3827 = vpop.f32.mrb[0].mxu0
    %3828 = vdwg.mxu0
    %3829 = vmatprep.subr.bf16.mxu0 %v3603
    %3830 = vmatpush1.bf16.msra.mxu0 %v3602
    %3831 = vmatprep.subr.bf16.mxu0 %v3607
    %3832 = vmatpush1.bf16.msra.mxu0 %v3606
    %3833 = vmatprep.subr.bf16.mxu0 %v3611
    %3834 = vmatpush1.bf16.msra.mxu0 %v3610
    %3835 = vmatprep.subr.bf16.mxu0 %v3615
    %3836 = vmatpush1.bf16.msra.mxu0 %v3614
    %3837 = vmatprep.subr.bf16.mxu0 %v3619
    %3838 = vmatpush1.bf16.msra.mxu0 %v3618
    %3839 = vmatprep.subr.bf16.mxu0 %v3623
    %3840 = vmatpush1.bf16.msra.mxu0 %v3622
    %3841 = vmatprep.subr.bf16.mxu0 %v3627
    %3842 = vmatpush1.bf16.msra.mxu0 %v3626
    %3843 = vmatprep.subr.bf16.mxu0 %v3631
    %3844 = vmatpush1.bf16.msra.mxu0 %v3630
    %3845 = vmatprep.subr.bf16.mxu0 %v3635
    %3846 = vmatpush1.bf16.msra.mxu0 %v3634
    %3847 = vmatprep.subr.bf16.mxu0 %v3639
    %3848 = vmatpush1.bf16.msra.mxu0 %v3638
    %3849 = vmatprep.subr.bf16.mxu0 %v3643
    %3850 = vmatpush1.bf16.msra.mxu0 %v3642
    %3851 = vmatprep.subr.bf16.mxu0 %v3647
    %3852 = vmatpush1.bf16.msra.mxu0 %v3646
    %3853 = vmatprep.subr.bf16.mxu0 %v3651
    %3854 = vmatpush1.bf16.msra.mxu0 %v3650
    %3855 = vmatprep.subr.bf16.mxu0 %v3655
    %3856 = vmatpush1.bf16.msra.mxu0 %v3654
    %3857 = vmatprep.subr.bf16.mxu0 %v3659
    %3858 = vmatpush1.bf16.msra.mxu0 %v3658
    %3859 = vmatprep.subr.bf16.mxu0 %v3663
    %3860 = vmatpush1.bf16.msra.mxu0 %v3662
    %3861 = vmatprep.mubr.bf16.mxu0 %v3288
    %3862 = vmatmul.mubr.bf16.gmra.mrb[0].mxu0 %v3287
    %v3863 = vpop.f32.mrb[0].mxu0
    %v3864 = vadd.f32 %v3375, %v3863
    %v3865 = vpop.f32.mrb[0].mxu0
    %v3866 = vadd.f32 %v3379, %v3865
    %v3867 = vpop.f32.mrb[0].mxu0
    %v3868 = vpop.f32.mrb[0].mxu0
    %3869 = vdwg.mxu0
    %3870 = vmatprep.subr.bf16.mxu0 %v3667
    %3871 = vmatpush1.bf16.msra.mxu0 %v3666
    %3872 = vmatprep.subr.bf16.mxu0 %v3671
    %3873 = vmatpush1.bf16.msra.mxu0 %v3670
    %3874 = vmatprep.subr.bf16.mxu0 0
    %3875 = vmatpush1.bf16.msra.mxu0 0
    %3876 = vmatprep.subr.bf16.mxu0 0
    %3877 = vmatpush1.bf16.msra.mxu0 0
    %3878 = vmatprep.subr.bf16.mxu0 0
    %3879 = vmatpush1.bf16.msra.mxu0 0
    %3880 = vmatprep.subr.bf16.mxu0 0
    %3881 = vmatpush1.bf16.msra.mxu0 0
    %3882 = vmatprep.subr.bf16.mxu0 0
    %3883 = vmatpush1.bf16.msra.mxu0 0
    %3884 = vmatprep.subr.bf16.mxu0 0
    %3885 = vmatpush1.bf16.msra.mxu0 0
    %3886 = vmatprep.subr.bf16.mxu0 0
    %3887 = vmatpush1.bf16.msra.mxu0 0
    %3888 = vmatprep.subr.bf16.mxu0 0
    %3889 = vmatpush1.bf16.msra.mxu0 0
    %3890 = vmatprep.subr.bf16.mxu0 0
    %3891 = vmatpush1.bf16.msra.mxu0 0
    %3892 = vmatprep.subr.bf16.mxu0 0
    %3893 = vmatpush1.bf16.msra.mxu0 0
    %3894 = vmatprep.subr.bf16.mxu0 0
    %3895 = vmatpush1.bf16.msra.mxu0 0
    %3896 = vmatprep.subr.bf16.mxu0 0
    %3897 = vmatpush1.bf16.msra.mxu0 0
    %3898 = vmatprep.subr.bf16.mxu0 0
    %3899 = vmatpush1.bf16.msra.mxu0 0
    %3900 = vmatprep.subr.bf16.mxu0 0
    %3901 = vmatpush1.bf16.msra.mxu0 0
    %3902 = vmatprep.mubr.bf16.mxu0 0
    %3903 = vmatmul.mubr.bf16.gmra.mrb[0].mxu0 %v3745
    %v3904 = vpop.f32.mrb[0].mxu0
    %v3905 = vadd.f32 %v3864, %v3904
    %v3906 = vpop.f32.mrb[0].mxu0
    %v3907 = vadd.f32 %v3866, %v3906
    %v3908 = vpop.f32.mrb[0].mxu0
    %v3909 = vpop.f32.mrb[0].mxu0
    %3910 = vdwg.mxu0
    %v3911 = vmax.f32 %v3823, 0.0
    %v3912 = vmax.f32 %v3825, 0.0
    %v3913 = vmax.f32 %v3905, 0.0
    %v3914 = vmax.f32 %v3907, 0.0
    %v3915 = vpack.c.bf16 %v3911, %v3911
    %v3916 = vpack.c.bf16 %v3912, %v3912
    %v3917 = vpack.c.bf16 %v3913, %v3913
    %v3918 = vpack.c.bf16 %v3914, %v3914
    %v3919 = vld [vmem:[%s22] sm:$0xf]
    %v3920 = vld [vmem:[%s22 + $0x4] sm:$0xf]
    %v3921 = vld [vmem:[%s22 + $0x8] sm:$0xf]
    %v3922 = vld [vmem:[%s22 + $0xc] sm:$0xf]
    %v3923 = vld [vmem:[%s22 + $0x10] sm:$0xf]
    %v3924 = vld [vmem:[%s22 + $0x14] sm:$0xf]
    %v3925 = vld [vmem:[%s22 + $0x18] sm:$0xf]
    %v3926 = vld [vmem:[%s22 + $0x1c] sm:$0xf]
    %v3927 = vld [vmem:[%s22 + $0x20] sm:$0xf]
    %v3928 = vld [vmem:[%s22 + $0x24] sm:$0xf]
    %v3929 = vld [vmem:[%s22 + $0x28] sm:$0xf]
    %v3930 = vld [vmem:[%s22 + $0x2c] sm:$0xf]
    %v3931 = vld [vmem:[%s22 + $0x30] sm:$0xf]
    %v3932 = vld [vmem:[%s22 + $0x34] sm:$0xf]
    %v3933 = vld [vmem:[%s22 + $0x38] sm:$0xf]
    %v3934 = vld [vmem:[%s22 + $0x3c] sm:$0xf]
    %v3935 = vld [vmem:[%s22 + $0x40] sm:$0xf]
    %v3936 = vld [vmem:[%s22 + $0x44] sm:$0xf]
    %v3937 = vld [vmem:[%s22 + $0x48] sm:$0xf]
    %v3938 = vld [vmem:[%s22 + $0x4c] sm:$0xf]
    %v3939 = vld [vmem:[%s22 + $0x50] sm:$0xf]
    %v3940 = vld [vmem:[%s22 + $0x54] sm:$0xf]
    %v3941 = vld [vmem:[%s22 + $0x58] sm:$0xf]
    %v3942 = vld [vmem:[%s22 + $0x5c] sm:$0xf]
    %v3943 = vld [vmem:[%s22 + $0x60] sm:$0xf]
    %v3944 = vld [vmem:[%s22 + $0x64] sm:$0xf]
    %v3945 = vld [vmem:[%s22 + $0x68] sm:$0xf]
    %v3946 = vld [vmem:[%s22 + $0x6c] sm:$0xf]
    %v3947 = vld [vmem:[%s22 + $0x70] sm:$0xf]
    %v3948 = vld [vmem:[%s22 + $0x74] sm:$0xf]
    %v3949 = vld [vmem:[%s22 + $0x78] sm:$0xf]
    %v3950 = vld [vmem:[%s22 + $0x7c] sm:$0xf]
    %v3951 = vld [vmem:[%s22 + $0x80] sm:$0xf]
    %v3952 = vld [vmem:[%s22 + $0x84] sm:$0xf]
    %v3953 = vld [vmem:[%s22 + $0x88] sm:$0xf]
    %v3954 = vld [vmem:[%s22 + $0x8c] sm:$0xf]
    %v3955 = vld [vmem:[%s22 + $0x90] sm:$0xf]
    %v3956 = vld [vmem:[%s22 + $0x94] sm:$0xf]
    %v3957 = vld [vmem:[%s22 + $0x98] sm:$0xf]
    %v3958 = vld [vmem:[%s22 + $0x9c] sm:$0xf]
    %v3959 = vld [vmem:[%s22 + $0xa0] sm:$0xf]
    %v3960 = vld [vmem:[%s22 + $0xa4] sm:$0xf]
    %v3961 = vld [vmem:[%s22 + $0xa8] sm:$0xf]
    %v3962 = vld [vmem:[%s22 + $0xac] sm:$0xf]
    %v3963 = vld [vmem:[%s22 + $0xb0] sm:$0xf]
    %v3964 = vld [vmem:[%s22 + $0xb4] sm:$0xf]
    %v3965 = vld [vmem:[%s22 + $0xb8] sm:$0xf]
    %v3966 = vld [vmem:[%s22 + $0xbc] sm:$0xf]
    %v3967 = vld [vmem:[%s22 + $0xc0] sm:$0xf]
    %v3968 = vld [vmem:[%s22 + $0xc4] sm:$0xf]
    %v3969 = vld [vmem:[%s22 + $0xc8] sm:$0xf]
    %v3970 = vld [vmem:[%s22 + $0xcc] sm:$0xf]
    %v3971 = vld [vmem:[%s22 + $0xd0] sm:$0xf]
    %v3972 = vld [vmem:[%s22 + $0xd4] sm:$0xf]
    %v3973 = vld [vmem:[%s22 + $0xd8] sm:$0xf]
    %v3974 = vld [vmem:[%s22 + $0xdc] sm:$0xf]
    %v3975 = vld [vmem:[%s22 + $0xe0] sm:$0xf]
    %v3976 = vld [vmem:[%s22 + $0xe4] sm:$0xf]
    %v3977 = vld [vmem:[%s22 + $0xe8] sm:$0xf]
    %v3978 = vld [vmem:[%s22 + $0xec] sm:$0xf]
    %v3979 = vld [vmem:[%s22 + $0xf0] sm:$0xf]
    %v3980 = vld [vmem:[%s22 + $0xf4] sm:$0xf]
    %v3981 = vld [vmem:[%s22 + $0xf8] sm:$0xf]
    %v3982 = vld [vmem:[%s22 + $0xfc] sm:$0xf]
    %v3983 = vld [vmem:[#allocation18] sm:$0x1]
    %v3985 = vlaneseq
    %v3986 = vshrl.u32 %v3985, 7
    %v3987 = vsub.s32 0, %v3986
    %v3988 = vrot.slane %v3983, %v3987
    %v4054 = vunpack.c.l.b16 %v3919
    %v4055 = vunpack.c.l.b16 %v3920
    %v4056 = vunpack.c.l.b16 %v3921
    %v4057 = vunpack.c.l.b16 %v3922
    %v4058 = vunpack.c.l.b16 %v3923
    %v4059 = vunpack.c.l.b16 %v3924
    %v4060 = vunpack.c.l.b16 %v3925
    %v4061 = vunpack.c.l.b16 %v3926
    %v4062 = vunpack.c.l.b16 %v3927
    %v4063 = vunpack.c.l.b16 %v3928
    %v4064 = vunpack.c.l.b16 %v3929
    %v4065 = vunpack.c.l.b16 %v3930
    %v4066 = vunpack.c.l.b16 %v3931
    %v4067 = vunpack.c.l.b16 %v3932
    %v4068 = vunpack.c.l.b16 %v3933
    %v4069 = vunpack.c.l.b16 %v3934
    %v4070 = vunpack.c.l.b16 %v3935
    %v4071 = vunpack.c.l.b16 %v3936
    %v4072 = vunpack.c.l.b16 %v3937
    %v4073 = vunpack.c.l.b16 %v3938
    %v4074 = vunpack.c.l.b16 %v3939
    %v4075 = vunpack.c.l.b16 %v3940
    %v4076 = vunpack.c.l.b16 %v3941
    %v4077 = vunpack.c.l.b16 %v3942
    %v4078 = vunpack.c.l.b16 %v3943
    %v4079 = vunpack.c.l.b16 %v3944
    %v4080 = vunpack.c.l.b16 %v3945
    %v4081 = vunpack.c.l.b16 %v3946
    %v4082 = vunpack.c.l.b16 %v3947
    %v4083 = vunpack.c.l.b16 %v3948
    %v4084 = vunpack.c.l.b16 %v3949
    %v4085 = vunpack.c.l.b16 %v3950
    %v4086 = vunpack.c.l.b16 %v3951
    %v4087 = vunpack.c.l.b16 %v3952
    %v4088 = vunpack.c.l.b16 %v3953
    %v4089 = vunpack.c.l.b16 %v3954
    %v4090 = vunpack.c.l.b16 %v3955
    %v4091 = vunpack.c.l.b16 %v3956
    %v4092 = vunpack.c.l.b16 %v3957
    %v4093 = vunpack.c.l.b16 %v3958
    %v4094 = vunpack.c.l.b16 %v3959
    %v4095 = vunpack.c.l.b16 %v3960
    %v4096 = vunpack.c.l.b16 %v3961
    %v4097 = vunpack.c.l.b16 %v3962
    %v4098 = vunpack.c.l.b16 %v3963
    %v4099 = vunpack.c.l.b16 %v3964
    %v4100 = vunpack.c.l.b16 %v3965
    %v4101 = vunpack.c.l.b16 %v3966
    %v4102 = vunpack.c.l.b16 %v3967
    %v4103 = vunpack.c.l.b16 %v3968
    %v4104 = vunpack.c.l.b16 %v3969
    %v4105 = vunpack.c.l.b16 %v3970
    %v4106 = vunpack.c.l.b16 %v3971
    %v4107 = vunpack.c.l.b16 %v3972
    %v4108 = vunpack.c.l.b16 %v3973
    %v4109 = vunpack.c.l.b16 %v3974
    %v4110 = vunpack.c.l.b16 %v3975
    %v4111 = vunpack.c.l.b16 %v3976
    %v4112 = vunpack.c.l.b16 %v3977
    %v4113 = vunpack.c.l.b16 %v3978
    %v4114 = vunpack.c.l.b16 %v3979
    %v4115 = vunpack.c.l.b16 %v3980
    %v4116 = vunpack.c.l.b16 %v3981
    %v4117 = vunpack.c.l.b16 %v3982
    %v4118 = vpack.c.b16 %v4055, %v4054
    %v4119 = vpack.c.b16 %v4057, %v4056
    %v4120 = vpack.c.b16 %v4059, %v4058
    %v4121 = vpack.c.b16 %v4061, %v4060
    %v4122 = vpack.c.b16 %v4063, %v4062
    %v4123 = vpack.c.b16 %v4065, %v4064
    %v4124 = vpack.c.b16 %v4067, %v4066
    %v4125 = vpack.c.b16 %v4069, %v4068
    %v4126 = vpack.c.b16 %v4071, %v4070
    %v4127 = vpack.c.b16 %v4073, %v4072
    %v4128 = vpack.c.b16 %v4075, %v4074
    %v4129 = vpack.c.b16 %v4077, %v4076
    %v4130 = vpack.c.b16 %v4079, %v4078
    %v4131 = vpack.c.b16 %v4081, %v4080
    %v4132 = vpack.c.b16 %v4083, %v4082
    %v4133 = vpack.c.b16 %v4085, %v4084
    %v4134 = vpack.c.b16 %v4087, %v4086
    %v4135 = vpack.c.b16 %v4089, %v4088
    %v4136 = vpack.c.b16 %v4091, %v4090
    %v4137 = vpack.c.b16 %v4093, %v4092
    %v4138 = vpack.c.b16 %v4095, %v4094
    %v4139 = vpack.c.b16 %v4097, %v4096
    %v4140 = vpack.c.b16 %v4099, %v4098
    %v4141 = vpack.c.b16 %v4101, %v4100
    %v4142 = vpack.c.b16 %v4103, %v4102
    %v4143 = vpack.c.b16 %v4105, %v4104
    %v4144 = vpack.c.b16 %v4107, %v4106
    %v4145 = vpack.c.b16 %v4109, %v4108
    %v4146 = vpack.c.b16 %v4111, %v4110
    %v4147 = vpack.c.b16 %v4113, %v4112
    %v4148 = vpack.c.b16 %v4115, %v4114
    %v4149 = vpack.c.b16 %v4117, %v4116
    %4182 = vmatprep.subr.bf16.mxu0 0
    %4183 = vmatpush1.bf16.msra.mxu0 %v4118
    %4184 = vmatprep.subr.bf16.mxu0 0
    %4185 = vmatpush1.bf16.msra.mxu0 %v4119
    %4186 = vmatprep.subr.bf16.mxu0 0
    %4187 = vmatpush1.bf16.msra.mxu0 %v4120
    %4188 = vmatprep.subr.bf16.mxu0 0
    %4189 = vmatpush1.bf16.msra.mxu0 %v4121
    %4190 = vmatprep.subr.bf16.mxu0 0
    %4191 = vmatpush1.bf16.msra.mxu0 %v4122
    %4192 = vmatprep.subr.bf16.mxu0 0
    %4193 = vmatpush1.bf16.msra.mxu0 %v4123
    %4194 = vmatprep.subr.bf16.mxu0 0
    %4195 = vmatpush1.bf16.msra.mxu0 %v4124
    %4196 = vmatprep.subr.bf16.mxu0 0
    %4197 = vmatpush1.bf16.msra.mxu0 %v4125
    %4198 = vmatprep.subr.bf16.mxu0 0
    %4199 = vmatpush1.bf16.msra.mxu0 %v4126
    %4200 = vmatprep.subr.bf16.mxu0 0
    %4201 = vmatpush1.bf16.msra.mxu0 %v4127
    %4202 = vmatprep.subr.bf16.mxu0 0
    %4203 = vmatpush1.bf16.msra.mxu0 %v4128
    %4204 = vmatprep.subr.bf16.mxu0 0
    %4205 = vmatpush1.bf16.msra.mxu0 %v4129
    %4206 = vmatprep.subr.bf16.mxu0 0
    %4207 = vmatpush1.bf16.msra.mxu0 %v4130
    %4208 = vmatprep.subr.bf16.mxu0 0
    %4209 = vmatpush1.bf16.msra.mxu0 %v4131
    %4210 = vmatprep.subr.bf16.mxu0 0
    %4211 = vmatpush1.bf16.msra.mxu0 %v4132
    %4212 = vmatprep.subr.bf16.mxu0 0
    %4213 = vmatpush1.bf16.msra.mxu0 %v4133
    %4214 = vmatprep.mubr.bf16.mxu0 %v3916
    %4215 = vmatmul.mubr.bf16.gmra.mrb[0].mxu0 %v3915
    %v4216 = vpop.f32.mrb[0].mxu0
    %v4217 = vadd.f32 %v3988, %v4216
    %v4218 = vpop.f32.mrb[0].mxu0
    %v4219 = vpop.f32.mrb[0].mxu0
    %v4220 = vpop.f32.mrb[0].mxu0
    %4221 = vdwg.mxu0
    %4222 = vmatprep.subr.bf16.mxu0 0
    %4223 = vmatpush1.bf16.msra.mxu0 %v4134
    %4224 = vmatprep.subr.bf16.mxu0 0
    %4225 = vmatpush1.bf16.msra.mxu0 %v4135
    %4226 = vmatprep.subr.bf16.mxu0 0
    %4227 = vmatpush1.bf16.msra.mxu0 %v4136
    %4228 = vmatprep.subr.bf16.mxu0 0
    %4229 = vmatpush1.bf16.msra.mxu0 %v4137
    %4230 = vmatprep.subr.bf16.mxu0 0
    %4231 = vmatpush1.bf16.msra.mxu0 %v4138
    %4232 = vmatprep.subr.bf16.mxu0 0
    %4233 = vmatpush1.bf16.msra.mxu0 %v4139
    %4234 = vmatprep.subr.bf16.mxu0 0
    %4235 = vmatpush1.bf16.msra.mxu0 %v4140
    %4236 = vmatprep.subr.bf16.mxu0 0
    %4237 = vmatpush1.bf16.msra.mxu0 %v4141
    %4238 = vmatprep.subr.bf16.mxu0 0
    %4239 = vmatpush1.bf16.msra.mxu0 %v4142
    %4240 = vmatprep.subr.bf16.mxu0 0
    %4241 = vmatpush1.bf16.msra.mxu0 %v4143
    %4242 = vmatprep.subr.bf16.mxu0 0
    %4243 = vmatpush1.bf16.msra.mxu0 %v4144
    %4244 = vmatprep.subr.bf16.mxu0 0
    %4245 = vmatpush1.bf16.msra.mxu0 %v4145
    %4246 = vmatprep.subr.bf16.mxu0 0
    %4247 = vmatpush1.bf16.msra.mxu0 %v4146
    %4248 = vmatprep.subr.bf16.mxu0 0
    %4249 = vmatpush1.bf16.msra.mxu0 %v4147
    %4250 = vmatprep.subr.bf16.mxu0 0
    %4251 = vmatpush1.bf16.msra.mxu0 %v4148
    %4252 = vmatprep.subr.bf16.mxu0 0
    %4253 = vmatpush1.bf16.msra.mxu0 %v4149
    %4254 = vmatprep.mubr.bf16.mxu0 %v3918
    %4255 = vmatmul.mubr.bf16.gmra.mrb[0].mxu0 %v3917
    %v4256 = vpop.f32.mrb[0].mxu0
    %v4257 = vadd.f32 %v4217, %v4256
    %v4258 = vpop.f32.mrb[0].mxu0
    %v4259 = vpop.f32.mrb[0].mxu0
    %v4260 = vpop.f32.mrb[0].mxu0
    %4261 = vdwg.mxu0
    %vm4262 = vcmask 17408
    %4263 = vst.msk [vmem:[#allocation20] sm:$0x3] %vm4262, %v4257
    // Predicated region
    $region138: #{tpu_custom_call.1} parent=1 // pred_check
      _
    $region139: #{tpu_custom_call.1} parent=1 // pred_check_branch
      %4265 = sbr.rel (0) target = $region141
    $region140: #{tpu_custom_call.1} parent=1 // pred_region
      %s4267 = ssub.s32 32, 32
      %4268 = vsyncadd [#allocation5], %s4267
      %s4270 = sshll.u32 [#allocation20], 4
      %s4271 = int_to_ptr.vmem [resolvable:$true] %s4270
      %4273 = dma.vmem_to_hbm [thread:$0]  %s4271, 32, %s24, [#allocation5]
    $region141: #{tpu_custom_call.1} parent=1 // pred_fallthru
      _
    // Predicated region
    $region142: #{tpu_custom_call.1} parent=1 // pred_check
      _
    $region143: #{tpu_custom_call.1} parent=1 // pred_check_branch
      %4275 = sbr.rel (0) target = $region145
    $region144: #{tpu_custom_call.1} parent=1 // pred_region
      %4276 = dma.done [#allocation5], 32
    $region145: #{tpu_custom_call.1} parent=1 // pred_fallthru
      _
    %4277 = vsyncpa [#allocation4], 1
    %4278 = vsyncpa [#allocation7], 1
    %4279 = vsyncpa [#allocation10], 1
    %4280 = vsyncpa [#allocation13], 1
    %4281 = vsyncpa [#allocation16], 1
    %4282 = vsyncpa [#allocation19], 1
    %4283 = vsyncpa [#allocation5], 1

</llo_original>
